<compile_context>
chip_gen: v7x
topology: tpu7x:2x2x1
jax: 0.10.0
libtpu: 0.0.40
codegen_flags: <defaults>
</compile_context>

<pallas_src>
import functools

import jax
import jax.numpy as jnp
from jax.experimental import pallas as pl
from jax.experimental.pallas import tpu as pltpu

EPS = 1e-5          # torch.nn.InstanceNorm2d default eps
NEG_SLOPE = 0.1     # torch.nn.LeakyReLU(negative_slope=0.1)


# ----------------------------------------------------------------------------
# Generation-aware knobs.
# ----------------------------------------------------------------------------
def _device_kind():
    try:
        return jax.devices()[0].device_kind.lower()
    except Exception:
        return ""


def _default_elementwise_dtype():
    # bf16 VALU exists on v6e / v7x; v5e and older have no bf16 VPU/EUP.
    kind = _device_kind()
    if any(tag in kind for tag in ("v6", "v7", "7x")):
        return jnp.bfloat16
    return jnp.float32


def _default_vmem_limit_bytes():
    phys = None
    try:
        info = pltpu.get_tpu_info()
        phys = getattr(info, "vmem_capacity_bytes", None)
    except Exception:
        phys = None
    if not phys:
        # Unknown generation: 48 MiB is safe on every generation (<= v7x's
        # 64 MiB physical, above the 32 MiB scoped default).
        return 48 * 1024 * 1024
    limit = min(100 * 1024 * 1024, (3 * int(phys)) // 4)
    return max(limit, 32 * 1024 * 1024)


# ----------------------------------------------------------------------------
# Pallas kernel: fc1 -> in1 -> lrelu -> fc2 -> in2 -> lrelu -> fc3 -> in3
#                -> lrelu -> max over neighbors, for ONE batch instance.
# ----------------------------------------------------------------------------
def _setconv_kernel(x_ref, w1_ref, g1_ref, b1_ref,
                    w2_ref, g2_ref, b2_ref,
                    w3_ref, g3_ref, b3_ref,
                    o_ref, *, n_out, k_neighbors, ew_dtype):
    m = x_ref.shape[1]
    inv_m = jnp.float32(1.0 / m)

    def layer(hb, w_ref, g_ref, b_ref):
        # hb: (Cin, M) bf16 MXU operand of this layer.
        w_bf = w_ref[...]                               # (F, Cin) bf16
        w32 = w_bf.astype(jnp.float32)

        # --- InstanceNorm2d stats on the MXU (idle slot), f32 accumulation.
        # mean_y = W @ mean(h) ;  E[y^2] = diag(W (h h^T) W^T) / M.
        ones_col = jnp.ones((m, 1), jnp.bfloat16)
        hsum = jnp.dot(hb, ones_col,
                       preferred_element_type=jnp.float32)          # (Cin, 1)
        mean = jnp.dot(w32, hsum * inv_m)                            # (F, 1)
        gram = jax.lax.dot_general(hb, hb, (((1,), (1,)), ((), ())),
                                   preferred_element_type=jnp.float32)  # (Cin,Cin)
        wg = jnp.dot(w32, gram)                                      # (F, Cin)
        e_y2 = jnp.sum(wg * w32, axis=1, keepdims=True) * inv_m      # (F, 1)
        # Biased variance (torch InstanceNorm2d); guard one-pass cancellation.
        var = jnp.maximum(e_y2 - mean * mean, 0.0)

        # --- Fold normalization + affine into one per-channel scale / shift.
        a = g_ref[...] * jax.lax.rsqrt(var + EPS)                    # (F, 1)
        c = b_ref[...] - mean * a                                    # (F, 1)

        # --- 1x1 Conv2d (no bias): (F, Cin) @ (Cin, M) on the MXU, f32 acc.
        y = jnp.dot(w_bf, hb, preferred_element_type=jnp.float32)    # (F, M)

        # --- Elementwise phase (the VALU-bound part): y*a + c, LeakyReLU(0.1).
        # bf16 on v6e/v7x (packed vregs), f32 on v5e.
        y = y.astype(ew_dtype) * a.astype(ew_dtype) + c.astype(ew_dtype)
        return jnp.maximum(y, NEG_SLOPE * y)            # LeakyReLU, 2 VPU ops

    h = layer(x_ref[...], w1_ref, g1_ref, b1_ref)
    h = layer(h.astype(jnp.bfloat16), w2_ref, g2_ref, b2_ref)
    h = layer(h.astype(jnp.bfloat16), w3_ref, g3_ref, b3_ref)

    # Max-pool over neighbors (torch.max(x, 2)[0] on the NCHW view).
    # Columns are neighbor-major, so neighbor k of all points is the
    # lane-aligned slice [:, k*N : (k+1)*N] (lane-aligned when N % 128 == 0).
    out = h[:, 0:n_out]
    for k in range(1, k_neighbors):
        out = jnp.maximum(out, h[:, k * n_out:(k + 1) * n_out])
    o_ref[...] = out.astype(o_ref.dtype)


# ----------------------------------------------------------------------------
# Glue: KNN graph construction, gather of neighbor features, concat of
# relative coordinates -- mirrors SetConv.forward() up to the conv stack.
# ----------------------------------------------------------------------------
def build_graph_features(signal, points, k_neighbors):
    B, N, C = signal.shape
    # KNN on the point cloud (per batch), self included (flot.models.graph).
    d2 = jnp.sum((points[:, :, None, :] - points[:, None, :, :]) ** 2, axis=-1)
    _, nn_idx = jax.lax.top_k(-d2, k_neighbors)                 # (B, N, K)
    edges = (nn_idx + (jnp.arange(B) * N)[:, None, None]).reshape(-1)

    flat_pts = points.reshape(B * N, 3)
    flat_sig = signal.reshape(B * N, C)
    edge_feats = flat_pts[edges].reshape(B, N, k_neighbors, 3) \
        - points[:, :, None, :]
    gathered = flat_sig[edges].reshape(B, N, k_neighbors, C)
    x = jnp.concatenate([gathered, edge_feats], axis=-1)        # (B,N,K,C+3)

    # torch NCHW view (B, C+3, K, N) flattened to neighbor-major columns.
    x = jnp.transpose(x, (0, 3, 2, 1)).reshape(B, C + 3, k_neighbors * N)
    return x


def set_conv_pallas(x, params, n_out, k_neighbors, *, out_dtype=jnp.float32):
    B, cin3, M = x.shape
    assert M == n_out * k_neighbors
    feat_out = params["w1"].shape[0]
    ew_dtype = _default_elementwise_dtype()

    kernel = functools.partial(
        _setconv_kernel, n_out=n_out, k_neighbors=k_neighbors,
        ew_dtype=ew_dtype)

    full2d = lambda b: (0, 0)
    param_specs = [
        pl.BlockSpec((feat_out, cin3), full2d),
        pl.BlockSpec((feat_out, 1), full2d), pl.BlockSpec((feat_out, 1), full2d),
        pl.BlockSpec((feat_out, feat_out), full2d),
        pl.BlockSpec((feat_out, 1), full2d), pl.BlockSpec((feat_out, 1), full2d),
        pl.BlockSpec((feat_out, feat_out), full2d),
        pl.BlockSpec((feat_out, 1), full2d), pl.BlockSpec((feat_out, 1), full2d),
    ]

    out = pl.pallas_call(
        kernel,
        out_shape=jax.ShapeDtypeStruct((B, feat_out, n_out), out_dtype),
        grid=(B,),
        in_specs=[pl.BlockSpec((None, cin3, M), lambda b: (b, 0, 0))]
                 + param_specs,
        out_specs=pl.BlockSpec((None, feat_out, n_out), lambda b: (b, 0, 0)),
        compiler_params=pltpu.CompilerParams(
            dimension_semantics=("parallel",),
            vmem_limit_bytes=_default_vmem_limit_bytes()),
    )(x.astype(jnp.bfloat16),
      params["w1"].astype(jnp.bfloat16), params["g1"], params["b1"],
      params["w2"].astype(jnp.bfloat16), params["g2"], params["b2"],
      params["w3"].astype(jnp.bfloat16), params["g3"], params["b3"])

    # Layout plumbing back to the torch output convention (B, N, F_out);
    # the kernel-side store stays lane-dense on the N axis.
    return jnp.transpose(out, (0, 2, 1))


# Pure-JAX reference of the conv/norm/lrelu/pool stack (f32 elementwise,
# two-pass variance, same bf16 MXU operands as the kernel).
def set_conv_ref(x, params, n_out, k_neighbors):
    h = x.astype(jnp.float32)
    for i in (1, 2, 3):
        w, g, be = params[f"w{i}"], params[f"g{i}"], params[f"b{i}"]
        y = jnp.einsum("fc,bcm->bfm",
                       w.astype(jnp.bfloat16), h.astype(jnp.bfloat16),
                       preferred_element_type=jnp.float32)
        mean = jnp.mean(y, axis=2, keepdims=True)
        var = jnp.mean(jnp.square(y - mean), axis=2, keepdims=True)
        y = (y - mean) / jnp.sqrt(var + EPS) * g + be
        h = jnp.where(y >= 0.0, y, NEG_SLOPE * y)
    B, F, M = h.shape
    pooled = jnp.max(h.reshape(B, F, k_neighbors, n_out), axis=2)   # (B,F,N)
    return jnp.transpose(pooled, (0, 2, 1))


def init_params(key, nb_feat_in, nb_feat_out):
    ks = jax.random.split(key, 9)
    cin3 = nb_feat_in + 3
    return {
        # Conv2d weights in torch's native (Cout, Cin) orientation.
        "w1": 0.1 * jax.random.normal(ks[0], (nb_feat_out, cin3), jnp.float32),
        "w2": 0.1 * jax.random.normal(ks[1], (nb_feat_out, nb_feat_out), jnp.float32),
        "w3": 0.1 * jax.random.normal(ks[2], (nb_feat_out, nb_feat_out), jnp.float32),
        # InstanceNorm2d affine params, (F, 1) so they broadcast over lanes.
        "g1": 1.0 + 0.05 * jax.random.normal(ks[3], (nb_feat_out, 1), jnp.float32),
        "b1": 0.05 * jax.random.normal(ks[4], (nb_feat_out, 1), jnp.float32),
        "g2": 1.0 + 0.05 * jax.random.normal(ks[5], (nb_feat_out, 1), jnp.float32),
        "b2": 0.05 * jax.random.normal(ks[6], (nb_feat_out, 1), jnp.float32),
        "g3": 1.0 + 0.05 * jax.random.normal(ks[7], (nb_feat_out, 1), jnp.float32),
        "b3": 0.05 * jax.random.normal(ks[8], (nb_feat_out, 1), jnp.float32),
    }


if __name__ == "__main__":
    # N is a lane multiple so the per-neighbor pool slices and the (F, N)
    # output block stay lane-aligned / lane-dense; still a small demo problem.
    B, N, C_IN, K, F_OUT = 2, 128, 4, 8, 32

    key = jax.random.PRNGKey(0)
    k_sig, k_pts, k_par = jax.random.split(key, 3)
    signal = jax.random.normal(k_sig, (B, N, C_IN), jnp.float32)
    points = jax.random.normal(k_pts, (B, N, 3), jnp.float32)
    params = init_params(k_par, C_IN, F_OUT)

    x = build_graph_features(signal, points, K)       # (B, C_IN+3, K*N)

    out = set_conv_pallas(x, params, N, K)            # (B, N, F_OUT)
    out = jax.block_until_ready(out)

    ref = jax.block_until_ready(set_conv_ref(x, params, N, K))
    assert out.shape == (B, N, F_OUT)
    max_err = float(jnp.max(jnp.abs(out - ref)))
    # bf16 MXU operands (+ bf16 elementwise on v6e/v7x) -> loose tolerance.
    assert jnp.allclose(out, ref, rtol=3e-2, atol=3e-2), max_err

    print("KERNEL_OK")
</pallas_src>

<mosaic_0001>
module attributes {stable_mosaic.version = 11 : i64} {
  func.func @_setconv_kernel(%arg0: i32, %arg1: memref<1x7x1024xbf16, #tpu.memory_space<vmem>>, %arg2: memref<32x7xbf16, #tpu.memory_space<vmem>>, %arg3: memref<32x1xf32, #tpu.memory_space<vmem>>, %arg4: memref<32x1xf32, #tpu.memory_space<vmem>>, %arg5: memref<32x32xbf16, #tpu.memory_space<vmem>>, %arg6: memref<32x1xf32, #tpu.memory_space<vmem>>, %arg7: memref<32x1xf32, #tpu.memory_space<vmem>>, %arg8: memref<32x32xbf16, #tpu.memory_space<vmem>>, %arg9: memref<32x1xf32, #tpu.memory_space<vmem>>, %arg10: memref<32x1xf32, #tpu.memory_space<vmem>>, %arg11: memref<1x32x128xf32, #tpu.memory_space<vmem>>) attributes {dimension_semantics = [#tpu.dimension_semantics<parallel>], iteration_bounds = array<i64: 2>, scalar_prefetch = 0 : i64, scratch_operands = 0 : i64, tpu.core_type = #tpu.core_type<tc>, window_params = [{transform_indices = @transform_0, window_bounds = array<i64: 1, 7, 1024>}, {pipeline_mode = #tpu.pipeline_mode<synchronous>, transform_indices = @transform_1, window_bounds = array<i64: 32, 7>}, {pipeline_mode = #tpu.pipeline_mode<synchronous>, transform_indices = @transform_2, window_bounds = array<i64: 32, 1>}, {pipeline_mode = #tpu.pipeline_mode<synchronous>, transform_indices = @transform_3, window_bounds = array<i64: 32, 1>}, {pipeline_mode = #tpu.pipeline_mode<synchronous>, transform_indices = @transform_4, window_bounds = array<i64: 32, 32>}, {pipeline_mode = #tpu.pipeline_mode<synchronous>, transform_indices = @transform_5, window_bounds = array<i64: 32, 1>}, {pipeline_mode = #tpu.pipeline_mode<synchronous>, transform_indices = @transform_6, window_bounds = array<i64: 32, 1>}, {pipeline_mode = #tpu.pipeline_mode<synchronous>, transform_indices = @transform_7, window_bounds = array<i64: 32, 32>}, {pipeline_mode = #tpu.pipeline_mode<synchronous>, transform_indices = @transform_8, window_bounds = array<i64: 32, 1>}, {pipeline_mode = #tpu.pipeline_mode<synchronous>, transform_indices = @transform_9, window_bounds = array<i64: 32, 1>}, {transform_indices = @transform_10, window_bounds = array<i64: 1, 32, 128>}]} {
    %c0 = arith.constant 0 : index
    %c0_0 = arith.constant 0 : index
    %c0_1 = arith.constant 0 : index
    %0 = vector.load %arg1[%c0, %c0_0, %c0_1] : memref<1x7x1024xbf16, #tpu.memory_space<vmem>>, vector<1x7x1024xbf16>
    %1 = vector.shape_cast %0 : vector<1x7x1024xbf16> to vector<7x1024xbf16>
    %c0_2 = arith.constant 0 : index
    %c0_3 = arith.constant 0 : index
    %2 = vector.load %arg2[%c0_2, %c0_3] : memref<32x7xbf16, #tpu.memory_space<vmem>>, vector<32x7xbf16>
    %3 = arith.extf %2 : vector<32x7xbf16> to vector<32x7xf32>
    %cst = arith.constant 1.000000e+00 : bf16
    %4 = vector.broadcast %cst : bf16 to vector<1024x1xbf16>
    %cst_4 = arith.constant dense<0.000000e+00> : vector<7x1xf32>
    %5 = tpu.matmul %1, %4, %cst_4 {dimension_numbers = #tpu.dot_dimension_numbers<[1], [0], [0], [1], [0, 0, 1, 1], [], []>} : vector<7x1024xbf16>, vector<1024x1xbf16>, vector<7x1xf32> -> vector<7x1xf32>
    %cst_5 = arith.constant 9.765625E-4 : f32
    %6 = vector.broadcast %cst_5 : f32 to vector<7x1xf32>
    %7 = arith.mulf %5, %6 : vector<7x1xf32>
    %cst_6 = arith.constant dense<0.000000e+00> : vector<32x1xf32>
    %8 = tpu.matmul %3, %7, %cst_6 {dimension_numbers = #tpu.dot_dimension_numbers<[1], [0], [0], [1], [0, 0, 1, 1], [], []>} : vector<32x7xf32>, vector<7x1xf32>, vector<32x1xf32> -> vector<32x1xf32>
    %cst_7 = arith.constant dense<0.000000e+00> : vector<7x7xf32>
    %9 = tpu.matmul %1, %1, %cst_7 {dimension_numbers = #tpu.dot_dimension_numbers<[1], [1], [0], [0], [0, 0, 1, 0], [], []>} : vector<7x1024xbf16>, vector<7x1024xbf16>, vector<7x7xf32> -> vector<7x7xf32>
    %cst_8 = arith.constant dense<0.000000e+00> : vector<32x7xf32>
    %10 = tpu.matmul %3, %9, %cst_8 {dimension_numbers = #tpu.dot_dimension_numbers<[1], [0], [0], [1], [0, 0, 1, 1], [], []>} : vector<32x7xf32>, vector<7x7xf32>, vector<32x7xf32> -> vector<32x7xf32>
    %11 = arith.mulf %10, %3 : vector<32x7xf32>
    %cst_9 = arith.constant dense<0.000000e+00> : vector<32xf32>
    %12 = vector.multi_reduction <add>, %11, %cst_9 [1] : vector<32x7xf32> to vector<32xf32>
    %13 = vector.shape_cast %12 : vector<32xf32> to vector<32x1xf32>
    %cst_10 = arith.constant 9.765625E-4 : f32
    %14 = vector.broadcast %cst_10 : f32 to vector<32x1xf32>
    %15 = arith.mulf %13, %14 : vector<32x1xf32>
    %16 = arith.mulf %8, %8 : vector<32x1xf32>
    %17 = arith.subf %15, %16 : vector<32x1xf32>
    %cst_11 = arith.constant 0.000000e+00 : f32
    %18 = vector.broadcast %cst_11 : f32 to vector<32x1xf32>
    %19 = arith.maximumf %17, %18 : vector<32x1xf32>
    %c0_12 = arith.constant 0 : index
    %c0_13 = arith.constant 0 : index
    %20 = vector.load %arg3[%c0_12, %c0_13] : memref<32x1xf32, #tpu.memory_space<vmem>>, vector<32x1xf32>
    %cst_14 = arith.constant 9.99999974E-6 : f32
    %21 = vector.broadcast %cst_14 : f32 to vector<32x1xf32>
    %22 = arith.addf %19, %21 : vector<32x1xf32>
    %23 = math.rsqrt %22 : vector<32x1xf32>
    %24 = arith.mulf %20, %23 : vector<32x1xf32>
    %c0_15 = arith.constant 0 : index
    %c0_16 = arith.constant 0 : index
    %25 = vector.load %arg4[%c0_15, %c0_16] : memref<32x1xf32, #tpu.memory_space<vmem>>, vector<32x1xf32>
    %26 = arith.mulf %8, %24 : vector<32x1xf32>
    %27 = arith.subf %25, %26 : vector<32x1xf32>
    %cst_17 = arith.constant dense<0.000000e+00> : vector<32x1024xf32>
    %28 = tpu.matmul %2, %1, %cst_17 {dimension_numbers = #tpu.dot_dimension_numbers<[1], [0], [0], [1], [0, 0, 1, 1], [], []>} : vector<32x7xbf16>, vector<7x1024xbf16>, vector<32x1024xf32> -> vector<32x1024xf32>
    %29 = vector.broadcast %24 : vector<32x1xf32> to vector<32x1024xf32>
    %30 = arith.mulf %28, %29 : vector<32x1024xf32>
    %31 = vector.broadcast %27 : vector<32x1xf32> to vector<32x1024xf32>
    %32 = arith.addf %30, %31 : vector<32x1024xf32>
    %cst_18 = arith.constant 1.000000e-01 : f32
    %33 = vector.broadcast %cst_18 : f32 to vector<32x1024xf32>
    %34 = arith.mulf %33, %32 : vector<32x1024xf32>
    %35 = arith.maximumf %32, %34 : vector<32x1024xf32>
    %36 = arith.truncf %35 : vector<32x1024xf32> to vector<32x1024xbf16>
    %c0_19 = arith.constant 0 : index
    %c0_20 = arith.constant 0 : index
    %37 = vector.load %arg5[%c0_19, %c0_20] : memref<32x32xbf16, #tpu.memory_space<vmem>>, vector<32x32xbf16>
    %38 = arith.extf %37 : vector<32x32xbf16> to vector<32x32xf32>
    %cst_21 = arith.constant 1.000000e+00 : bf16
    %39 = vector.broadcast %cst_21 : bf16 to vector<1024x1xbf16>
    %cst_22 = arith.constant dense<0.000000e+00> : vector<32x1xf32>
    %40 = tpu.matmul %36, %39, %cst_22 {dimension_numbers = #tpu.dot_dimension_numbers<[1], [0], [0], [1], [0, 0, 1, 1], [], []>} : vector<32x1024xbf16>, vector<1024x1xbf16>, vector<32x1xf32> -> vector<32x1xf32>
    %cst_23 = arith.constant 9.765625E-4 : f32
    %41 = vector.broadcast %cst_23 : f32 to vector<32x1xf32>
    %42 = arith.mulf %40, %41 : vector<32x1xf32>
    %cst_24 = arith.constant dense<0.000000e+00> : vector<32x1xf32>
    %43 = tpu.matmul %38, %42, %cst_24 {dimension_numbers = #tpu.dot_dimension_numbers<[1], [0], [0], [1], [0, 0, 1, 1], [], []>} : vector<32x32xf32>, vector<32x1xf32>, vector<32x1xf32> -> vector<32x1xf32>
    %cst_25 = arith.constant dense<0.000000e+00> : vector<32x32xf32>
    %44 = tpu.matmul %36, %36, %cst_25 {dimension_numbers = #tpu.dot_dimension_numbers<[1], [1], [0], [0], [0, 0, 1, 0], [], []>} : vector<32x1024xbf16>, vector<32x1024xbf16>, vector<32x32xf32> -> vector<32x32xf32>
    %cst_26 = arith.constant dense<0.000000e+00> : vector<32x32xf32>
    %45 = tpu.matmul %38, %44, %cst_26 {dimension_numbers = #tpu.dot_dimension_numbers<[1], [0], [0], [1], [0, 0, 1, 1], [], []>} : vector<32x32xf32>, vector<32x32xf32>, vector<32x32xf32> -> vector<32x32xf32>
    %46 = arith.mulf %45, %38 : vector<32x32xf32>
    %cst_27 = arith.constant dense<0.000000e+00> : vector<32xf32>
    %47 = vector.multi_reduction <add>, %46, %cst_27 [1] : vector<32x32xf32> to vector<32xf32>
    %48 = vector.shape_cast %47 : vector<32xf32> to vector<32x1xf32>
    %cst_28 = arith.constant 9.765625E-4 : f32
    %49 = vector.broadcast %cst_28 : f32 to vector<32x1xf32>
    %50 = arith.mulf %48, %49 : vector<32x1xf32>
    %51 = arith.mulf %43, %43 : vector<32x1xf32>
    %52 = arith.subf %50, %51 : vector<32x1xf32>
    %cst_29 = arith.constant 0.000000e+00 : f32
    %53 = vector.broadcast %cst_29 : f32 to vector<32x1xf32>
    %54 = arith.maximumf %52, %53 : vector<32x1xf32>
    %c0_30 = arith.constant 0 : index
    %c0_31 = arith.constant 0 : index
    %55 = vector.load %arg6[%c0_30, %c0_31] : memref<32x1xf32, #tpu.memory_space<vmem>>, vector<32x1xf32>
    %cst_32 = arith.constant 9.99999974E-6 : f32
    %56 = vector.broadcast %cst_32 : f32 to vector<32x1xf32>
    %57 = arith.addf %54, %56 : vector<32x1xf32>
    %58 = math.rsqrt %57 : vector<32x1xf32>
    %59 = arith.mulf %55, %58 : vector<32x1xf32>
    %c0_33 = arith.constant 0 : index
    %c0_34 = arith.constant 0 : index
    %60 = vector.load %arg7[%c0_33, %c0_34] : memref<32x1xf32, #tpu.memory_space<vmem>>, vector<32x1xf32>
    %61 = arith.mulf %43, %59 : vector<32x1xf32>
    %62 = arith.subf %60, %61 : vector<32x1xf32>
    %cst_35 = arith.constant dense<0.000000e+00> : vector<32x1024xf32>
    %63 = tpu.matmul %37, %36, %cst_35 {dimension_numbers = #tpu.dot_dimension_numbers<[1], [0], [0], [1], [0, 0, 1, 1], [], []>} : vector<32x32xbf16>, vector<32x1024xbf16>, vector<32x1024xf32> -> vector<32x1024xf32>
    %64 = vector.broadcast %59 : vector<32x1xf32> to vector<32x1024xf32>
    %65 = arith.mulf %63, %64 : vector<32x1024xf32>
    %66 = vector.broadcast %62 : vector<32x1xf32> to vector<32x1024xf32>
    %67 = arith.addf %65, %66 : vector<32x1024xf32>
    %cst_36 = arith.constant 1.000000e-01 : f32
    %68 = vector.broadcast %cst_36 : f32 to vector<32x1024xf32>
    %69 = arith.mulf %68, %67 : vector<32x1024xf32>
    %70 = arith.maximumf %67, %69 : vector<32x1024xf32>
    %71 = arith.truncf %70 : vector<32x1024xf32> to vector<32x1024xbf16>
    %c0_37 = arith.constant 0 : index
    %c0_38 = arith.constant 0 : index
    %72 = vector.load %arg8[%c0_37, %c0_38] : memref<32x32xbf16, #tpu.memory_space<vmem>>, vector<32x32xbf16>
    %73 = arith.extf %72 : vector<32x32xbf16> to vector<32x32xf32>
    %cst_39 = arith.constant 1.000000e+00 : bf16
    %74 = vector.broadcast %cst_39 : bf16 to vector<1024x1xbf16>
    %cst_40 = arith.constant dense<0.000000e+00> : vector<32x1xf32>
    %75 = tpu.matmul %71, %74, %cst_40 {dimension_numbers = #tpu.dot_dimension_numbers<[1], [0], [0], [1], [0, 0, 1, 1], [], []>} : vector<32x1024xbf16>, vector<1024x1xbf16>, vector<32x1xf32> -> vector<32x1xf32>
    %cst_41 = arith.constant 9.765625E-4 : f32
    %76 = vector.broadcast %cst_41 : f32 to vector<32x1xf32>
    %77 = arith.mulf %75, %76 : vector<32x1xf32>
    %cst_42 = arith.constant dense<0.000000e+00> : vector<32x1xf32>
    %78 = tpu.matmul %73, %77, %cst_42 {dimension_numbers = #tpu.dot_dimension_numbers<[1], [0], [0], [1], [0, 0, 1, 1], [], []>} : vector<32x32xf32>, vector<32x1xf32>, vector<32x1xf32> -> vector<32x1xf32>
    %cst_43 = arith.constant dense<0.000000e+00> : vector<32x32xf32>
    %79 = tpu.matmul %71, %71, %cst_43 {dimension_numbers = #tpu.dot_dimension_numbers<[1], [1], [0], [0], [0, 0, 1, 0], [], []>} : vector<32x1024xbf16>, vector<32x1024xbf16>, vector<32x32xf32> -> vector<32x32xf32>
    %cst_44 = arith.constant dense<0.000000e+00> : vector<32x32xf32>
    %80 = tpu.matmul %73, %79, %cst_44 {dimension_numbers = #tpu.dot_dimension_numbers<[1], [0], [0], [1], [0, 0, 1, 1], [], []>} : vector<32x32xf32>, vector<32x32xf32>, vector<32x32xf32> -> vector<32x32xf32>
    %81 = arith.mulf %80, %73 : vector<32x32xf32>
    %cst_45 = arith.constant dense<0.000000e+00> : vector<32xf32>
    %82 = vector.multi_reduction <add>, %81, %cst_45 [1] : vector<32x32xf32> to vector<32xf32>
    %83 = vector.shape_cast %82 : vector<32xf32> to vector<32x1xf32>
    %cst_46 = arith.constant 9.765625E-4 : f32
    %84 = vector.broadcast %cst_46 : f32 to vector<32x1xf32>
    %85 = arith.mulf %83, %84 : vector<32x1xf32>
    %86 = arith.mulf %78, %78 : vector<32x1xf32>
    %87 = arith.subf %85, %86 : vector<32x1xf32>
    %cst_47 = arith.constant 0.000000e+00 : f32
    %88 = vector.broadcast %cst_47 : f32 to vector<32x1xf32>
    %89 = arith.maximumf %87, %88 : vector<32x1xf32>
    %c0_48 = arith.constant 0 : index
    %c0_49 = arith.constant 0 : index
    %90 = vector.load %arg9[%c0_48, %c0_49] : memref<32x1xf32, #tpu.memory_space<vmem>>, vector<32x1xf32>
    %cst_50 = arith.constant 9.99999974E-6 : f32
    %91 = vector.broadcast %cst_50 : f32 to vector<32x1xf32>
    %92 = arith.addf %89, %91 : vector<32x1xf32>
    %93 = math.rsqrt %92 : vector<32x1xf32>
    %94 = arith.mulf %90, %93 : vector<32x1xf32>
    %c0_51 = arith.constant 0 : index
    %c0_52 = arith.constant 0 : index
    %95 = vector.load %arg10[%c0_51, %c0_52] : memref<32x1xf32, #tpu.memory_space<vmem>>, vector<32x1xf32>
    %96 = arith.mulf %78, %94 : vector<32x1xf32>
    %97 = arith.subf %95, %96 : vector<32x1xf32>
    %cst_53 = arith.constant dense<0.000000e+00> : vector<32x1024xf32>
    %98 = tpu.matmul %72, %71, %cst_53 {dimension_numbers = #tpu.dot_dimension_numbers<[1], [0], [0], [1], [0, 0, 1, 1], [], []>} : vector<32x32xbf16>, vector<32x1024xbf16>, vector<32x1024xf32> -> vector<32x1024xf32>
    %99 = vector.broadcast %94 : vector<32x1xf32> to vector<32x1024xf32>
    %100 = arith.mulf %98, %99 : vector<32x1024xf32>
    %101 = vector.broadcast %97 : vector<32x1xf32> to vector<32x1024xf32>
    %102 = arith.addf %100, %101 : vector<32x1024xf32>
    %cst_54 = arith.constant 1.000000e-01 : f32
    %103 = vector.broadcast %cst_54 : f32 to vector<32x1024xf32>
    %104 = arith.mulf %103, %102 : vector<32x1024xf32>
    %105 = arith.maximumf %102, %104 : vector<32x1024xf32>
    %106 = vector.extract_strided_slice %105 {offsets = [0, 0], sizes = [32, 128], strides = [1, 1]} : vector<32x1024xf32> to vector<32x128xf32>
    %107 = vector.extract_strided_slice %105 {offsets = [0, 128], sizes = [32, 128], strides = [1, 1]} : vector<32x1024xf32> to vector<32x128xf32>
    %108 = arith.maximumf %106, %107 : vector<32x128xf32>
    %109 = vector.extract_strided_slice %105 {offsets = [0, 256], sizes = [32, 128], strides = [1, 1]} : vector<32x1024xf32> to vector<32x128xf32>
    %110 = arith.maximumf %108, %109 : vector<32x128xf32>
    %111 = vector.extract_strided_slice %105 {offsets = [0, 384], sizes = [32, 128], strides = [1, 1]} : vector<32x1024xf32> to vector<32x128xf32>
    %112 = arith.maximumf %110, %111 : vector<32x128xf32>
    %113 = vector.extract_strided_slice %105 {offsets = [0, 512], sizes = [32, 128], strides = [1, 1]} : vector<32x1024xf32> to vector<32x128xf32>
    %114 = arith.maximumf %112, %113 : vector<32x128xf32>
    %115 = vector.extract_strided_slice %105 {offsets = [0, 640], sizes = [32, 128], strides = [1, 1]} : vector<32x1024xf32> to vector<32x128xf32>
    %116 = arith.maximumf %114, %115 : vector<32x128xf32>
    %117 = vector.extract_strided_slice %105 {offsets = [0, 768], sizes = [32, 128], strides = [1, 1]} : vector<32x1024xf32> to vector<32x128xf32>
    %118 = arith.maximumf %116, %117 : vector<32x128xf32>
    %119 = vector.extract_strided_slice %105 {offsets = [0, 896], sizes = [32, 128], strides = [1, 1]} : vector<32x1024xf32> to vector<32x128xf32>
    %120 = arith.maximumf %118, %119 : vector<32x128xf32>
    %c0_55 = arith.constant 0 : index
    %c0_56 = arith.constant 0 : index
    %c0_57 = arith.constant 0 : index
    %121 = vector.load %arg11[%c0_55, %c0_56, %c0_57] : memref<1x32x128xf32, #tpu.memory_space<vmem>>, vector<1x32x128xf32>
    %122 = vector.shape_cast %121 : vector<1x32x128xf32> to vector<32x128xf32>
    %123 = vector.shape_cast %120 : vector<32x128xf32> to vector<1x32x128xf32>
    tpu.vector_store %arg11[%c0_55, %c0_56, %c0_57], %123 {strides = array<i32>} : memref<1x32x128xf32, #tpu.memory_space<vmem>>, vector<1x32x128xf32>,
    return
  }
  func.func @transform_0(%arg0: i32) -> (i32, i32, i32) {
    %c0_i32 = arith.constant 0 : i32
    %c0_i32_0 = arith.constant 0 : i32
    %c0_i32_1 = arith.constant 0 : i32
    return %arg0, %c0_i32, %c0_i32_0 : i32, i32, i32
  }
  func.func @transform_1(%arg0: i32) -> (i32, i32) {
    %c0_i32 = arith.constant 0 : i32
    %c0_i32_0 = arith.constant 0 : i32
    %c0_i32_1 = arith.constant 0 : i32
    return %c0_i32, %c0_i32_0 : i32, i32
  }
  func.func @transform_2(%arg0: i32) -> (i32, i32) {
    %c0_i32 = arith.constant 0 : i32
    %c0_i32_0 = arith.constant 0 : i32
    %c0_i32_1 = arith.constant 0 : i32
    return %c0_i32, %c0_i32_0 : i32, i32
  }
  func.func @transform_3(%arg0: i32) -> (i32, i32) {
    %c0_i32 = arith.constant 0 : i32
    %c0_i32_0 = arith.constant 0 : i32
    %c0_i32_1 = arith.constant 0 : i32
    return %c0_i32, %c0_i32_0 : i32, i32
  }
  func.func @transform_4(%arg0: i32) -> (i32, i32) {
    %c0_i32 = arith.constant 0 : i32
    %c0_i32_0 = arith.constant 0 : i32
    %c0_i32_1 = arith.constant 0 : i32
    return %c0_i32, %c0_i32_0 : i32, i32
  }
  func.func @transform_5(%arg0: i32) -> (i32, i32) {
    %c0_i32 = arith.constant 0 : i32
    %c0_i32_0 = arith.constant 0 : i32
    %c0_i32_1 = arith.constant 0 : i32
    return %c0_i32, %c0_i32_0 : i32, i32
  }
  func.func @transform_6(%arg0: i32) -> (i32, i32) {
    %c0_i32 = arith.constant 0 : i32
    %c0_i32_0 = arith.constant 0 : i32
    %c0_i32_1 = arith.constant 0 : i32
    return %c0_i32, %c0_i32_0 : i32, i32
  }
  func.func @transform_7(%arg0: i32) -> (i32, i32) {
    %c0_i32 = arith.constant 0 : i32
    %c0_i32_0 = arith.constant 0 : i32
    %c0_i32_1 = arith.constant 0 : i32
    return %c0_i32, %c0_i32_0 : i32, i32
  }
  func.func @transform_8(%arg0: i32) -> (i32, i32) {
    %c0_i32 = arith.constant 0 : i32
    %c0_i32_0 = arith.constant 0 : i32
    %c0_i32_1 = arith.constant 0 : i32
    return %c0_i32, %c0_i32_0 : i32, i32
  }
  func.func @transform_9(%arg0: i32) -> (i32, i32) {
    %c0_i32 = arith.constant 0 : i32
    %c0_i32_0 = arith.constant 0 : i32
    %c0_i32_1 = arith.constant 0 : i32
    return %c0_i32, %c0_i32_0 : i32, i32
  }
  func.func @transform_10(%arg0: i32) -> (i32, i32, i32) {
    %c0_i32 = arith.constant 0 : i32
    %c0_i32_0 = arith.constant 0 : i32
    %c0_i32_1 = arith.constant 0 : i32
    return %arg0, %c0_i32, %c0_i32_0 : i32, i32, i32
  }
}

</mosaic_0001>

<llo_original>
// kernel: tpu_custom_call.1
$region0: #{tpu_custom_call.1}
  #allocation0 [shape = 'u32[]', space=smem, size = 0x4, offset = 0x4, fixed_abs, tag = 'smem constant byte address 0x4 - core index']
  #allocation1 [shape = 'u32[144,128]{1,0:T(1,128)}', space=vmem, size = 0x12000, scoped, tag = 'internal scratch']
  %s0 = inlined_call_operand.vmem [shape: bf16[2,7,1024], index: 0, kind: input, shape index: {}]
  %s1 = inlined_call_operand.vmem [shape: bf16[32,7], index: 1, kind: input, shape index: {}]
  %s2 = inlined_call_operand.vmem [shape: f32[32,1], index: 2, kind: input, shape index: {}]
  %s3 = inlined_call_operand.vmem [shape: f32[32,1], index: 3, kind: input, shape index: {}]
  %s4 = inlined_call_operand.vmem [shape: bf16[32,32], index: 4, kind: input, shape index: {}]
  %s5 = inlined_call_operand.vmem [shape: f32[32,1], index: 5, kind: input, shape index: {}]
  %s6 = inlined_call_operand.vmem [shape: f32[32,1], index: 6, kind: input, shape index: {}]
  %s7 = inlined_call_operand.vmem [shape: bf16[32,32], index: 7, kind: input, shape index: {}]
  %s8 = inlined_call_operand.vmem [shape: f32[32,1], index: 8, kind: input, shape index: {}]
  %s9 = inlined_call_operand.vmem [shape: f32[32,1], index: 9, kind: input, shape index: {}]
  %s10 = inlined_call_operand.hbm [shape: f32[2,32,128], index: 10, kind: output, shape index: {}]
  %s11 = sld [smem:[#allocation0]]
  $region73: #{tpu_custom_call.1} parent=0
    _
  %s13 = ssub.s32 1, %s11
  %s14 = scalar_select 0, %s13, %s11
  $region1: #{tpu_custom_call.1} parent=0
    #allocation2 [shape = 'u8[32768]{0}', space=vmem, size = 0x8000, scoped, tag = 'output window, operand 0']
    #allocation3 [shape = 's32[2]{0}', space=sflag, size = 0x8, scoped, tag = 'scoped memory for tpu_custom_call.1']
    %15 = vsyncpa [#allocation3], 0
    %s16 = scalar_lea.sflag [#allocation3], 1
    %17 = vsyncpa %s16, 0
    loop: start=0, step=1, limit=4
    $region2: #{tpu_custom_call.1} parent=1 // loop_pre_header
      _
    $region3: #{tpu_custom_call.1} parent=1 // loop_header
      %s19 = sphi 0, %s23
      %p20 = scmp.ge.s32.totalorder %s19, 4
      %s29 = sphi 0, %s31
      %s32 = sphi 0, %s29
      %s33 = sphi 0, %s32
      %s49 = sphi 0, %s33
      %s53 = sphi 0, %s53
      %s55 = sphi 0, %s53
      %s56 = sphi 0, %s55
      %s70 = sphi 0, %s56
      %s74 = sphi 0, %s74
      %s76 = sphi 0, %s74
      %s77 = sphi 0, %s76
      %s91 = sphi 0, %s77
      %s95 = sphi 0, %s95
      %s97 = sphi 0, %s95
      %s98 = sphi 0, %s97
      %s112 = sphi 0, %s98
      %s116 = sphi 0, %s116
      %s118 = sphi 0, %s116
      %s119 = sphi 0, %s118
      %s133 = sphi 0, %s119
      %s137 = sphi 0, %s137
      %s139 = sphi 0, %s137
      %s140 = sphi 0, %s139
      %s154 = sphi 0, %s140
      %s158 = sphi 0, %s158
      %s160 = sphi 0, %s158
      %s161 = sphi 0, %s160
      %s175 = sphi 0, %s161
      %s179 = sphi 0, %s179
      %s181 = sphi 0, %s179
      %s182 = sphi 0, %s181
      %s196 = sphi 0, %s182
      %s200 = sphi 0, %s200
      %s202 = sphi 0, %s200
      %s203 = sphi 0, %s202
      %s217 = sphi 0, %s203
      %s221 = sphi 0, %s221
      %s223 = sphi 0, %s221
      %s224 = sphi 0, %s223
      %s238 = sphi 0, %s224
      %s244 = sphi 0, %s246
      %s247 = sphi 0, %s244
      %s248 = sphi 0, %s247
      %s264 = sphi 0, %s248
    $region4: #{tpu_custom_call.1} parent=1 // loop_header_branch
      %22 = sbr.rel (%p20) target = $region8
    $region5: #{tpu_custom_call.1} parent=1 // loop_body
      %s24 = ssub.s32 %s19, 1
      %s25 = ssub.s32 %s19, 2
      %s26 = sadd.s32 %s19, 1
      %s27 = ssub.s32 %s19, %s26
      %p28 = scmp.eq.s32.totalorder %s27, 0
      %s30 = sadd.s32 %s29, 1
      %s31 = scalar_select %p28, %s29, %s30
      %p34 = pneg %p28
      %p35 = scmp.eq.s32.totalorder %s19, 1
      %p36 = por %p34, %p35
      %p37 = scmp.ne.s32.totalorder %s29, %s32
      %p38 = scmp.eq.s32.totalorder %s19, 0
      %p39 = por %p37, %p38
      %p40 = scmp.ne.s32.totalorder %s29, %s32
      %p41 = scmp.eq.s32.totalorder %s24, 1
      %p42 = por %p40, %p41
      %p43 = scmp.ne.s32.totalorder %s32, %s33
      %p44 = scmp.eq.s32.totalorder %s24, 0
      %p45 = por %p43, %p44
      %p46 = scmp.ne.s32.totalorder %s32, %s33
      %p47 = scmp.eq.s32.totalorder %s25, 1
      %p48 = por %p46, %p47
      %p50 = scmp.ne.s32.totalorder %s33, %s49
      %p51 = scmp.eq.s32.totalorder %s25, 0
      %p52 = por %p50, %p51
      %s54 = sadd.s32 %s53, 1
      %p57 = scmp.eq.s32.totalorder %s19, 1
      %p58 = scmp.ne.s32.totalorder %s53, %s55
      %p59 = scmp.eq.s32.totalorder %s19, 0
      %p60 = por %p58, %p59
      %p61 = scmp.ne.s32.totalorder %s53, %s55
      %p62 = scmp.eq.s32.totalorder %s24, 1
      %p63 = por %p61, %p62
      %p64 = scmp.ne.s32.totalorder %s55, %s56
      %p65 = scmp.eq.s32.totalorder %s24, 0
      %p66 = por %p64, %p65
      %p67 = scmp.ne.s32.totalorder %s55, %s56
      %p68 = scmp.eq.s32.totalorder %s25, 1
      %p69 = por %p67, %p68
      %p71 = scmp.ne.s32.totalorder %s56, %s70
      %p72 = scmp.eq.s32.totalorder %s25, 0
      %p73 = por %p71, %p72
      %s75 = sadd.s32 %s74, 1
      %p78 = scmp.eq.s32.totalorder %s19, 1
      %p79 = scmp.ne.s32.totalorder %s74, %s76
      %p80 = scmp.eq.s32.totalorder %s19, 0
      %p81 = por %p79, %p80
      %p82 = scmp.ne.s32.totalorder %s74, %s76
      %p83 = scmp.eq.s32.totalorder %s24, 1
      %p84 = por %p82, %p83
      %p85 = scmp.ne.s32.totalorder %s76, %s77
      %p86 = scmp.eq.s32.totalorder %s24, 0
      %p87 = por %p85, %p86
      %p88 = scmp.ne.s32.totalorder %s76, %s77
      %p89 = scmp.eq.s32.totalorder %s25, 1
      %p90 = por %p88, %p89
      %p92 = scmp.ne.s32.totalorder %s77, %s91
      %p93 = scmp.eq.s32.totalorder %s25, 0
      %p94 = por %p92, %p93
      %s96 = sadd.s32 %s95, 1
      %p99 = scmp.eq.s32.totalorder %s19, 1
      %p100 = scmp.ne.s32.totalorder %s95, %s97
      %p101 = scmp.eq.s32.totalorder %s19, 0
      %p102 = por %p100, %p101
      %p103 = scmp.ne.s32.totalorder %s95, %s97
      %p104 = scmp.eq.s32.totalorder %s24, 1
      %p105 = por %p103, %p104
      %p106 = scmp.ne.s32.totalorder %s97, %s98
      %p107 = scmp.eq.s32.totalorder %s24, 0
      %p108 = por %p106, %p107
      %p109 = scmp.ne.s32.totalorder %s97, %s98
      %p110 = scmp.eq.s32.totalorder %s25, 1
      %p111 = por %p109, %p110
      %p113 = scmp.ne.s32.totalorder %s98, %s112
      %p114 = scmp.eq.s32.totalorder %s25, 0
      %p115 = por %p113, %p114
      %s117 = sadd.s32 %s116, 1
      %p120 = scmp.eq.s32.totalorder %s19, 1
      %p121 = scmp.ne.s32.totalorder %s116, %s118
      %p122 = scmp.eq.s32.totalorder %s19, 0
      %p123 = por %p121, %p122
      %p124 = scmp.ne.s32.totalorder %s116, %s118
      %p125 = scmp.eq.s32.totalorder %s24, 1
      %p126 = por %p124, %p125
      %p127 = scmp.ne.s32.totalorder %s118, %s119
      %p128 = scmp.eq.s32.totalorder %s24, 0
      %p129 = por %p127, %p128
      %p130 = scmp.ne.s32.totalorder %s118, %s119
      %p131 = scmp.eq.s32.totalorder %s25, 1
      %p132 = por %p130, %p131
      %p134 = scmp.ne.s32.totalorder %s119, %s133
      %p135 = scmp.eq.s32.totalorder %s25, 0
      %p136 = por %p134, %p135
      %s138 = sadd.s32 %s137, 1
      %p141 = scmp.eq.s32.totalorder %s19, 1
      %p142 = scmp.ne.s32.totalorder %s137, %s139
      %p143 = scmp.eq.s32.totalorder %s19, 0
      %p144 = por %p142, %p143
      %p145 = scmp.ne.s32.totalorder %s137, %s139
      %p146 = scmp.eq.s32.totalorder %s24, 1
      %p147 = por %p145, %p146
      %p148 = scmp.ne.s32.totalorder %s139, %s140
      %p149 = scmp.eq.s32.totalorder %s24, 0
      %p150 = por %p148, %p149
      %p151 = scmp.ne.s32.totalorder %s139, %s140
      %p152 = scmp.eq.s32.totalorder %s25, 1
      %p153 = por %p151, %p152
      %p155 = scmp.ne.s32.totalorder %s140, %s154
      %p156 = scmp.eq.s32.totalorder %s25, 0
      %p157 = por %p155, %p156
      %s159 = sadd.s32 %s158, 1
      %p162 = scmp.eq.s32.totalorder %s19, 1
      %p163 = scmp.ne.s32.totalorder %s158, %s160
      %p164 = scmp.eq.s32.totalorder %s19, 0
      %p165 = por %p163, %p164
      %p166 = scmp.ne.s32.totalorder %s158, %s160
      %p167 = scmp.eq.s32.totalorder %s24, 1
      %p168 = por %p166, %p167
      %p169 = scmp.ne.s32.totalorder %s160, %s161
      %p170 = scmp.eq.s32.totalorder %s24, 0
      %p171 = por %p169, %p170
      %p172 = scmp.ne.s32.totalorder %s160, %s161
      %p173 = scmp.eq.s32.totalorder %s25, 1
      %p174 = por %p172, %p173
      %p176 = scmp.ne.s32.totalorder %s161, %s175
      %p177 = scmp.eq.s32.totalorder %s25, 0
      %p178 = por %p176, %p177
      %s180 = sadd.s32 %s179, 1
      %p183 = scmp.eq.s32.totalorder %s19, 1
      %p184 = scmp.ne.s32.totalorder %s179, %s181
      %p185 = scmp.eq.s32.totalorder %s19, 0
      %p186 = por %p184, %p185
      %p187 = scmp.ne.s32.totalorder %s179, %s181
      %p188 = scmp.eq.s32.totalorder %s24, 1
      %p189 = por %p187, %p188
      %p190 = scmp.ne.s32.totalorder %s181, %s182
      %p191 = scmp.eq.s32.totalorder %s24, 0
      %p192 = por %p190, %p191
      %p193 = scmp.ne.s32.totalorder %s181, %s182
      %p194 = scmp.eq.s32.totalorder %s25, 1
      %p195 = por %p193, %p194
      %p197 = scmp.ne.s32.totalorder %s182, %s196
      %p198 = scmp.eq.s32.totalorder %s25, 0
      %p199 = por %p197, %p198
      %s201 = sadd.s32 %s200, 1
      %p204 = scmp.eq.s32.totalorder %s19, 1
      %p205 = scmp.ne.s32.totalorder %s200, %s202
      %p206 = scmp.eq.s32.totalorder %s19, 0
      %p207 = por %p205, %p206
      %p208 = scmp.ne.s32.totalorder %s200, %s202
      %p209 = scmp.eq.s32.totalorder %s24, 1
      %p210 = por %p208, %p209
      %p211 = scmp.ne.s32.totalorder %s202, %s203
      %p212 = scmp.eq.s32.totalorder %s24, 0
      %p213 = por %p211, %p212
      %p214 = scmp.ne.s32.totalorder %s202, %s203
      %p215 = scmp.eq.s32.totalorder %s25, 1
      %p216 = por %p214, %p215
      %p218 = scmp.ne.s32.totalorder %s203, %s217
      %p219 = scmp.eq.s32.totalorder %s25, 0
      %p220 = por %p218, %p219
      %s222 = sadd.s32 %s221, 1
      %p225 = scmp.eq.s32.totalorder %s19, 1
      %p226 = scmp.ne.s32.totalorder %s221, %s223
      %p227 = scmp.eq.s32.totalorder %s19, 0
      %p228 = por %p226, %p227
      %p229 = scmp.ne.s32.totalorder %s221, %s223
      %p230 = scmp.eq.s32.totalorder %s24, 1
      %p231 = por %p229, %p230
      %p232 = scmp.ne.s32.totalorder %s223, %s224
      %p233 = scmp.eq.s32.totalorder %s24, 0
      %p234 = por %p232, %p233
      %p235 = scmp.ne.s32.totalorder %s223, %s224
      %p236 = scmp.eq.s32.totalorder %s25, 1
      %p237 = por %p235, %p236
      %p239 = scmp.ne.s32.totalorder %s224, %s238
      %p240 = scmp.eq.s32.totalorder %s25, 0
      %p241 = por %p239, %p240
      %s242 = ssub.s32 %s19, %s26
      %p243 = scmp.eq.s32.totalorder %s242, 0
      %s245 = sadd.s32 %s244, 1
      %s246 = scalar_select %p243, %s244, %s245
      %p249 = pneg %p243
      %p250 = scmp.eq.s32.totalorder %s19, 1
      %p251 = por %p249, %p250
      %p252 = scmp.ne.s32.totalorder %s244, %s247
      %p253 = scmp.eq.s32.totalorder %s19, 0
      %p254 = por %p252, %p253
      %p255 = scmp.ne.s32.totalorder %s244, %s247
      %p256 = scmp.eq.s32.totalorder %s24, 1
      %p257 = por %p255, %p256
      %p258 = scmp.ne.s32.totalorder %s247, %s248
      %p259 = scmp.eq.s32.totalorder %s24, 0
      %p260 = por %p258, %p259
      %p261 = scmp.ne.s32.totalorder %s247, %s248
      %p262 = scmp.eq.s32.totalorder %s25, 1
      %p263 = por %p261, %p262
      %p265 = scmp.ne.s32.totalorder %s248, %s264
      %p266 = scmp.eq.s32.totalorder %s25, 0
      %p267 = por %p265, %p266
      %p268 = scmp.le.s32.totalorder 1, %s19
      %p269 = scmp.lt.s32.totalorder %s19, 3
      %p270 = pnand %p268, %p269
      %p271 = pneg %p270
      // Predicated region
      $region9: #{tpu_custom_call.1} parent=5 // pred_check
        _
      $region10: #{tpu_custom_call.1} parent=5 // pred_check_branch
        %273 = sbr.rel (%p270) target = $region12
      $region11: #{tpu_custom_call.1} parent=5 // pred_region
        %s274 = ssub.s32 %s19, 1
        // Predicated region
        $region13: #{tpu_custom_call.1} parent=11 // pred_check
          %p275 = pneg %p66
        $region14: #{tpu_custom_call.1} parent=11 // pred_check_branch
          %277 = sbr.rel (%p275) target = $region16
        $region15: #{tpu_custom_call.1} parent=11 // pred_region
          _
        $region16: #{tpu_custom_call.1} parent=11 // pred_fallthru
          _
        // Predicated region
        $region17: #{tpu_custom_call.1} parent=11 // pred_check
          %p278 = pneg %p87
        $region18: #{tpu_custom_call.1} parent=11 // pred_check_branch
          %280 = sbr.rel (%p278) target = $region20
        $region19: #{tpu_custom_call.1} parent=11 // pred_region
          _
        $region20: #{tpu_custom_call.1} parent=11 // pred_fallthru
          _
        // Predicated region
        $region21: #{tpu_custom_call.1} parent=11 // pred_check
          %p281 = pneg %p108
        $region22: #{tpu_custom_call.1} parent=11 // pred_check_branch
          %283 = sbr.rel (%p281) target = $region24
        $region23: #{tpu_custom_call.1} parent=11 // pred_region
          _
        $region24: #{tpu_custom_call.1} parent=11 // pred_fallthru
          _
        // Predicated region
        $region25: #{tpu_custom_call.1} parent=11 // pred_check
          %p284 = pneg %p129
        $region26: #{tpu_custom_call.1} parent=11 // pred_check_branch
          %286 = sbr.rel (%p284) target = $region28
        $region27: #{tpu_custom_call.1} parent=11 // pred_region
          _
        $region28: #{tpu_custom_call.1} parent=11 // pred_fallthru
          _
        // Predicated region
        $region29: #{tpu_custom_call.1} parent=11 // pred_check
          %p287 = pneg %p150
        $region30: #{tpu_custom_call.1} parent=11 // pred_check_branch
          %289 = sbr.rel (%p287) target = $region32
        $region31: #{tpu_custom_call.1} parent=11 // pred_region
          _
        $region32: #{tpu_custom_call.1} parent=11 // pred_fallthru
          _
        // Predicated region
        $region33: #{tpu_custom_call.1} parent=11 // pred_check
          %p290 = pneg %p171
        $region34: #{tpu_custom_call.1} parent=11 // pred_check_branch
          %292 = sbr.rel (%p290) target = $region36
        $region35: #{tpu_custom_call.1} parent=11 // pred_region
          _
        $region36: #{tpu_custom_call.1} parent=11 // pred_fallthru
          _
        // Predicated region
        $region37: #{tpu_custom_call.1} parent=11 // pred_check
          %p293 = pneg %p192
        $region38: #{tpu_custom_call.1} parent=11 // pred_check_branch
          %295 = sbr.rel (%p293) target = $region40
        $region39: #{tpu_custom_call.1} parent=11 // pred_region
          _
        $region40: #{tpu_custom_call.1} parent=11 // pred_fallthru
          _
        // Predicated region
        $region41: #{tpu_custom_call.1} parent=11 // pred_check
          %p296 = pneg %p213
        $region42: #{tpu_custom_call.1} parent=11 // pred_check_branch
          %298 = sbr.rel (%p296) target = $region44
        $region43: #{tpu_custom_call.1} parent=11 // pred_region
          _
        $region44: #{tpu_custom_call.1} parent=11 // pred_fallthru
          _
        // Predicated region
        $region45: #{tpu_custom_call.1} parent=11 // pred_check
          %p299 = pneg %p234
        $region46: #{tpu_custom_call.1} parent=11 // pred_check_branch
          %301 = sbr.rel (%p299) target = $region48
        $region47: #{tpu_custom_call.1} parent=11 // pred_region
          _
        $region48: #{tpu_custom_call.1} parent=11 // pred_fallthru
          _
      $region12: #{tpu_custom_call.1} parent=5 // pred_fallthru
        _
      %p302 = scmp.lt.s32.totalorder %s19, 2
      // Predicated region
      $region49: #{tpu_custom_call.1} parent=5 // pred_check
        %p303 = pneg %p302
      $region50: #{tpu_custom_call.1} parent=5 // pred_check_branch
        %305 = sbr.rel (%p303) target = $region52
      $region51: #{tpu_custom_call.1} parent=5 // pred_region
        // Predicated region
        $region53: #{tpu_custom_call.1} parent=51 // pred_check
          %p306 = pneg %p39
        $region54: #{tpu_custom_call.1} parent=51 // pred_check_branch
          %308 = sbr.rel (%p306) target = $region56
        $region55: #{tpu_custom_call.1} parent=51 // pred_region
          %p309 = scmp.lt.s32.totalorder %s19, 1
          %s310 = scalar_select %p309, %s19, 1
          %s311 = smul.addr %s310, 8
          %s312 = smul.addr %s311, 4
          %s313 = scalar_lea.vmem %s0, %s312
        $region56: #{tpu_custom_call.1} parent=51 // pred_fallthru
          _
      $region52: #{tpu_custom_call.1} parent=5 // pred_fallthru
        _
      %p314 = scmp.le.s32.totalorder 1, %s19
      %p315 = scmp.lt.s32.totalorder %s19, 3
      %p316 = pnand %p314, %p315
      %p317 = pneg %p316
      // Predicated region
      $region57: #{tpu_custom_call.1} parent=5 // pred_check
        _
      $region58: #{tpu_custom_call.1} parent=5 // pred_check_branch
        %319 = sbr.rel (%p316) target = $region60
      $region59: #{tpu_custom_call.1} parent=5 // pred_region
        %s320 = ssub.s32 %s19, 1
        %p321 = scmp.lt.s32.totalorder %s24, 1
        %s322 = scalar_select %p321, %s24, 1
        %s323 = smul.addr %s322, 8
        %s324 = smul.addr %s323, 4
        %s325 = scalar_lea.vmem %s0, %s324
        %p326 = pneg %p45
        %p327 = pneg %p42
        %p328 = pneg %p66
        %p329 = pneg %p63
        %p330 = pneg %p87
        %p331 = pneg %p84
        %p332 = pneg %p108
        %p333 = pneg %p105
        %p334 = pneg %p129
        %p335 = pneg %p126
        %p336 = pneg %p150
        %p337 = pneg %p147
        %p338 = pneg %p171
        %p339 = pneg %p168
        %p340 = pneg %p192
        %p341 = pneg %p189
        %p342 = pneg %p213
        %p343 = pneg %p210
        %p344 = pneg %p234
        %p345 = pneg %p231
        %p346 = pneg %p260
        %p347 = pneg %p257
        %s348 = sand.u32 %s247, 1
        %s349 = scalar_lea.sflag [#allocation3], %s348
        %s350 = sand.u32 %s247, 1
        %s351 = smul.addr %s350, 32
        %s352 = scalar_lea.vmem [#allocation2], %s351
        %p353 = scmp.lt.s32.totalorder %s24, 1
        %s354 = scalar_select %p353, %s24, 1
        %s355 = smul.addr %s354, 8
        %s356 = smul.addr %s355, 4
        %s357 = scalar_lea.vmem %s0, %s356
        %v360 = vld [vmem:[%s357] sm:$0xff]
        %v361 = vld [vmem:[%s357 + $0x8] sm:$0xff]
        %v362 = vld [vmem:[%s357 + $0x10] sm:$0xff]
        %v363 = vld [vmem:[%s357 + $0x18] sm:$0xff]
        %v364 = vld [vmem:[%s1] sm:$0xf]
        %v365 = vld [vmem:[%s1 + $0x4] sm:$0xf]
        %v366 = vld [vmem:[%s1 + $0x8] sm:$0xf]
        %v367 = vld [vmem:[%s1 + $0xc] sm:$0xf]
        %v368 = vunpack.c.l.bf16 %v364
        %v369 = vunpack.c.l.bf16 %v365
        %v370 = vunpack.c.l.bf16 %v366
        %v371 = vunpack.c.l.bf16 %v367
        %v376 = vunpack.c.l.b16 %v360
        %v377 = vunpack.c.h.b16 %v360
        %v378 = vunpack.c.l.b16 %v361
        %v379 = vunpack.c.h.b16 %v361
        %v380 = vunpack.c.l.b16 %v362
        %v381 = vunpack.c.h.b16 %v362
        %v382 = vunpack.c.l.b16 %v363
        %v383 = vunpack.c.h.b16 %v363
        %v384 = vpack.c.b16 %v376, %v376
        %v385 = vpack.c.b16 %v377, %v377
        %v386 = vpack.c.b16 %v378, %v378
        %v387 = vpack.c.b16 %v379, %v379
        %v388 = vpack.c.b16 %v380, %v380
        %v389 = vpack.c.b16 %v381, %v381
        %v390 = vpack.c.b16 %v382, %v382
        %v391 = vpack.c.b16 %v383, %v383
        %400 = vmatprep.subr.bf16.mxu0 0
        %401 = vmatpush1.bf16.msra.mxu0 1065369472
        %402 = vmatprep.subr.bf16.mxu0 0
        %403 = vmatpush1.bf16.msra.mxu0 1065369472
        %404 = vmatprep.subr.bf16.mxu0 0
        %405 = vmatpush1.bf16.msra.mxu0 1065369472
        %406 = vmatprep.subr.bf16.mxu0 0
        %407 = vmatpush1.bf16.msra.mxu0 1065369472
        %408 = vmatprep.subr.bf16.mxu0 0
        %409 = vmatpush1.bf16.msra.mxu0 1065369472
        %410 = vmatprep.subr.bf16.mxu0 0
        %411 = vmatpush1.bf16.msra.mxu0 1065369472
        %412 = vmatprep.subr.bf16.mxu0 0
        %413 = vmatpush1.bf16.msra.mxu0 1065369472
        %414 = vmatprep.subr.bf16.mxu0 0
        %415 = vmatpush1.bf16.msra.mxu0 1065369472
        %416 = vmatprep.subr.bf16.mxu0 0
        %417 = vmatpush1.bf16.msra.mxu0 1065369472
        %418 = vmatprep.subr.bf16.mxu0 0
        %419 = vmatpush1.bf16.msra.mxu0 1065369472
        %420 = vmatprep.subr.bf16.mxu0 0
        %421 = vmatpush1.bf16.msra.mxu0 1065369472
        %422 = vmatprep.subr.bf16.mxu0 0
        %423 = vmatpush1.bf16.msra.mxu0 1065369472
        %424 = vmatprep.subr.bf16.mxu0 0
        %425 = vmatpush1.bf16.msra.mxu0 1065369472
        %426 = vmatprep.subr.bf16.mxu0 0
        %427 = vmatpush1.bf16.msra.mxu0 1065369472
        %428 = vmatprep.subr.bf16.mxu0 0
        %429 = vmatpush1.bf16.msra.mxu0 1065369472
        %430 = vmatprep.subr.bf16.mxu0 0
        %431 = vmatpush1.bf16.msra.mxu0 1065369472
        %432 = vmatprep.mubr.bf16.mxu0 %v385
        %433 = vmatmul.mubr.bf16.gmra.mrb[0].mxu0 %v384
        %v434 = vpop.f32.mrb[0].mxu0
        %v435 = vadd.f32 0.0, %v434
        %v436 = vpop.f32.mrb[0].mxu0
        %v437 = vpop.f32.mrb[0].mxu0
        %v438 = vpop.f32.mrb[0].mxu0
        %439 = vdwg.mxu0
        %440 = vmatprep.subr.bf16.mxu0 0
        %441 = vmatpush1.bf16.msra.mxu0 1065369472
        %442 = vmatprep.subr.bf16.mxu0 0
        %443 = vmatpush1.bf16.msra.mxu0 1065369472
        %444 = vmatprep.subr.bf16.mxu0 0
        %445 = vmatpush1.bf16.msra.mxu0 1065369472
        %446 = vmatprep.subr.bf16.mxu0 0
        %447 = vmatpush1.bf16.msra.mxu0 1065369472
        %448 = vmatprep.subr.bf16.mxu0 0
        %449 = vmatpush1.bf16.msra.mxu0 1065369472
        %450 = vmatprep.subr.bf16.mxu0 0
        %451 = vmatpush1.bf16.msra.mxu0 1065369472
        %452 = vmatprep.subr.bf16.mxu0 0
        %453 = vmatpush1.bf16.msra.mxu0 1065369472
        %454 = vmatprep.subr.bf16.mxu0 0
        %455 = vmatpush1.bf16.msra.mxu0 1065369472
        %456 = vmatprep.subr.bf16.mxu0 0
        %457 = vmatpush1.bf16.msra.mxu0 1065369472
        %458 = vmatprep.subr.bf16.mxu0 0
        %459 = vmatpush1.bf16.msra.mxu0 1065369472
        %460 = vmatprep.subr.bf16.mxu0 0
        %461 = vmatpush1.bf16.msra.mxu0 1065369472
        %462 = vmatprep.subr.bf16.mxu0 0
        %463 = vmatpush1.bf16.msra.mxu0 1065369472
        %464 = vmatprep.subr.bf16.mxu0 0
        %465 = vmatpush1.bf16.msra.mxu0 1065369472
        %466 = vmatprep.subr.bf16.mxu0 0
        %467 = vmatpush1.bf16.msra.mxu0 1065369472
        %468 = vmatprep.subr.bf16.mxu0 0
        %469 = vmatpush1.bf16.msra.mxu0 1065369472
        %470 = vmatprep.subr.bf16.mxu0 0
        %471 = vmatpush1.bf16.msra.mxu0 1065369472
        %472 = vmatprep.mubr.bf16.mxu0 %v387
        %473 = vmatmul.mubr.bf16.gmra.mrb[0].mxu0 %v386
        %v474 = vpop.f32.mrb[0].mxu0
        %v475 = vadd.f32 %v435, %v474
        %v476 = vpop.f32.mrb[0].mxu0
        %v477 = vpop.f32.mrb[0].mxu0
        %v478 = vpop.f32.mrb[0].mxu0
        %479 = vdwg.mxu0
        %480 = vmatprep.subr.bf16.mxu0 0
        %481 = vmatpush1.bf16.msra.mxu0 1065369472
        %482 = vmatprep.subr.bf16.mxu0 0
        %483 = vmatpush1.bf16.msra.mxu0 1065369472
        %484 = vmatprep.subr.bf16.mxu0 0
        %485 = vmatpush1.bf16.msra.mxu0 1065369472
        %486 = vmatprep.subr.bf16.mxu0 0
        %487 = vmatpush1.bf16.msra.mxu0 1065369472
        %488 = vmatprep.subr.bf16.mxu0 0
        %489 = vmatpush1.bf16.msra.mxu0 1065369472
        %490 = vmatprep.subr.bf16.mxu0 0
        %491 = vmatpush1.bf16.msra.mxu0 1065369472
        %492 = vmatprep.subr.bf16.mxu0 0
        %493 = vmatpush1.bf16.msra.mxu0 1065369472
        %494 = vmatprep.subr.bf16.mxu0 0
        %495 = vmatpush1.bf16.msra.mxu0 1065369472
        %496 = vmatprep.subr.bf16.mxu0 0
        %497 = vmatpush1.bf16.msra.mxu0 1065369472
        %498 = vmatprep.subr.bf16.mxu0 0
        %499 = vmatpush1.bf16.msra.mxu0 1065369472
        %500 = vmatprep.subr.bf16.mxu0 0
        %501 = vmatpush1.bf16.msra.mxu0 1065369472
        %502 = vmatprep.subr.bf16.mxu0 0
        %503 = vmatpush1.bf16.msra.mxu0 1065369472
        %504 = vmatprep.subr.bf16.mxu0 0
        %505 = vmatpush1.bf16.msra.mxu0 1065369472
        %506 = vmatprep.subr.bf16.mxu0 0
        %507 = vmatpush1.bf16.msra.mxu0 1065369472
        %508 = vmatprep.subr.bf16.mxu0 0
        %509 = vmatpush1.bf16.msra.mxu0 1065369472
        %510 = vmatprep.subr.bf16.mxu0 0
        %511 = vmatpush1.bf16.msra.mxu0 1065369472
        %512 = vmatprep.mubr.bf16.mxu0 %v389
        %513 = vmatmul.mubr.bf16.gmra.mrb[0].mxu0 %v388
        %v514 = vpop.f32.mrb[0].mxu0
        %v515 = vadd.f32 %v475, %v514
        %v516 = vpop.f32.mrb[0].mxu0
        %v517 = vpop.f32.mrb[0].mxu0
        %v518 = vpop.f32.mrb[0].mxu0
        %519 = vdwg.mxu0
        %520 = vmatprep.subr.bf16.mxu0 0
        %521 = vmatpush1.bf16.msra.mxu0 1065369472
        %522 = vmatprep.subr.bf16.mxu0 0
        %523 = vmatpush1.bf16.msra.mxu0 1065369472
        %524 = vmatprep.subr.bf16.mxu0 0
        %525 = vmatpush1.bf16.msra.mxu0 1065369472
        %526 = vmatprep.subr.bf16.mxu0 0
        %527 = vmatpush1.bf16.msra.mxu0 1065369472
        %528 = vmatprep.subr.bf16.mxu0 0
        %529 = vmatpush1.bf16.msra.mxu0 1065369472
        %530 = vmatprep.subr.bf16.mxu0 0
        %531 = vmatpush1.bf16.msra.mxu0 1065369472
        %532 = vmatprep.subr.bf16.mxu0 0
        %533 = vmatpush1.bf16.msra.mxu0 1065369472
        %534 = vmatprep.subr.bf16.mxu0 0
        %535 = vmatpush1.bf16.msra.mxu0 1065369472
        %536 = vmatprep.subr.bf16.mxu0 0
        %537 = vmatpush1.bf16.msra.mxu0 1065369472
        %538 = vmatprep.subr.bf16.mxu0 0
        %539 = vmatpush1.bf16.msra.mxu0 1065369472
        %540 = vmatprep.subr.bf16.mxu0 0
        %541 = vmatpush1.bf16.msra.mxu0 1065369472
        %542 = vmatprep.subr.bf16.mxu0 0
        %543 = vmatpush1.bf16.msra.mxu0 1065369472
        %544 = vmatprep.subr.bf16.mxu0 0
        %545 = vmatpush1.bf16.msra.mxu0 1065369472
        %546 = vmatprep.subr.bf16.mxu0 0
        %547 = vmatpush1.bf16.msra.mxu0 1065369472
        %548 = vmatprep.subr.bf16.mxu0 0
        %549 = vmatpush1.bf16.msra.mxu0 1065369472
        %550 = vmatprep.subr.bf16.mxu0 0
        %551 = vmatpush1.bf16.msra.mxu0 1065369472
        %552 = vmatprep.mubr.bf16.mxu0 %v391
        %553 = vmatmul.mubr.bf16.gmra.mrb[0].mxu0 %v390
        %v554 = vpop.f32.mrb[0].mxu0
        %v555 = vadd.f32 %v515, %v554
        %v556 = vpop.f32.mrb[0].mxu0
        %v557 = vpop.f32.mrb[0].mxu0
        %v558 = vpop.f32.mrb[0].mxu0
        %559 = vdwg.mxu0
        %v560 = vmul.f32 %v555, 0.0009765625
        %vm561 = vcmask 56320
        %v563 = vsel %vm561, %v368, 0
        %v566 = vsel %vm561, %v369, 0
        %v569 = vsel %vm561, %v370, 0
        %v572 = vsel %vm561, %v371, 0
        %vm574 = vcmask 1046528
        %v576 = vsel %vm574, %v560, 0
        %578 = vmatprep.subr.mxu0 0.0
        %579 = vmatpush1.msra.mxu0 %v576
        %580 = vmatprep.subr.mxu0 0.0
        %581 = vmatpush1.msra.mxu0 0.0
        %582 = vmatprep.subr.mxu0 0.0
        %583 = vmatpush1.msra.mxu0 0.0
        %584 = vmatprep.subr.mxu0 0.0
        %585 = vmatpush1.msra.mxu0 0.0
        %586 = vmatprep.subr.mxu0 0.0
        %587 = vmatpush1.msra.mxu0 0.0
        %588 = vmatprep.subr.mxu0 0.0
        %589 = vmatpush1.msra.mxu0 0.0
        %590 = vmatprep.subr.mxu0 0.0
        %591 = vmatpush1.msra.mxu0 0.0
        %592 = vmatprep.subr.mxu0 0.0
        %593 = vmatpush1.msra.mxu0 0.0
        %594 = vmatprep.subr.mxu0 0.0
        %595 = vmatpush1.msra.mxu0 0.0
        %596 = vmatprep.subr.mxu0 0.0
        %597 = vmatpush1.msra.mxu0 0.0
        %598 = vmatprep.subr.mxu0 0.0
        %599 = vmatpush1.msra.mxu0 0.0
        %600 = vmatprep.subr.mxu0 0.0
        %601 = vmatpush1.msra.mxu0 0.0
        %602 = vmatprep.subr.mxu0 0.0
        %603 = vmatpush1.msra.mxu0 0.0
        %604 = vmatprep.subr.mxu0 0.0
        %605 = vmatpush1.msra.mxu0 0.0
        %606 = vmatprep.subr.mxu0 0.0
        %607 = vmatpush1.msra.mxu0 0.0
        %608 = vmatprep.subr.mxu0 0.0
        %609 = vmatpush1.msra.mxu0 0.0
        %610 = vmatprep.subr.mxu0 0.0
        %611 = vmatpush1.msra.mxu0 0.0
        %612 = vmatprep.subr.mxu0 0.0
        %613 = vmatpush1.msra.mxu0 0.0
        %614 = vmatprep.subr.mxu0 0.0
        %615 = vmatpush1.msra.mxu0 0.0
        %616 = vmatprep.subr.mxu0 0.0
        %617 = vmatpush1.msra.mxu0 0.0
        %618 = vmatprep.subr.mxu0 0.0
        %619 = vmatpush1.msra.mxu0 0.0
        %620 = vmatprep.subr.mxu0 0.0
        %621 = vmatpush1.msra.mxu0 0.0
        %622 = vmatprep.subr.mxu0 0.0
        %623 = vmatpush1.msra.mxu0 0.0
        %624 = vmatprep.subr.mxu0 0.0
        %625 = vmatpush1.msra.mxu0 0.0
        %626 = vmatprep.subr.mxu0 0.0
        %627 = vmatpush1.msra.mxu0 0.0
        %628 = vmatprep.subr.mxu0 0.0
        %629 = vmatpush1.msra.mxu0 0.0
        %630 = vmatprep.subr.mxu0 0.0
        %631 = vmatpush1.msra.mxu0 0.0
        %632 = vmatprep.subr.mxu0 0.0
        %633 = vmatpush1.msra.mxu0 0.0
        %634 = vmatprep.subr.mxu0 0.0
        %635 = vmatpush1.msra.mxu0 0.0
        %636 = vmatprep.subr.mxu0 0.0
        %637 = vmatpush1.msra.mxu0 0.0
        %638 = vmatprep.subr.mxu0 0.0
        %639 = vmatpush1.msra.mxu0 0.0
        %640 = vmatprep.subr.mxu0 0.0
        %641 = vmatpush1.msra.mxu0 0.0
        %642 = vmatprep.mubr.f32.mxu0 0.0
        %643 = vmatmul.mubr.f32.gmra.mrb[0].mxu0 %v563
        %v644 = vpop.f32.mrb[0].mxu0
        %v645 = vadd.f32 0.0, %v644
        %v646 = vpop.f32.mrb[0].mxu0
        %647 = vmatprep.mubr.f32.mxu0 0.0
        %648 = vmatmul.mubr.f32.gmra.mrb[0].mxu0 %v566
        %v649 = vpop.f32.mrb[0].mxu0
        %v650 = vadd.f32 0.0, %v649
        %v651 = vpop.f32.mrb[0].mxu0
        %652 = vmatprep.mubr.f32.mxu0 0.0
        %653 = vmatmul.mubr.f32.gmra.mrb[0].mxu0 %v569
        %v654 = vpop.f32.mrb[0].mxu0
        %v655 = vadd.f32 0.0, %v654
        %v656 = vpop.f32.mrb[0].mxu0
        %657 = vmatprep.mubr.f32.mxu0 0.0
        %658 = vmatmul.mubr.f32.gmra.mrb[0].mxu0 %v572
        %v659 = vpop.f32.mrb[0].mxu0
        %v660 = vadd.f32 0.0, %v659
        %v661 = vpop.f32.mrb[0].mxu0
        %662 = vdwg.mxu0
        %663 = vmatprep.subr.bf16.mxu0 %v385
        %664 = vmatpush1.bf16.xpose.msra.mxu0 %v384
        %665 = vmatprep.subr.bf16.mxu0 0
        %666 = vmatpush1.bf16.xpose.msra.mxu0 0
        %667 = vmatprep.subr.bf16.mxu0 0
        %668 = vmatpush1.bf16.xpose.msra.mxu0 0
        %669 = vmatprep.subr.bf16.mxu0 0
        %670 = vmatpush1.bf16.xpose.msra.mxu0 0
        %671 = vmatprep.subr.bf16.mxu0 0
        %672 = vmatpush1.bf16.xpose.msra.mxu0 0
        %673 = vmatprep.subr.bf16.mxu0 0
        %674 = vmatpush1.bf16.xpose.msra.mxu0 0
        %675 = vmatprep.subr.bf16.mxu0 0
        %676 = vmatpush1.bf16.xpose.msra.mxu0 0
        %677 = vmatprep.subr.bf16.mxu0 0
        %678 = vmatpush1.bf16.xpose.msra.mxu0 0
        %679 = vmatprep.subr.bf16.mxu0 0
        %680 = vmatpush1.bf16.xpose.msra.mxu0 0
        %681 = vmatprep.subr.bf16.mxu0 0
        %682 = vmatpush1.bf16.xpose.msra.mxu0 0
        %683 = vmatprep.subr.bf16.mxu0 0
        %684 = vmatpush1.bf16.xpose.msra.mxu0 0
        %685 = vmatprep.subr.bf16.mxu0 0
        %686 = vmatpush1.bf16.xpose.msra.mxu0 0
        %687 = vmatprep.subr.bf16.mxu0 0
        %688 = vmatpush1.bf16.xpose.msra.mxu0 0
        %689 = vmatprep.subr.bf16.mxu0 0
        %690 = vmatpush1.bf16.xpose.msra.mxu0 0
        %691 = vmatprep.subr.bf16.mxu0 0
        %692 = vmatpush1.bf16.xpose.msra.mxu0 0
        %693 = vmatprep.subr.bf16.mxu0 0
        %694 = vmatpush1.bf16.xpose.msra.mxu0 0
        %695 = vmatprep.mubr.bf16.mxu0 %v385
        %696 = vmatmul.mubr.bf16.gmra.mrb[0].mxu0 %v384
        %v697 = vpop.f32.mrb[0].mxu0
        %v698 = vadd.f32 0.0, %v697
        %v699 = vpop.f32.mrb[0].mxu0
        %v700 = vpop.f32.mrb[0].mxu0
        %v701 = vpop.f32.mrb[0].mxu0
        %702 = vdwg.mxu0
        %703 = vmatprep.subr.bf16.mxu0 %v387
        %704 = vmatpush1.bf16.xpose.msra.mxu0 %v386
        %705 = vmatprep.subr.bf16.mxu0 0
        %706 = vmatpush1.bf16.xpose.msra.mxu0 0
        %707 = vmatprep.subr.bf16.mxu0 0
        %708 = vmatpush1.bf16.xpose.msra.mxu0 0
        %709 = vmatprep.subr.bf16.mxu0 0
        %710 = vmatpush1.bf16.xpose.msra.mxu0 0
        %711 = vmatprep.subr.bf16.mxu0 0
        %712 = vmatpush1.bf16.xpose.msra.mxu0 0
        %713 = vmatprep.subr.bf16.mxu0 0
        %714 = vmatpush1.bf16.xpose.msra.mxu0 0
        %715 = vmatprep.subr.bf16.mxu0 0
        %716 = vmatpush1.bf16.xpose.msra.mxu0 0
        %717 = vmatprep.subr.bf16.mxu0 0
        %718 = vmatpush1.bf16.xpose.msra.mxu0 0
        %719 = vmatprep.subr.bf16.mxu0 0
        %720 = vmatpush1.bf16.xpose.msra.mxu0 0
        %721 = vmatprep.subr.bf16.mxu0 0
        %722 = vmatpush1.bf16.xpose.msra.mxu0 0
        %723 = vmatprep.subr.bf16.mxu0 0
        %724 = vmatpush1.bf16.xpose.msra.mxu0 0
        %725 = vmatprep.subr.bf16.mxu0 0
        %726 = vmatpush1.bf16.xpose.msra.mxu0 0
        %727 = vmatprep.subr.bf16.mxu0 0
        %728 = vmatpush1.bf16.xpose.msra.mxu0 0
        %729 = vmatprep.subr.bf16.mxu0 0
        %730 = vmatpush1.bf16.xpose.msra.mxu0 0
        %731 = vmatprep.subr.bf16.mxu0 0
        %732 = vmatpush1.bf16.xpose.msra.mxu0 0
        %733 = vmatprep.subr.bf16.mxu0 0
        %734 = vmatpush1.bf16.xpose.msra.mxu0 0
        %735 = vmatprep.mubr.bf16.mxu0 %v387
        %736 = vmatmul.mubr.bf16.gmra.mrb[0].mxu0 %v386
        %v737 = vpop.f32.mrb[0].mxu0
        %v738 = vadd.f32 %v698, %v737
        %v739 = vpop.f32.mrb[0].mxu0
        %v740 = vpop.f32.mrb[0].mxu0
        %v741 = vpop.f32.mrb[0].mxu0
        %742 = vdwg.mxu0
        %743 = vmatprep.subr.bf16.mxu0 %v389
        %744 = vmatpush1.bf16.xpose.msra.mxu0 %v388
        %745 = vmatprep.subr.bf16.mxu0 0
        %746 = vmatpush1.bf16.xpose.msra.mxu0 0
        %747 = vmatprep.subr.bf16.mxu0 0
        %748 = vmatpush1.bf16.xpose.msra.mxu0 0
        %749 = vmatprep.subr.bf16.mxu0 0
        %750 = vmatpush1.bf16.xpose.msra.mxu0 0
        %751 = vmatprep.subr.bf16.mxu0 0
        %752 = vmatpush1.bf16.xpose.msra.mxu0 0
        %753 = vmatprep.subr.bf16.mxu0 0
        %754 = vmatpush1.bf16.xpose.msra.mxu0 0
        %755 = vmatprep.subr.bf16.mxu0 0
        %756 = vmatpush1.bf16.xpose.msra.mxu0 0
        %757 = vmatprep.subr.bf16.mxu0 0
        %758 = vmatpush1.bf16.xpose.msra.mxu0 0
        %759 = vmatprep.subr.bf16.mxu0 0
        %760 = vmatpush1.bf16.xpose.msra.mxu0 0
        %761 = vmatprep.subr.bf16.mxu0 0
        %762 = vmatpush1.bf16.xpose.msra.mxu0 0
        %763 = vmatprep.subr.bf16.mxu0 0
        %764 = vmatpush1.bf16.xpose.msra.mxu0 0
        %765 = vmatprep.subr.bf16.mxu0 0
        %766 = vmatpush1.bf16.xpose.msra.mxu0 0
        %767 = vmatprep.subr.bf16.mxu0 0
        %768 = vmatpush1.bf16.xpose.msra.mxu0 0
        %769 = vmatprep.subr.bf16.mxu0 0
        %770 = vmatpush1.bf16.xpose.msra.mxu0 0
        %771 = vmatprep.subr.bf16.mxu0 0
        %772 = vmatpush1.bf16.xpose.msra.mxu0 0
        %773 = vmatprep.subr.bf16.mxu0 0
        %774 = vmatpush1.bf16.xpose.msra.mxu0 0
        %775 = vmatprep.mubr.bf16.mxu0 %v389
        %776 = vmatmul.mubr.bf16.gmra.mrb[0].mxu0 %v388
        %v777 = vpop.f32.mrb[0].mxu0
        %v778 = vadd.f32 %v738, %v777
        %v779 = vpop.f32.mrb[0].mxu0
        %v780 = vpop.f32.mrb[0].mxu0
        %v781 = vpop.f32.mrb[0].mxu0
        %782 = vdwg.mxu0
        %783 = vmatprep.subr.bf16.mxu0 %v391
        %784 = vmatpush1.bf16.xpose.msra.mxu0 %v390
        %785 = vmatprep.subr.bf16.mxu0 0
        %786 = vmatpush1.bf16.xpose.msra.mxu0 0
        %787 = vmatprep.subr.bf16.mxu0 0
        %788 = vmatpush1.bf16.xpose.msra.mxu0 0
        %789 = vmatprep.subr.bf16.mxu0 0
        %790 = vmatpush1.bf16.xpose.msra.mxu0 0
        %791 = vmatprep.subr.bf16.mxu0 0
        %792 = vmatpush1.bf16.xpose.msra.mxu0 0
        %793 = vmatprep.subr.bf16.mxu0 0
        %794 = vmatpush1.bf16.xpose.msra.mxu0 0
        %795 = vmatprep.subr.bf16.mxu0 0
        %796 = vmatpush1.bf16.xpose.msra.mxu0 0
        %797 = vmatprep.subr.bf16.mxu0 0
        %798 = vmatpush1.bf16.xpose.msra.mxu0 0
        %799 = vmatprep.subr.bf16.mxu0 0
        %800 = vmatpush1.bf16.xpose.msra.mxu0 0
        %801 = vmatprep.subr.bf16.mxu0 0
        %802 = vmatpush1.bf16.xpose.msra.mxu0 0
        %803 = vmatprep.subr.bf16.mxu0 0
        %804 = vmatpush1.bf16.xpose.msra.mxu0 0
        %805 = vmatprep.subr.bf16.mxu0 0
        %806 = vmatpush1.bf16.xpose.msra.mxu0 0
        %807 = vmatprep.subr.bf16.mxu0 0
        %808 = vmatpush1.bf16.xpose.msra.mxu0 0
        %809 = vmatprep.subr.bf16.mxu0 0
        %810 = vmatpush1.bf16.xpose.msra.mxu0 0
        %811 = vmatprep.subr.bf16.mxu0 0
        %812 = vmatpush1.bf16.xpose.msra.mxu0 0
        %813 = vmatprep.subr.bf16.mxu0 0
        %814 = vmatpush1.bf16.xpose.msra.mxu0 0
        %815 = vmatprep.mubr.bf16.mxu0 %v391
        %816 = vmatmul.mubr.bf16.gmra.mrb[0].mxu0 %v390
        %v817 = vpop.f32.mrb[0].mxu0
        %v818 = vadd.f32 %v778, %v817
        %v819 = vpop.f32.mrb[0].mxu0
        %v820 = vpop.f32.mrb[0].mxu0
        %v821 = vpop.f32.mrb[0].mxu0
        %822 = vdwg.mxu0
        %v824 = vsel %vm574, %v818, 0
        %826 = vmatprep.subr.mxu0 0.0
        %827 = vmatpush1.msra.mxu0 %v824
        %828 = vmatprep.subr.mxu0 0.0
        %829 = vmatpush1.msra.mxu0 0.0
        %830 = vmatprep.subr.mxu0 0.0
        %831 = vmatpush1.msra.mxu0 0.0
        %832 = vmatprep.subr.mxu0 0.0
        %833 = vmatpush1.msra.mxu0 0.0
        %834 = vmatprep.subr.mxu0 0.0
        %835 = vmatpush1.msra.mxu0 0.0
        %836 = vmatprep.subr.mxu0 0.0
        %837 = vmatpush1.msra.mxu0 0.0
        %838 = vmatprep.subr.mxu0 0.0
        %839 = vmatpush1.msra.mxu0 0.0
        %840 = vmatprep.subr.mxu0 0.0
        %841 = vmatpush1.msra.mxu0 0.0
        %842 = vmatprep.subr.mxu0 0.0
        %843 = vmatpush1.msra.mxu0 0.0
        %844 = vmatprep.subr.mxu0 0.0
        %845 = vmatpush1.msra.mxu0 0.0
        %846 = vmatprep.subr.mxu0 0.0
        %847 = vmatpush1.msra.mxu0 0.0
        %848 = vmatprep.subr.mxu0 0.0
        %849 = vmatpush1.msra.mxu0 0.0
        %850 = vmatprep.subr.mxu0 0.0
        %851 = vmatpush1.msra.mxu0 0.0
        %852 = vmatprep.subr.mxu0 0.0
        %853 = vmatpush1.msra.mxu0 0.0
        %854 = vmatprep.subr.mxu0 0.0
        %855 = vmatpush1.msra.mxu0 0.0
        %856 = vmatprep.subr.mxu0 0.0
        %857 = vmatpush1.msra.mxu0 0.0
        %858 = vmatprep.subr.mxu0 0.0
        %859 = vmatpush1.msra.mxu0 0.0
        %860 = vmatprep.subr.mxu0 0.0
        %861 = vmatpush1.msra.mxu0 0.0
        %862 = vmatprep.subr.mxu0 0.0
        %863 = vmatpush1.msra.mxu0 0.0
        %864 = vmatprep.subr.mxu0 0.0
        %865 = vmatpush1.msra.mxu0 0.0
        %866 = vmatprep.subr.mxu0 0.0
        %867 = vmatpush1.msra.mxu0 0.0
        %868 = vmatprep.subr.mxu0 0.0
        %869 = vmatpush1.msra.mxu0 0.0
        %870 = vmatprep.subr.mxu0 0.0
        %871 = vmatpush1.msra.mxu0 0.0
        %872 = vmatprep.subr.mxu0 0.0
        %873 = vmatpush1.msra.mxu0 0.0
        %874 = vmatprep.subr.mxu0 0.0
        %875 = vmatpush1.msra.mxu0 0.0
        %876 = vmatprep.subr.mxu0 0.0
        %877 = vmatpush1.msra.mxu0 0.0
        %878 = vmatprep.subr.mxu0 0.0
        %879 = vmatpush1.msra.mxu0 0.0
        %880 = vmatprep.subr.mxu0 0.0
        %881 = vmatpush1.msra.mxu0 0.0
        %882 = vmatprep.subr.mxu0 0.0
        %883 = vmatpush1.msra.mxu0 0.0
        %884 = vmatprep.subr.mxu0 0.0
        %885 = vmatpush1.msra.mxu0 0.0
        %886 = vmatprep.subr.mxu0 0.0
        %887 = vmatpush1.msra.mxu0 0.0
        %888 = vmatprep.subr.mxu0 0.0
        %889 = vmatpush1.msra.mxu0 0.0
        %890 = vmatprep.mubr.f32.mxu0 0.0
        %891 = vmatmul.mubr.f32.gmra.mrb[0].mxu0 %v563
        %v892 = vpop.f32.mrb[0].mxu0
        %v893 = vadd.f32 0.0, %v892
        %v894 = vpop.f32.mrb[0].mxu0
        %895 = vmatprep.mubr.f32.mxu0 0.0
        %896 = vmatmul.mubr.f32.gmra.mrb[0].mxu0 %v566
        %v897 = vpop.f32.mrb[0].mxu0
        %v898 = vadd.f32 0.0, %v897
        %v899 = vpop.f32.mrb[0].mxu0
        %900 = vmatprep.mubr.f32.mxu0 0.0
        %901 = vmatmul.mubr.f32.gmra.mrb[0].mxu0 %v569
        %v902 = vpop.f32.mrb[0].mxu0
        %v903 = vadd.f32 0.0, %v902
        %v904 = vpop.f32.mrb[0].mxu0
        %905 = vmatprep.mubr.f32.mxu0 0.0
        %906 = vmatmul.mubr.f32.gmra.mrb[0].mxu0 %v572
        %v907 = vpop.f32.mrb[0].mxu0
        %v908 = vadd.f32 0.0, %v907
        %v909 = vpop.f32.mrb[0].mxu0
        %910 = vdwg.mxu0
        %v911 = vmul.f32 %v893, %v368
        %v912 = vmul.f32 %v898, %v369
        %v913 = vmul.f32 %v903, %v370
        %v914 = vmul.f32 %v908, %v371
        %v915 = vsel %vm561, %v911, 0.0
        %916 = vadd.xlane.f32.xlu0 %v915
        %v917 = vpop.xlane.xlu0 %916
        %v918 = vsel %vm561, %v912, 0.0
        %919 = vadd.xlane.f32.xlu0 %v918
        %v920 = vpop.xlane.xlu0 %919
        %v921 = vsel %vm561, %v913, 0.0
        %922 = vadd.xlane.f32.xlu0 %v921
        %v923 = vpop.xlane.xlu0 %922
        %v924 = vsel %vm561, %v914, 0.0
        %925 = vadd.xlane.f32.xlu0 %v924
        %v926 = vpop.xlane.xlu0 %925
        %v927 = vmul.f32 %v917, 0.0009765625
        %v928 = vmul.f32 %v920, 0.0009765625
        %v929 = vmul.f32 %v923, 0.0009765625
        %v930 = vmul.f32 %v926, 0.0009765625
        %v931 = vmul.f32 %v645, %v645
        %v932 = vmul.f32 %v650, %v650
        %v933 = vmul.f32 %v655, %v655
        %v934 = vmul.f32 %v660, %v660
        %v935 = vsub.f32 %v927, %v931
        %v936 = vsub.f32 %v928, %v932
        %v937 = vsub.f32 %v929, %v933
        %v938 = vsub.f32 %v930, %v934
        %v939 = vmax.f32 %v935, 0.0
        %v940 = vmax.f32 %v936, 0.0
        %v941 = vmax.f32 %v937, 0.0
        %v942 = vmax.f32 %v938, 0.0
        %v943 = vld [vmem:[%s2] sm:$0xff]
        %v944 = vld [vmem:[%s2 + $0x8] sm:$0xff]
        %v945 = vld [vmem:[%s2 + $0x10] sm:$0xff]
        %v946 = vld [vmem:[%s2 + $0x18] sm:$0xff]
        %v947 = vadd.f32 %v939, 1e-05
        %v948 = vadd.f32 %v940, 1e-05
        %v949 = vadd.f32 %v941, 1e-05
        %v950 = vadd.f32 %v942, 1e-05
        %v951 = vrsqrt.pop %v947
        %v952 = vrsqrt.pop %v948
        %v953 = vrsqrt.pop %v949
        %v954 = vrsqrt.pop %v950
        %v955 = vmul.f32 %v943, %v951
        %v956 = vmul.f32 %v944, %v952
        %v957 = vmul.f32 %v945, %v953
        %v958 = vmul.f32 %v946, %v954
        %v959 = vld [vmem:[%s3] sm:$0xff]
        %v960 = vld [vmem:[%s3 + $0x8] sm:$0xff]
        %v961 = vld [vmem:[%s3 + $0x10] sm:$0xff]
        %v962 = vld [vmem:[%s3 + $0x18] sm:$0xff]
        %v963 = vmul.f32 %v645, %v955
        %v964 = vmul.f32 %v650, %v956
        %v965 = vmul.f32 %v655, %v957
        %v966 = vmul.f32 %v660, %v958
        %v967 = vsub.f32 %v959, %v963
        %v968 = vsub.f32 %v960, %v964
        %v969 = vsub.f32 %v961, %v965
        %v970 = vsub.f32 %v962, %v966
        %v975 = vunpack.c.l.b16 %v364
        %v976 = vunpack.c.l.b16 %v365
        %v977 = vunpack.c.l.b16 %v366
        %v978 = vunpack.c.l.b16 %v367
        %v979 = vpack.c.b16 %v976, %v975
        %v980 = vpack.c.b16 %v978, %v977
        %v982 = vsel %vm561, %v979, 0
        %v985 = vsel %vm561, %v980, 0
        %vm987 = vcmask 1042432
        %vm988 = vcmask 1043456
        %v989 = vsel %vm987, 4294967295, 65535
        %v990 = vsel %vm988, %v989, 0
        %v992 = vand.u32 %v384, %v990
        %v995 = vand.u32 %v385, %v990
        %v998 = vand.u32 %v386, %v990
        %v1001 = vand.u32 %v387, %v990
        %v1004 = vand.u32 %v388, %v990
        %v1007 = vand.u32 %v389, %v990
        %v1010 = vand.u32 %v390, %v990
        %v1013 = vand.u32 %v391, %v990
        %1015 = vmatprep.subr.bf16.mxu0 %v995
        %1016 = vmatpush1.bf16.msra.mxu0 %v992
        %1017 = vmatprep.subr.bf16.mxu0 0
        %1018 = vmatpush1.bf16.msra.mxu0 0
        %1019 = vmatprep.subr.bf16.mxu0 0
        %1020 = vmatpush1.bf16.msra.mxu0 0
        %1021 = vmatprep.subr.bf16.mxu0 0
        %1022 = vmatpush1.bf16.msra.mxu0 0
        %1023 = vmatprep.subr.bf16.mxu0 0
        %1024 = vmatpush1.bf16.msra.mxu0 0
        %1025 = vmatprep.subr.bf16.mxu0 0
        %1026 = vmatpush1.bf16.msra.mxu0 0
        %1027 = vmatprep.subr.bf16.mxu0 0
        %1028 = vmatpush1.bf16.msra.mxu0 0
        %1029 = vmatprep.subr.bf16.mxu0 0
        %1030 = vmatpush1.bf16.msra.mxu0 0
        %1031 = vmatprep.subr.bf16.mxu0 0
        %1032 = vmatpush1.bf16.msra.mxu0 0
        %1033 = vmatprep.subr.bf16.mxu0 0
        %1034 = vmatpush1.bf16.msra.mxu0 0
        %1035 = vmatprep.subr.bf16.mxu0 0
        %1036 = vmatpush1.bf16.msra.mxu0 0
        %1037 = vmatprep.subr.bf16.mxu0 0
        %1038 = vmatpush1.bf16.msra.mxu0 0
        %1039 = vmatprep.subr.bf16.mxu0 0
        %1040 = vmatpush1.bf16.msra.mxu0 0
        %1041 = vmatprep.subr.bf16.mxu0 0
        %1042 = vmatpush1.bf16.msra.mxu0 0
        %1043 = vmatprep.subr.bf16.mxu0 0
        %1044 = vmatpush1.bf16.msra.mxu0 0
        %1045 = vmatprep.subr.bf16.mxu0 0
        %1046 = vmatpush1.bf16.msra.mxu0 0
        %1047 = vmatprep.mubr.bf16.mxu0 0
        %1048 = vmatmul.mubr.bf16.gmra.mrb[0].mxu0 %v982
        %v1049 = vpop.f32.mrb[0].mxu0
        %v1050 = vadd.f32 0.0, %v1049
        %v1051 = vpop.f32.mrb[0].mxu0
        %v1052 = vadd.f32 0.0, %v1051
        %v1053 = vpop.f32.mrb[0].mxu0
        %v1054 = vadd.f32 0.0, %v1053
        %v1055 = vpop.f32.mrb[0].mxu0
        %v1056 = vadd.f32 0.0, %v1055
        %1057 = vmatprep.mubr.bf16.mxu0 0
        %1058 = vmatmul.mubr.bf16.gmra.mrb[0].mxu0 %v985
        %v1059 = vpop.f32.mrb[0].mxu0
        %v1060 = vadd.f32 0.0, %v1059
        %v1061 = vpop.f32.mrb[0].mxu0
        %v1062 = vadd.f32 0.0, %v1061
        %v1063 = vpop.f32.mrb[0].mxu0
        %v1064 = vadd.f32 0.0, %v1063
        %v1065 = vpop.f32.mrb[0].mxu0
        %v1066 = vadd.f32 0.0, %v1065
        %1067 = vdwg.mxu0
        %1068 = vmatprep.subr.bf16.mxu0 %v1001
        %1069 = vmatpush1.bf16.msra.mxu0 %v998
        %1070 = vmatprep.subr.bf16.mxu0 0
        %1071 = vmatpush1.bf16.msra.mxu0 0
        %1072 = vmatprep.subr.bf16.mxu0 0
        %1073 = vmatpush1.bf16.msra.mxu0 0
        %1074 = vmatprep.subr.bf16.mxu0 0
        %1075 = vmatpush1.bf16.msra.mxu0 0
        %1076 = vmatprep.subr.bf16.mxu0 0
        %1077 = vmatpush1.bf16.msra.mxu0 0
        %1078 = vmatprep.subr.bf16.mxu0 0
        %1079 = vmatpush1.bf16.msra.mxu0 0
        %1080 = vmatprep.subr.bf16.mxu0 0
        %1081 = vmatpush1.bf16.msra.mxu0 0
        %1082 = vmatprep.subr.bf16.mxu0 0
        %1083 = vmatpush1.bf16.msra.mxu0 0
        %1084 = vmatprep.subr.bf16.mxu0 0
        %1085 = vmatpush1.bf16.msra.mxu0 0
        %1086 = vmatprep.subr.bf16.mxu0 0
        %1087 = vmatpush1.bf16.msra.mxu0 0
        %1088 = vmatprep.subr.bf16.mxu0 0
        %1089 = vmatpush1.bf16.msra.mxu0 0
        %1090 = vmatprep.subr.bf16.mxu0 0
        %1091 = vmatpush1.bf16.msra.mxu0 0
        %1092 = vmatprep.subr.bf16.mxu0 0
        %1093 = vmatpush1.bf16.msra.mxu0 0
        %1094 = vmatprep.subr.bf16.mxu0 0
        %1095 = vmatpush1.bf16.msra.mxu0 0
        %1096 = vmatprep.subr.bf16.mxu0 0
        %1097 = vmatpush1.bf16.msra.mxu0 0
        %1098 = vmatprep.subr.bf16.mxu0 0
        %1099 = vmatpush1.bf16.msra.mxu0 0
        %1100 = vmatprep.mubr.bf16.mxu0 0
        %1101 = vmatmul.mubr.bf16.gmra.mrb[0].mxu0 %v982
        %v1102 = vpop.f32.mrb[0].mxu0
        %v1103 = vadd.f32 0.0, %v1102
        %v1104 = vpop.f32.mrb[0].mxu0
        %v1105 = vadd.f32 0.0, %v1104
        %v1106 = vpop.f32.mrb[0].mxu0
        %v1107 = vadd.f32 0.0, %v1106
        %v1108 = vpop.f32.mrb[0].mxu0
        %v1109 = vadd.f32 0.0, %v1108
        %1110 = vmatprep.mubr.bf16.mxu0 0
        %1111 = vmatmul.mubr.bf16.gmra.mrb[0].mxu0 %v985
        %v1112 = vpop.f32.mrb[0].mxu0
        %v1113 = vadd.f32 0.0, %v1112
        %v1114 = vpop.f32.mrb[0].mxu0
        %v1115 = vadd.f32 0.0, %v1114
        %v1116 = vpop.f32.mrb[0].mxu0
        %v1117 = vadd.f32 0.0, %v1116
        %v1118 = vpop.f32.mrb[0].mxu0
        %v1119 = vadd.f32 0.0, %v1118
        %1120 = vdwg.mxu0
        %1121 = vmatprep.subr.bf16.mxu0 %v1007
        %1122 = vmatpush1.bf16.msra.mxu0 %v1004
        %1123 = vmatprep.subr.bf16.mxu0 0
        %1124 = vmatpush1.bf16.msra.mxu0 0
        %1125 = vmatprep.subr.bf16.mxu0 0
        %1126 = vmatpush1.bf16.msra.mxu0 0
        %1127 = vmatprep.subr.bf16.mxu0 0
        %1128 = vmatpush1.bf16.msra.mxu0 0
        %1129 = vmatprep.subr.bf16.mxu0 0
        %1130 = vmatpush1.bf16.msra.mxu0 0
        %1131 = vmatprep.subr.bf16.mxu0 0
        %1132 = vmatpush1.bf16.msra.mxu0 0
        %1133 = vmatprep.subr.bf16.mxu0 0
        %1134 = vmatpush1.bf16.msra.mxu0 0
        %1135 = vmatprep.subr.bf16.mxu0 0
        %1136 = vmatpush1.bf16.msra.mxu0 0
        %1137 = vmatprep.subr.bf16.mxu0 0
        %1138 = vmatpush1.bf16.msra.mxu0 0
        %1139 = vmatprep.subr.bf16.mxu0 0
        %1140 = vmatpush1.bf16.msra.mxu0 0
        %1141 = vmatprep.subr.bf16.mxu0 0
        %1142 = vmatpush1.bf16.msra.mxu0 0
        %1143 = vmatprep.subr.bf16.mxu0 0
        %1144 = vmatpush1.bf16.msra.mxu0 0
        %1145 = vmatprep.subr.bf16.mxu0 0
        %1146 = vmatpush1.bf16.msra.mxu0 0
        %1147 = vmatprep.subr.bf16.mxu0 0
        %1148 = vmatpush1.bf16.msra.mxu0 0
        %1149 = vmatprep.subr.bf16.mxu0 0
        %1150 = vmatpush1.bf16.msra.mxu0 0
        %1151 = vmatprep.subr.bf16.mxu0 0
        %1152 = vmatpush1.bf16.msra.mxu0 0
        %1153 = vmatprep.mubr.bf16.mxu0 0
        %1154 = vmatmul.mubr.bf16.gmra.mrb[0].mxu0 %v982
        %v1155 = vpop.f32.mrb[0].mxu0
        %v1156 = vadd.f32 0.0, %v1155
        %v1157 = vpop.f32.mrb[0].mxu0
        %v1158 = vadd.f32 0.0, %v1157
        %v1159 = vpop.f32.mrb[0].mxu0
        %v1160 = vadd.f32 0.0, %v1159
        %v1161 = vpop.f32.mrb[0].mxu0
        %v1162 = vadd.f32 0.0, %v1161
        %1163 = vmatprep.mubr.bf16.mxu0 0
        %1164 = vmatmul.mubr.bf16.gmra.mrb[0].mxu0 %v985
        %v1165 = vpop.f32.mrb[0].mxu0
        %v1166 = vadd.f32 0.0, %v1165
        %v1167 = vpop.f32.mrb[0].mxu0
        %v1168 = vadd.f32 0.0, %v1167
        %v1169 = vpop.f32.mrb[0].mxu0
        %v1170 = vadd.f32 0.0, %v1169
        %v1171 = vpop.f32.mrb[0].mxu0
        %v1172 = vadd.f32 0.0, %v1171
        %1173 = vdwg.mxu0
        %1174 = vmatprep.subr.bf16.mxu0 %v1013
        %1175 = vmatpush1.bf16.msra.mxu0 %v1010
        %1176 = vmatprep.subr.bf16.mxu0 0
        %1177 = vmatpush1.bf16.msra.mxu0 0
        %1178 = vmatprep.subr.bf16.mxu0 0
        %1179 = vmatpush1.bf16.msra.mxu0 0
        %1180 = vmatprep.subr.bf16.mxu0 0
        %1181 = vmatpush1.bf16.msra.mxu0 0
        %1182 = vmatprep.subr.bf16.mxu0 0
        %1183 = vmatpush1.bf16.msra.mxu0 0
        %1184 = vmatprep.subr.bf16.mxu0 0
        %1185 = vmatpush1.bf16.msra.mxu0 0
        %1186 = vmatprep.subr.bf16.mxu0 0
        %1187 = vmatpush1.bf16.msra.mxu0 0
        %1188 = vmatprep.subr.bf16.mxu0 0
        %1189 = vmatpush1.bf16.msra.mxu0 0
        %1190 = vmatprep.subr.bf16.mxu0 0
        %1191 = vmatpush1.bf16.msra.mxu0 0
        %1192 = vmatprep.subr.bf16.mxu0 0
        %1193 = vmatpush1.bf16.msra.mxu0 0
        %1194 = vmatprep.subr.bf16.mxu0 0
        %1195 = vmatpush1.bf16.msra.mxu0 0
        %1196 = vmatprep.subr.bf16.mxu0 0
        %1197 = vmatpush1.bf16.msra.mxu0 0
        %1198 = vmatprep.subr.bf16.mxu0 0
        %1199 = vmatpush1.bf16.msra.mxu0 0
        %1200 = vmatprep.subr.bf16.mxu0 0
        %1201 = vmatpush1.bf16.msra.mxu0 0
        %1202 = vmatprep.subr.bf16.mxu0 0
        %1203 = vmatpush1.bf16.msra.mxu0 0
        %1204 = vmatprep.subr.bf16.mxu0 0
        %1205 = vmatpush1.bf16.msra.mxu0 0
        %1206 = vmatprep.mubr.bf16.mxu0 0
        %1207 = vmatmul.mubr.bf16.gmra.mrb[0].mxu0 %v982
        %v1208 = vpop.f32.mrb[0].mxu0
        %v1209 = vadd.f32 0.0, %v1208
        %v1210 = vpop.f32.mrb[0].mxu0
        %v1211 = vadd.f32 0.0, %v1210
        %v1212 = vpop.f32.mrb[0].mxu0
        %v1213 = vadd.f32 0.0, %v1212
        %v1214 = vpop.f32.mrb[0].mxu0
        %v1215 = vadd.f32 0.0, %v1214
        %1216 = vmatprep.mubr.bf16.mxu0 0
        %1217 = vmatmul.mubr.bf16.gmra.mrb[0].mxu0 %v985
        %v1218 = vpop.f32.mrb[0].mxu0
        %v1219 = vadd.f32 0.0, %v1218
        %v1220 = vpop.f32.mrb[0].mxu0
        %v1221 = vadd.f32 0.0, %v1220
        %v1222 = vpop.f32.mrb[0].mxu0
        %v1223 = vadd.f32 0.0, %v1222
        %v1224 = vpop.f32.mrb[0].mxu0
        %v1225 = vadd.f32 0.0, %v1224
        %1226 = vdwg.mxu0
        %1228 = vset.pattern.permute.xlu0 0
        %1229 = vperm.xlu0 %1228, %v955
        %v1230 = vpop.permute.xlu0 %1229
        %1233 = vset.pattern.permute.xlu0 0
        %1234 = vperm.xlu0 %1233, %v956
        %v1235 = vpop.permute.xlu0 %1234
        %1238 = vset.pattern.permute.xlu0 0
        %1239 = vperm.xlu0 %1238, %v957
        %v1240 = vpop.permute.xlu0 %1239
        %1243 = vset.pattern.permute.xlu0 0
        %1244 = vperm.xlu0 %1243, %v958
        %v1245 = vpop.permute.xlu0 %1244
        %v1247 = vmul.f32 %v1050, %v1230
        %v1248 = vmul.f32 %v1052, %v1230
        %v1249 = vmul.f32 %v1103, %v1230
        %v1250 = vmul.f32 %v1105, %v1230
        %v1251 = vmul.f32 %v1156, %v1230
        %v1252 = vmul.f32 %v1158, %v1230
        %v1253 = vmul.f32 %v1209, %v1230
        %v1254 = vmul.f32 %v1211, %v1230
        %v1255 = vmul.f32 %v1054, %v1235
        %v1256 = vmul.f32 %v1056, %v1235
        %v1257 = vmul.f32 %v1107, %v1235
        %v1258 = vmul.f32 %v1109, %v1235
        %v1259 = vmul.f32 %v1160, %v1235
        %v1260 = vmul.f32 %v1162, %v1235
        %v1261 = vmul.f32 %v1213, %v1235
        %v1262 = vmul.f32 %v1215, %v1235
        %v1263 = vmul.f32 %v1060, %v1240
        %v1264 = vmul.f32 %v1062, %v1240
        %v1265 = vmul.f32 %v1113, %v1240
        %v1266 = vmul.f32 %v1115, %v1240
        %v1267 = vmul.f32 %v1166, %v1240
        %v1268 = vmul.f32 %v1168, %v1240
        %v1269 = vmul.f32 %v1219, %v1240
        %v1270 = vmul.f32 %v1221, %v1240
        %v1271 = vmul.f32 %v1064, %v1245
        %v1272 = vmul.f32 %v1066, %v1245
        %v1273 = vmul.f32 %v1117, %v1245
        %v1274 = vmul.f32 %v1119, %v1245
        %v1275 = vmul.f32 %v1170, %v1245
        %v1276 = vmul.f32 %v1172, %v1245
        %v1277 = vmul.f32 %v1223, %v1245
        %v1278 = vmul.f32 %v1225, %v1245
        %1280 = vset.pattern.permute.xlu0 0
        %1281 = vperm.xlu0 %1280, %v967
        %v1282 = vpop.permute.xlu0 %1281
        %1285 = vset.pattern.permute.xlu0 0
        %1286 = vperm.xlu0 %1285, %v968
        %v1287 = vpop.permute.xlu0 %1286
        %1290 = vset.pattern.permute.xlu0 0
        %1291 = vperm.xlu0 %1290, %v969
        %v1292 = vpop.permute.xlu0 %1291
        %1295 = vset.pattern.permute.xlu0 0
        %1296 = vperm.xlu0 %1295, %v970
        %v1297 = vpop.permute.xlu0 %1296
        %v1299 = vadd.f32 %v1247, %v1282
        %v1300 = vadd.f32 %v1248, %v1282
        %v1301 = vadd.f32 %v1249, %v1282
        %v1302 = vadd.f32 %v1250, %v1282
        %v1303 = vadd.f32 %v1251, %v1282
        %v1304 = vadd.f32 %v1252, %v1282
        %v1305 = vadd.f32 %v1253, %v1282
        %v1306 = vadd.f32 %v1254, %v1282
        %v1307 = vadd.f32 %v1255, %v1287
        %v1308 = vadd.f32 %v1256, %v1287
        %v1309 = vadd.f32 %v1257, %v1287
        %v1310 = vadd.f32 %v1258, %v1287
        %v1311 = vadd.f32 %v1259, %v1287
        %v1312 = vadd.f32 %v1260, %v1287
        %v1313 = vadd.f32 %v1261, %v1287
        %v1314 = vadd.f32 %v1262, %v1287
        %v1315 = vadd.f32 %v1263, %v1292
        %v1316 = vadd.f32 %v1264, %v1292
        %v1317 = vadd.f32 %v1265, %v1292
        %v1318 = vadd.f32 %v1266, %v1292
        %v1319 = vadd.f32 %v1267, %v1292
        %v1320 = vadd.f32 %v1268, %v1292
        %v1321 = vadd.f32 %v1269, %v1292
        %v1322 = vadd.f32 %v1270, %v1292
        %v1323 = vadd.f32 %v1271, %v1297
        %v1324 = vadd.f32 %v1272, %v1297
        %v1325 = vadd.f32 %v1273, %v1297
        %v1326 = vadd.f32 %v1274, %v1297
        %v1327 = vadd.f32 %v1275, %v1297
        %v1328 = vadd.f32 %v1276, %v1297
        %v1329 = vadd.f32 %v1277, %v1297
        %v1330 = vadd.f32 %v1278, %v1297
        %v1331 = vmul.f32 %v1299, 0.1
        %v1332 = vmul.f32 %v1300, 0.1
        %v1333 = vmul.f32 %v1301, 0.1
        %v1334 = vmul.f32 %v1302, 0.1
        %v1335 = vmul.f32 %v1303, 0.1
        %v1336 = vmul.f32 %v1304, 0.1
        %v1337 = vmul.f32 %v1305, 0.1
        %v1338 = vmul.f32 %v1306, 0.1
        %v1339 = vmul.f32 %v1307, 0.1
        %v1340 = vmul.f32 %v1308, 0.1
        %v1341 = vmul.f32 %v1309, 0.1
        %v1342 = vmul.f32 %v1310, 0.1
        %v1343 = vmul.f32 %v1311, 0.1
        %v1344 = vmul.f32 %v1312, 0.1
        %v1345 = vmul.f32 %v1313, 0.1
        %v1346 = vmul.f32 %v1314, 0.1
        %v1347 = vmul.f32 %v1315, 0.1
        %v1348 = vmul.f32 %v1316, 0.1
        %v1349 = vmul.f32 %v1317, 0.1
        %v1350 = vmul.f32 %v1318, 0.1
        %v1351 = vmul.f32 %v1319, 0.1
        %v1352 = vmul.f32 %v1320, 0.1
        %v1353 = vmul.f32 %v1321, 0.1
        %v1354 = vmul.f32 %v1322, 0.1
        %v1355 = vmul.f32 %v1323, 0.1
        %v1356 = vmul.f32 %v1324, 0.1
        %v1357 = vmul.f32 %v1325, 0.1
        %v1358 = vmul.f32 %v1326, 0.1
        %v1359 = vmul.f32 %v1327, 0.1
        %v1360 = vmul.f32 %v1328, 0.1
        %v1361 = vmul.f32 %v1329, 0.1
        %v1362 = vmul.f32 %v1330, 0.1
        %v1363 = vmax.f32 %v1299, %v1331
        %v1364 = vmax.f32 %v1300, %v1332
        %v1365 = vmax.f32 %v1301, %v1333
        %v1366 = vmax.f32 %v1302, %v1334
        %v1367 = vmax.f32 %v1303, %v1335
        %v1368 = vmax.f32 %v1304, %v1336
        %v1369 = vmax.f32 %v1305, %v1337
        %v1370 = vmax.f32 %v1306, %v1338
        %v1371 = vmax.f32 %v1307, %v1339
        %v1372 = vmax.f32 %v1308, %v1340
        %v1373 = vmax.f32 %v1309, %v1341
        %v1374 = vmax.f32 %v1310, %v1342
        %v1375 = vmax.f32 %v1311, %v1343
        %v1376 = vmax.f32 %v1312, %v1344
        %v1377 = vmax.f32 %v1313, %v1345
        %v1378 = vmax.f32 %v1314, %v1346
        %v1379 = vmax.f32 %v1315, %v1347
        %v1380 = vmax.f32 %v1316, %v1348
        %v1381 = vmax.f32 %v1317, %v1349
        %v1382 = vmax.f32 %v1318, %v1350
        %v1383 = vmax.f32 %v1319, %v1351
        %v1384 = vmax.f32 %v1320, %v1352
        %v1385 = vmax.f32 %v1321, %v1353
        %v1386 = vmax.f32 %v1322, %v1354
        %v1387 = vmax.f32 %v1323, %v1355
        %v1388 = vmax.f32 %v1324, %v1356
        %v1389 = vmax.f32 %v1325, %v1357
        %v1390 = vmax.f32 %v1326, %v1358
        %v1391 = vmax.f32 %v1327, %v1359
        %v1392 = vmax.f32 %v1328, %v1360
        %v1393 = vmax.f32 %v1329, %v1361
        %v1394 = vmax.f32 %v1330, %v1362
        %v1395 = vpack.c.bf16 %v1371, %v1363
        %v1396 = vpack.c.bf16 %v1372, %v1364
        %v1397 = vpack.c.bf16 %v1373, %v1365
        %v1398 = vpack.c.bf16 %v1374, %v1366
        %v1399 = vpack.c.bf16 %v1375, %v1367
        %v1400 = vpack.c.bf16 %v1376, %v1368
        %v1401 = vpack.c.bf16 %v1377, %v1369
        %v1402 = vpack.c.bf16 %v1378, %v1370
        %v1403 = vpack.c.bf16 %v1387, %v1379
        %v1404 = vpack.c.bf16 %v1388, %v1380
        %v1405 = vpack.c.bf16 %v1389, %v1381
        %v1406 = vpack.c.bf16 %v1390, %v1382
        %v1407 = vpack.c.bf16 %v1391, %v1383
        %v1408 = vpack.c.bf16 %v1392, %v1384
        %v1409 = vpack.c.bf16 %v1393, %v1385
        %v1410 = vpack.c.bf16 %v1394, %v1386
        %v1411 = vld [vmem:[%s4] sm:$0xf]
        %v1412 = vld [vmem:[%s4 + $0x4] sm:$0xf]
        %v1413 = vld [vmem:[%s4 + $0x8] sm:$0xf]
        %v1414 = vld [vmem:[%s4 + $0xc] sm:$0xf]
        %v1415 = vunpack.c.l.bf16 %v1411
        %v1416 = vunpack.c.l.bf16 %v1412
        %v1417 = vunpack.c.l.bf16 %v1413
        %v1418 = vunpack.c.l.bf16 %v1414
        %1419 = vmatprep.subr.bf16.mxu0 0
        %1420 = vmatpush1.bf16.msra.mxu0 1065369472
        %1421 = vmatprep.subr.bf16.mxu0 0
        %1422 = vmatpush1.bf16.msra.mxu0 1065369472
        %1423 = vmatprep.subr.bf16.mxu0 0
        %1424 = vmatpush1.bf16.msra.mxu0 1065369472
        %1425 = vmatprep.subr.bf16.mxu0 0
        %1426 = vmatpush1.bf16.msra.mxu0 1065369472
        %1427 = vmatprep.subr.bf16.mxu0 0
        %1428 = vmatpush1.bf16.msra.mxu0 1065369472
        %1429 = vmatprep.subr.bf16.mxu0 0
        %1430 = vmatpush1.bf16.msra.mxu0 1065369472
        %1431 = vmatprep.subr.bf16.mxu0 0
        %1432 = vmatpush1.bf16.msra.mxu0 1065369472
        %1433 = vmatprep.subr.bf16.mxu0 0
        %1434 = vmatpush1.bf16.msra.mxu0 1065369472
        %1435 = vmatprep.subr.bf16.mxu0 0
        %1436 = vmatpush1.bf16.msra.mxu0 1065369472
        %1437 = vmatprep.subr.bf16.mxu0 0
        %1438 = vmatpush1.bf16.msra.mxu0 1065369472
        %1439 = vmatprep.subr.bf16.mxu0 0
        %1440 = vmatpush1.bf16.msra.mxu0 1065369472
        %1441 = vmatprep.subr.bf16.mxu0 0
        %1442 = vmatpush1.bf16.msra.mxu0 1065369472
        %1443 = vmatprep.subr.bf16.mxu0 0
        %1444 = vmatpush1.bf16.msra.mxu0 1065369472
        %1445 = vmatprep.subr.bf16.mxu0 0
        %1446 = vmatpush1.bf16.msra.mxu0 1065369472
        %1447 = vmatprep.subr.bf16.mxu0 0
        %1448 = vmatpush1.bf16.msra.mxu0 1065369472
        %1449 = vmatprep.subr.bf16.mxu0 0
        %1450 = vmatpush1.bf16.msra.mxu0 1065369472
        %1451 = vmatprep.mubr.bf16.mxu0 %v1396
        %1452 = vmatmul.mubr.bf16.gmra.mrb[0].mxu0 %v1395
        %v1453 = vpop.f32.mrb[0].mxu0
        %v1454 = vadd.f32 0.0, %v1453
        %v1455 = vpop.f32.mrb[0].mxu0
        %v1456 = vpop.f32.mrb[0].mxu0
        %v1457 = vadd.f32 0.0, %v1456
        %v1458 = vpop.f32.mrb[0].mxu0
        %1459 = vmatprep.mubr.bf16.mxu0 %v1404
        %1460 = vmatmul.mubr.bf16.gmra.mrb[0].mxu0 %v1403
        %v1461 = vpop.f32.mrb[0].mxu0
        %v1462 = vadd.f32 0.0, %v1461
        %v1463 = vpop.f32.mrb[0].mxu0
        %v1464 = vpop.f32.mrb[0].mxu0
        %v1465 = vadd.f32 0.0, %v1464
        %v1466 = vpop.f32.mrb[0].mxu0
        %1467 = vdwg.mxu0
        %1468 = vmatprep.subr.bf16.mxu0 0
        %1469 = vmatpush1.bf16.msra.mxu0 1065369472
        %1470 = vmatprep.subr.bf16.mxu0 0
        %1471 = vmatpush1.bf16.msra.mxu0 1065369472
        %1472 = vmatprep.subr.bf16.mxu0 0
        %1473 = vmatpush1.bf16.msra.mxu0 1065369472
        %1474 = vmatprep.subr.bf16.mxu0 0
        %1475 = vmatpush1.bf16.msra.mxu0 1065369472
        %1476 = vmatprep.subr.bf16.mxu0 0
        %1477 = vmatpush1.bf16.msra.mxu0 1065369472
        %1478 = vmatprep.subr.bf16.mxu0 0
        %1479 = vmatpush1.bf16.msra.mxu0 1065369472
        %1480 = vmatprep.subr.bf16.mxu0 0
        %1481 = vmatpush1.bf16.msra.mxu0 1065369472
        %1482 = vmatprep.subr.bf16.mxu0 0
        %1483 = vmatpush1.bf16.msra.mxu0 1065369472
        %1484 = vmatprep.subr.bf16.mxu0 0
        %1485 = vmatpush1.bf16.msra.mxu0 1065369472
        %1486 = vmatprep.subr.bf16.mxu0 0
        %1487 = vmatpush1.bf16.msra.mxu0 1065369472
        %1488 = vmatprep.subr.bf16.mxu0 0
        %1489 = vmatpush1.bf16.msra.mxu0 1065369472
        %1490 = vmatprep.subr.bf16.mxu0 0
        %1491 = vmatpush1.bf16.msra.mxu0 1065369472
        %1492 = vmatprep.subr.bf16.mxu0 0
        %1493 = vmatpush1.bf16.msra.mxu0 1065369472
        %1494 = vmatprep.subr.bf16.mxu0 0
        %1495 = vmatpush1.bf16.msra.mxu0 1065369472
        %1496 = vmatprep.subr.bf16.mxu0 0
        %1497 = vmatpush1.bf16.msra.mxu0 1065369472
        %1498 = vmatprep.subr.bf16.mxu0 0
        %1499 = vmatpush1.bf16.msra.mxu0 1065369472
        %1500 = vmatprep.mubr.bf16.mxu0 %v1398
        %1501 = vmatmul.mubr.bf16.gmra.mrb[0].mxu0 %v1397
        %v1502 = vpop.f32.mrb[0].mxu0
        %v1503 = vadd.f32 %v1454, %v1502
        %v1504 = vpop.f32.mrb[0].mxu0
        %v1505 = vpop.f32.mrb[0].mxu0
        %v1506 = vadd.f32 %v1457, %v1505
        %v1507 = vpop.f32.mrb[0].mxu0
        %1508 = vmatprep.mubr.bf16.mxu0 %v1406
        %1509 = vmatmul.mubr.bf16.gmra.mrb[0].mxu0 %v1405
        %v1510 = vpop.f32.mrb[0].mxu0
        %v1511 = vadd.f32 %v1462, %v1510
        %v1512 = vpop.f32.mrb[0].mxu0
        %v1513 = vpop.f32.mrb[0].mxu0
        %v1514 = vadd.f32 %v1465, %v1513
        %v1515 = vpop.f32.mrb[0].mxu0
        %1516 = vdwg.mxu0
        %1517 = vmatprep.subr.bf16.mxu0 0
        %1518 = vmatpush1.bf16.msra.mxu0 1065369472
        %1519 = vmatprep.subr.bf16.mxu0 0
        %1520 = vmatpush1.bf16.msra.mxu0 1065369472
        %1521 = vmatprep.subr.bf16.mxu0 0
        %1522 = vmatpush1.bf16.msra.mxu0 1065369472
        %1523 = vmatprep.subr.bf16.mxu0 0
        %1524 = vmatpush1.bf16.msra.mxu0 1065369472
        %1525 = vmatprep.subr.bf16.mxu0 0
        %1526 = vmatpush1.bf16.msra.mxu0 1065369472
        %1527 = vmatprep.subr.bf16.mxu0 0
        %1528 = vmatpush1.bf16.msra.mxu0 1065369472
        %1529 = vmatprep.subr.bf16.mxu0 0
        %1530 = vmatpush1.bf16.msra.mxu0 1065369472
        %1531 = vmatprep.subr.bf16.mxu0 0
        %1532 = vmatpush1.bf16.msra.mxu0 1065369472
        %1533 = vmatprep.subr.bf16.mxu0 0
        %1534 = vmatpush1.bf16.msra.mxu0 1065369472
        %1535 = vmatprep.subr.bf16.mxu0 0
        %1536 = vmatpush1.bf16.msra.mxu0 1065369472
        %1537 = vmatprep.subr.bf16.mxu0 0
        %1538 = vmatpush1.bf16.msra.mxu0 1065369472
        %1539 = vmatprep.subr.bf16.mxu0 0
        %1540 = vmatpush1.bf16.msra.mxu0 1065369472
        %1541 = vmatprep.subr.bf16.mxu0 0
        %1542 = vmatpush1.bf16.msra.mxu0 1065369472
        %1543 = vmatprep.subr.bf16.mxu0 0
        %1544 = vmatpush1.bf16.msra.mxu0 1065369472
        %1545 = vmatprep.subr.bf16.mxu0 0
        %1546 = vmatpush1.bf16.msra.mxu0 1065369472
        %1547 = vmatprep.subr.bf16.mxu0 0
        %1548 = vmatpush1.bf16.msra.mxu0 1065369472
        %1549 = vmatprep.mubr.bf16.mxu0 %v1400
        %1550 = vmatmul.mubr.bf16.gmra.mrb[0].mxu0 %v1399
        %v1551 = vpop.f32.mrb[0].mxu0
        %v1552 = vadd.f32 %v1503, %v1551
        %v1553 = vpop.f32.mrb[0].mxu0
        %v1554 = vpop.f32.mrb[0].mxu0
        %v1555 = vadd.f32 %v1506, %v1554
        %v1556 = vpop.f32.mrb[0].mxu0
        %1557 = vmatprep.mubr.bf16.mxu0 %v1408
        %1558 = vmatmul.mubr.bf16.gmra.mrb[0].mxu0 %v1407
        %v1559 = vpop.f32.mrb[0].mxu0
        %v1560 = vadd.f32 %v1511, %v1559
        %v1561 = vpop.f32.mrb[0].mxu0
        %v1562 = vpop.f32.mrb[0].mxu0
        %v1563 = vadd.f32 %v1514, %v1562
        %v1564 = vpop.f32.mrb[0].mxu0
        %1565 = vdwg.mxu0
        %1566 = vmatprep.subr.bf16.mxu0 0
        %1567 = vmatpush1.bf16.msra.mxu0 1065369472
        %1568 = vmatprep.subr.bf16.mxu0 0
        %1569 = vmatpush1.bf16.msra.mxu0 1065369472
        %1570 = vmatprep.subr.bf16.mxu0 0
        %1571 = vmatpush1.bf16.msra.mxu0 1065369472
        %1572 = vmatprep.subr.bf16.mxu0 0
        %1573 = vmatpush1.bf16.msra.mxu0 1065369472
        %1574 = vmatprep.subr.bf16.mxu0 0
        %1575 = vmatpush1.bf16.msra.mxu0 1065369472
        %1576 = vmatprep.subr.bf16.mxu0 0
        %1577 = vmatpush1.bf16.msra.mxu0 1065369472
        %1578 = vmatprep.subr.bf16.mxu0 0
        %1579 = vmatpush1.bf16.msra.mxu0 1065369472
        %1580 = vmatprep.subr.bf16.mxu0 0
        %1581 = vmatpush1.bf16.msra.mxu0 1065369472
        %1582 = vmatprep.subr.bf16.mxu0 0
        %1583 = vmatpush1.bf16.msra.mxu0 1065369472
        %1584 = vmatprep.subr.bf16.mxu0 0
        %1585 = vmatpush1.bf16.msra.mxu0 1065369472
        %1586 = vmatprep.subr.bf16.mxu0 0
        %1587 = vmatpush1.bf16.msra.mxu0 1065369472
        %1588 = vmatprep.subr.bf16.mxu0 0
        %1589 = vmatpush1.bf16.msra.mxu0 1065369472
        %1590 = vmatprep.subr.bf16.mxu0 0
        %1591 = vmatpush1.bf16.msra.mxu0 1065369472
        %1592 = vmatprep.subr.bf16.mxu0 0
        %1593 = vmatpush1.bf16.msra.mxu0 1065369472
        %1594 = vmatprep.subr.bf16.mxu0 0
        %1595 = vmatpush1.bf16.msra.mxu0 1065369472
        %1596 = vmatprep.subr.bf16.mxu0 0
        %1597 = vmatpush1.bf16.msra.mxu0 1065369472
        %1598 = vmatprep.mubr.bf16.mxu0 %v1402
        %1599 = vmatmul.mubr.bf16.gmra.mrb[0].mxu0 %v1401
        %v1600 = vpop.f32.mrb[0].mxu0
        %v1601 = vadd.f32 %v1552, %v1600
        %v1602 = vpop.f32.mrb[0].mxu0
        %v1603 = vpop.f32.mrb[0].mxu0
        %v1604 = vadd.f32 %v1555, %v1603
        %v1605 = vpop.f32.mrb[0].mxu0
        %1606 = vmatprep.mubr.bf16.mxu0 %v1410
        %1607 = vmatmul.mubr.bf16.gmra.mrb[0].mxu0 %v1409
        %v1608 = vpop.f32.mrb[0].mxu0
        %v1609 = vadd.f32 %v1560, %v1608
        %v1610 = vpop.f32.mrb[0].mxu0
        %v1611 = vpop.f32.mrb[0].mxu0
        %v1612 = vadd.f32 %v1563, %v1611
        %v1613 = vpop.f32.mrb[0].mxu0
        %1614 = vdwg.mxu0
        %v1615 = vmul.f32 %v1601, 0.0009765625
        %v1616 = vmul.f32 %v1604, 0.0009765625
        %v1617 = vmul.f32 %v1609, 0.0009765625
        %v1618 = vmul.f32 %v1612, 0.0009765625
        %vm1619 = vcmask 261120
        %v1621 = vsel %vm1619, %v1415, 0
        %v1624 = vsel %vm1619, %v1416, 0
        %v1627 = vsel %vm1619, %v1417, 0
        %v1630 = vsel %vm1619, %v1418, 0
        %1632 = vmatprep.subr.mxu0 0.0
        %1633 = vmatpush1.msra.mxu0 %v1615
        %1634 = vmatprep.subr.mxu0 0.0
        %1635 = vmatpush1.msra.mxu0 %v1616
        %1636 = vmatprep.subr.mxu0 0.0
        %1637 = vmatpush1.msra.mxu0 %v1617
        %1638 = vmatprep.subr.mxu0 0.0
        %1639 = vmatpush1.msra.mxu0 %v1618
        %1640 = vmatprep.subr.mxu0 0.0
        %1641 = vmatpush1.msra.mxu0 0.0
        %1642 = vmatprep.subr.mxu0 0.0
        %1643 = vmatpush1.msra.mxu0 0.0
        %1644 = vmatprep.subr.mxu0 0.0
        %1645 = vmatpush1.msra.mxu0 0.0
        %1646 = vmatprep.subr.mxu0 0.0
        %1647 = vmatpush1.msra.mxu0 0.0
        %1648 = vmatprep.subr.mxu0 0.0
        %1649 = vmatpush1.msra.mxu0 0.0
        %1650 = vmatprep.subr.mxu0 0.0
        %1651 = vmatpush1.msra.mxu0 0.0
        %1652 = vmatprep.subr.mxu0 0.0
        %1653 = vmatpush1.msra.mxu0 0.0
        %1654 = vmatprep.subr.mxu0 0.0
        %1655 = vmatpush1.msra.mxu0 0.0
        %1656 = vmatprep.subr.mxu0 0.0
        %1657 = vmatpush1.msra.mxu0 0.0
        %1658 = vmatprep.subr.mxu0 0.0
        %1659 = vmatpush1.msra.mxu0 0.0
        %1660 = vmatprep.subr.mxu0 0.0
        %1661 = vmatpush1.msra.mxu0 0.0
        %1662 = vmatprep.subr.mxu0 0.0
        %1663 = vmatpush1.msra.mxu0 0.0
        %1664 = vmatprep.subr.mxu0 0.0
        %1665 = vmatpush1.msra.mxu0 0.0
        %1666 = vmatprep.subr.mxu0 0.0
        %1667 = vmatpush1.msra.mxu0 0.0
        %1668 = vmatprep.subr.mxu0 0.0
        %1669 = vmatpush1.msra.mxu0 0.0
        %1670 = vmatprep.subr.mxu0 0.0
        %1671 = vmatpush1.msra.mxu0 0.0
        %1672 = vmatprep.subr.mxu0 0.0
        %1673 = vmatpush1.msra.mxu0 0.0
        %1674 = vmatprep.subr.mxu0 0.0
        %1675 = vmatpush1.msra.mxu0 0.0
        %1676 = vmatprep.subr.mxu0 0.0
        %1677 = vmatpush1.msra.mxu0 0.0
        %1678 = vmatprep.subr.mxu0 0.0
        %1679 = vmatpush1.msra.mxu0 0.0
        %1680 = vmatprep.subr.mxu0 0.0
        %1681 = vmatpush1.msra.mxu0 0.0
        %1682 = vmatprep.subr.mxu0 0.0
        %1683 = vmatpush1.msra.mxu0 0.0
        %1684 = vmatprep.subr.mxu0 0.0
        %1685 = vmatpush1.msra.mxu0 0.0
        %1686 = vmatprep.subr.mxu0 0.0
        %1687 = vmatpush1.msra.mxu0 0.0
        %1688 = vmatprep.subr.mxu0 0.0
        %1689 = vmatpush1.msra.mxu0 0.0
        %1690 = vmatprep.subr.mxu0 0.0
        %1691 = vmatpush1.msra.mxu0 0.0
        %1692 = vmatprep.subr.mxu0 0.0
        %1693 = vmatpush1.msra.mxu0 0.0
        %1694 = vmatprep.subr.mxu0 0.0
        %1695 = vmatpush1.msra.mxu0 0.0
        %1696 = vmatprep.mubr.f32.mxu0 0.0
        %1697 = vmatmul.mubr.f32.gmra.mrb[0].mxu0 %v1621
        %v1698 = vpop.f32.mrb[0].mxu0
        %v1699 = vadd.f32 0.0, %v1698
        %v1700 = vpop.f32.mrb[0].mxu0
        %1701 = vmatprep.mubr.f32.mxu0 0.0
        %1702 = vmatmul.mubr.f32.gmra.mrb[0].mxu0 %v1624
        %v1703 = vpop.f32.mrb[0].mxu0
        %v1704 = vadd.f32 0.0, %v1703
        %v1705 = vpop.f32.mrb[0].mxu0
        %1706 = vmatprep.mubr.f32.mxu0 0.0
        %1707 = vmatmul.mubr.f32.gmra.mrb[0].mxu0 %v1627
        %v1708 = vpop.f32.mrb[0].mxu0
        %v1709 = vadd.f32 0.0, %v1708
        %v1710 = vpop.f32.mrb[0].mxu0
        %1711 = vmatprep.mubr.f32.mxu0 0.0
        %1712 = vmatmul.mubr.f32.gmra.mrb[0].mxu0 %v1630
        %v1713 = vpop.f32.mrb[0].mxu0
        %v1714 = vadd.f32 0.0, %v1713
        %v1715 = vpop.f32.mrb[0].mxu0
        %1716 = vdwg.mxu0
        %1717 = vmatprep.subr.bf16.mxu0 %v1396
        %1718 = vmatpush1.bf16.xpose.msra.mxu0 %v1395
        %1719 = vmatprep.subr.bf16.mxu0 %v1404
        %1720 = vmatpush1.bf16.xpose.msra.mxu0 %v1403
        %1721 = vmatprep.subr.bf16.mxu0 0
        %1722 = vmatpush1.bf16.xpose.msra.mxu0 0
        %1723 = vmatprep.subr.bf16.mxu0 0
        %1724 = vmatpush1.bf16.xpose.msra.mxu0 0
        %1725 = vmatprep.subr.bf16.mxu0 0
        %1726 = vmatpush1.bf16.xpose.msra.mxu0 0
        %1727 = vmatprep.subr.bf16.mxu0 0
        %1728 = vmatpush1.bf16.xpose.msra.mxu0 0
        %1729 = vmatprep.subr.bf16.mxu0 0
        %1730 = vmatpush1.bf16.xpose.msra.mxu0 0
        %1731 = vmatprep.subr.bf16.mxu0 0
        %1732 = vmatpush1.bf16.xpose.msra.mxu0 0
        %1733 = vmatprep.subr.bf16.mxu0 0
        %1734 = vmatpush1.bf16.xpose.msra.mxu0 0
        %1735 = vmatprep.subr.bf16.mxu0 0
        %1736 = vmatpush1.bf16.xpose.msra.mxu0 0
        %1737 = vmatprep.subr.bf16.mxu0 0
        %1738 = vmatpush1.bf16.xpose.msra.mxu0 0
        %1739 = vmatprep.subr.bf16.mxu0 0
        %1740 = vmatpush1.bf16.xpose.msra.mxu0 0
        %1741 = vmatprep.subr.bf16.mxu0 0
        %1742 = vmatpush1.bf16.xpose.msra.mxu0 0
        %1743 = vmatprep.subr.bf16.mxu0 0
        %1744 = vmatpush1.bf16.xpose.msra.mxu0 0
        %1745 = vmatprep.subr.bf16.mxu0 0
        %1746 = vmatpush1.bf16.xpose.msra.mxu0 0
        %1747 = vmatprep.subr.bf16.mxu0 0
        %1748 = vmatpush1.bf16.xpose.msra.mxu0 0
        %1749 = vmatprep.mubr.bf16.mxu0 %v1396
        %1750 = vmatmul.mubr.bf16.gmra.mrb[0].mxu0 %v1395
        %v1751 = vpop.f32.mrb[0].mxu0
        %v1752 = vadd.f32 0.0, %v1751
        %v1753 = vpop.f32.mrb[0].mxu0
        %v1754 = vpop.f32.mrb[0].mxu0
        %v1755 = vadd.f32 0.0, %v1754
        %v1756 = vpop.f32.mrb[0].mxu0
        %1757 = vmatprep.mubr.bf16.mxu0 %v1404
        %1758 = vmatmul.mubr.bf16.gmra.mrb[0].mxu0 %v1403
        %v1759 = vpop.f32.mrb[0].mxu0
        %v1760 = vadd.f32 0.0, %v1759
        %v1761 = vpop.f32.mrb[0].mxu0
        %v1762 = vpop.f32.mrb[0].mxu0
        %v1763 = vadd.f32 0.0, %v1762
        %v1764 = vpop.f32.mrb[0].mxu0
        %1765 = vdwg.mxu0
        %1766 = vmatprep.subr.bf16.mxu0 %v1398
        %1767 = vmatpush1.bf16.xpose.msra.mxu0 %v1397
        %1768 = vmatprep.subr.bf16.mxu0 %v1406
        %1769 = vmatpush1.bf16.xpose.msra.mxu0 %v1405
        %1770 = vmatprep.subr.bf16.mxu0 0
        %1771 = vmatpush1.bf16.xpose.msra.mxu0 0
        %1772 = vmatprep.subr.bf16.mxu0 0
        %1773 = vmatpush1.bf16.xpose.msra.mxu0 0
        %1774 = vmatprep.subr.bf16.mxu0 0
        %1775 = vmatpush1.bf16.xpose.msra.mxu0 0
        %1776 = vmatprep.subr.bf16.mxu0 0
        %1777 = vmatpush1.bf16.xpose.msra.mxu0 0
        %1778 = vmatprep.subr.bf16.mxu0 0
        %1779 = vmatpush1.bf16.xpose.msra.mxu0 0
        %1780 = vmatprep.subr.bf16.mxu0 0
        %1781 = vmatpush1.bf16.xpose.msra.mxu0 0
        %1782 = vmatprep.subr.bf16.mxu0 0
        %1783 = vmatpush1.bf16.xpose.msra.mxu0 0
        %1784 = vmatprep.subr.bf16.mxu0 0
        %1785 = vmatpush1.bf16.xpose.msra.mxu0 0
        %1786 = vmatprep.subr.bf16.mxu0 0
        %1787 = vmatpush1.bf16.xpose.msra.mxu0 0
        %1788 = vmatprep.subr.bf16.mxu0 0
        %1789 = vmatpush1.bf16.xpose.msra.mxu0 0
        %1790 = vmatprep.subr.bf16.mxu0 0
        %1791 = vmatpush1.bf16.xpose.msra.mxu0 0
        %1792 = vmatprep.subr.bf16.mxu0 0
        %1793 = vmatpush1.bf16.xpose.msra.mxu0 0
        %1794 = vmatprep.subr.bf16.mxu0 0
        %1795 = vmatpush1.bf16.xpose.msra.mxu0 0
        %1796 = vmatprep.subr.bf16.mxu0 0
        %1797 = vmatpush1.bf16.xpose.msra.mxu0 0
        %1798 = vmatprep.mubr.bf16.mxu0 %v1398
        %1799 = vmatmul.mubr.bf16.gmra.mrb[0].mxu0 %v1397
        %v1800 = vpop.f32.mrb[0].mxu0
        %v1801 = vadd.f32 %v1752, %v1800
        %v1802 = vpop.f32.mrb[0].mxu0
        %v1803 = vpop.f32.mrb[0].mxu0
        %v1804 = vadd.f32 %v1755, %v1803
        %v1805 = vpop.f32.mrb[0].mxu0
        %1806 = vmatprep.mubr.bf16.mxu0 %v1406
        %1807 = vmatmul.mubr.bf16.gmra.mrb[0].mxu0 %v1405
        %v1808 = vpop.f32.mrb[0].mxu0
        %v1809 = vadd.f32 %v1760, %v1808
        %v1810 = vpop.f32.mrb[0].mxu0
        %v1811 = vpop.f32.mrb[0].mxu0
        %v1812 = vadd.f32 %v1763, %v1811
        %v1813 = vpop.f32.mrb[0].mxu0
        %1814 = vdwg.mxu0
        %1815 = vmatprep.subr.bf16.mxu0 %v1400
        %1816 = vmatpush1.bf16.xpose.msra.mxu0 %v1399
        %1817 = vmatprep.subr.bf16.mxu0 %v1408
        %1818 = vmatpush1.bf16.xpose.msra.mxu0 %v1407
        %1819 = vmatprep.subr.bf16.mxu0 0
        %1820 = vmatpush1.bf16.xpose.msra.mxu0 0
        %1821 = vmatprep.subr.bf16.mxu0 0
        %1822 = vmatpush1.bf16.xpose.msra.mxu0 0
        %1823 = vmatprep.subr.bf16.mxu0 0
        %1824 = vmatpush1.bf16.xpose.msra.mxu0 0
        %1825 = vmatprep.subr.bf16.mxu0 0
        %1826 = vmatpush1.bf16.xpose.msra.mxu0 0
        %1827 = vmatprep.subr.bf16.mxu0 0
        %1828 = vmatpush1.bf16.xpose.msra.mxu0 0
        %1829 = vmatprep.subr.bf16.mxu0 0
        %1830 = vmatpush1.bf16.xpose.msra.mxu0 0
        %1831 = vmatprep.subr.bf16.mxu0 0
        %1832 = vmatpush1.bf16.xpose.msra.mxu0 0
        %1833 = vmatprep.subr.bf16.mxu0 0
        %1834 = vmatpush1.bf16.xpose.msra.mxu0 0
        %1835 = vmatprep.subr.bf16.mxu0 0
        %1836 = vmatpush1.bf16.xpose.msra.mxu0 0
        %1837 = vmatprep.subr.bf16.mxu0 0
        %1838 = vmatpush1.bf16.xpose.msra.mxu0 0
        %1839 = vmatprep.subr.bf16.mxu0 0
        %1840 = vmatpush1.bf16.xpose.msra.mxu0 0
        %1841 = vmatprep.subr.bf16.mxu0 0
        %1842 = vmatpush1.bf16.xpose.msra.mxu0 0
        %1843 = vmatprep.subr.bf16.mxu0 0
        %1844 = vmatpush1.bf16.xpose.msra.mxu0 0
        %1845 = vmatprep.subr.bf16.mxu0 0
        %1846 = vmatpush1.bf16.xpose.msra.mxu0 0
        %1847 = vmatprep.mubr.bf16.mxu0 %v1400
        %1848 = vmatmul.mubr.bf16.gmra.mrb[0].mxu0 %v1399
        %v1849 = vpop.f32.mrb[0].mxu0
        %v1850 = vadd.f32 %v1801, %v1849
        %v1851 = vpop.f32.mrb[0].mxu0
        %v1852 = vpop.f32.mrb[0].mxu0
        %v1853 = vadd.f32 %v1804, %v1852
        %v1854 = vpop.f32.mrb[0].mxu0
        %1855 = vmatprep.mubr.bf16.mxu0 %v1408
        %1856 = vmatmul.mubr.bf16.gmra.mrb[0].mxu0 %v1407
        %v1857 = vpop.f32.mrb[0].mxu0
        %v1858 = vadd.f32 %v1809, %v1857
        %v1859 = vpop.f32.mrb[0].mxu0
        %v1860 = vpop.f32.mrb[0].mxu0
        %v1861 = vadd.f32 %v1812, %v1860
        %v1862 = vpop.f32.mrb[0].mxu0
        %1863 = vdwg.mxu0
        %1864 = vmatprep.subr.bf16.mxu0 %v1402
        %1865 = vmatpush1.bf16.xpose.msra.mxu0 %v1401
        %1866 = vmatprep.subr.bf16.mxu0 %v1410
        %1867 = vmatpush1.bf16.xpose.msra.mxu0 %v1409
        %1868 = vmatprep.subr.bf16.mxu0 0
        %1869 = vmatpush1.bf16.xpose.msra.mxu0 0
        %1870 = vmatprep.subr.bf16.mxu0 0
        %1871 = vmatpush1.bf16.xpose.msra.mxu0 0
        %1872 = vmatprep.subr.bf16.mxu0 0
        %1873 = vmatpush1.bf16.xpose.msra.mxu0 0
        %1874 = vmatprep.subr.bf16.mxu0 0
        %1875 = vmatpush1.bf16.xpose.msra.mxu0 0
        %1876 = vmatprep.subr.bf16.mxu0 0
        %1877 = vmatpush1.bf16.xpose.msra.mxu0 0
        %1878 = vmatprep.subr.bf16.mxu0 0
        %1879 = vmatpush1.bf16.xpose.msra.mxu0 0
        %1880 = vmatprep.subr.bf16.mxu0 0
        %1881 = vmatpush1.bf16.xpose.msra.mxu0 0
        %1882 = vmatprep.subr.bf16.mxu0 0
        %1883 = vmatpush1.bf16.xpose.msra.mxu0 0
        %1884 = vmatprep.subr.bf16.mxu0 0
        %1885 = vmatpush1.bf16.xpose.msra.mxu0 0
        %1886 = vmatprep.subr.bf16.mxu0 0
        %1887 = vmatpush1.bf16.xpose.msra.mxu0 0
        %1888 = vmatprep.subr.bf16.mxu0 0
        %1889 = vmatpush1.bf16.xpose.msra.mxu0 0
        %1890 = vmatprep.subr.bf16.mxu0 0
        %1891 = vmatpush1.bf16.xpose.msra.mxu0 0
        %1892 = vmatprep.subr.bf16.mxu0 0
        %1893 = vmatpush1.bf16.xpose.msra.mxu0 0
        %1894 = vmatprep.subr.bf16.mxu0 0
        %1895 = vmatpush1.bf16.xpose.msra.mxu0 0
        %1896 = vmatprep.mubr.bf16.mxu0 %v1402
        %1897 = vmatmul.mubr.bf16.gmra.mrb[0].mxu0 %v1401
        %v1898 = vpop.f32.mrb[0].mxu0
        %v1899 = vadd.f32 %v1850, %v1898
        %v1900 = vpop.f32.mrb[0].mxu0
        %v1901 = vpop.f32.mrb[0].mxu0
        %v1902 = vadd.f32 %v1853, %v1901
        %v1903 = vpop.f32.mrb[0].mxu0
        %1904 = vmatprep.mubr.bf16.mxu0 %v1410
        %1905 = vmatmul.mubr.bf16.gmra.mrb[0].mxu0 %v1409
        %v1906 = vpop.f32.mrb[0].mxu0
        %v1907 = vadd.f32 %v1858, %v1906
        %v1908 = vpop.f32.mrb[0].mxu0
        %v1909 = vpop.f32.mrb[0].mxu0
        %v1910 = vadd.f32 %v1861, %v1909
        %v1911 = vpop.f32.mrb[0].mxu0
        %1912 = vdwg.mxu0
        %1913 = vmatprep.subr.mxu0 0.0
        %1914 = vmatpush1.msra.mxu0 %v1899
        %1915 = vmatprep.subr.mxu0 0.0
        %1916 = vmatpush1.msra.mxu0 %v1902
        %1917 = vmatprep.subr.mxu0 0.0
        %1918 = vmatpush1.msra.mxu0 %v1907
        %1919 = vmatprep.subr.mxu0 0.0
        %1920 = vmatpush1.msra.mxu0 %v1910
        %1921 = vmatprep.subr.mxu0 0.0
        %1922 = vmatpush1.msra.mxu0 0.0
        %1923 = vmatprep.subr.mxu0 0.0
        %1924 = vmatpush1.msra.mxu0 0.0
        %1925 = vmatprep.subr.mxu0 0.0
        %1926 = vmatpush1.msra.mxu0 0.0
        %1927 = vmatprep.subr.mxu0 0.0
        %1928 = vmatpush1.msra.mxu0 0.0
        %1929 = vmatprep.subr.mxu0 0.0
        %1930 = vmatpush1.msra.mxu0 0.0
        %1931 = vmatprep.subr.mxu0 0.0
        %1932 = vmatpush1.msra.mxu0 0.0
        %1933 = vmatprep.subr.mxu0 0.0
        %1934 = vmatpush1.msra.mxu0 0.0
        %1935 = vmatprep.subr.mxu0 0.0
        %1936 = vmatpush1.msra.mxu0 0.0
        %1937 = vmatprep.subr.mxu0 0.0
        %1938 = vmatpush1.msra.mxu0 0.0
        %1939 = vmatprep.subr.mxu0 0.0
        %1940 = vmatpush1.msra.mxu0 0.0
        %1941 = vmatprep.subr.mxu0 0.0
        %1942 = vmatpush1.msra.mxu0 0.0
        %1943 = vmatprep.subr.mxu0 0.0
        %1944 = vmatpush1.msra.mxu0 0.0
        %1945 = vmatprep.subr.mxu0 0.0
        %1946 = vmatpush1.msra.mxu0 0.0
        %1947 = vmatprep.subr.mxu0 0.0
        %1948 = vmatpush1.msra.mxu0 0.0
        %1949 = vmatprep.subr.mxu0 0.0
        %1950 = vmatpush1.msra.mxu0 0.0
        %1951 = vmatprep.subr.mxu0 0.0
        %1952 = vmatpush1.msra.mxu0 0.0
        %1953 = vmatprep.subr.mxu0 0.0
        %1954 = vmatpush1.msra.mxu0 0.0
        %1955 = vmatprep.subr.mxu0 0.0
        %1956 = vmatpush1.msra.mxu0 0.0
        %1957 = vmatprep.subr.mxu0 0.0
        %1958 = vmatpush1.msra.mxu0 0.0
        %1959 = vmatprep.subr.mxu0 0.0
        %1960 = vmatpush1.msra.mxu0 0.0
        %1961 = vmatprep.subr.mxu0 0.0
        %1962 = vmatpush1.msra.mxu0 0.0
        %1963 = vmatprep.subr.mxu0 0.0
        %1964 = vmatpush1.msra.mxu0 0.0
        %1965 = vmatprep.subr.mxu0 0.0
        %1966 = vmatpush1.msra.mxu0 0.0
        %1967 = vmatprep.subr.mxu0 0.0
        %1968 = vmatpush1.msra.mxu0 0.0
        %1969 = vmatprep.subr.mxu0 0.0
        %1970 = vmatpush1.msra.mxu0 0.0
        %1971 = vmatprep.subr.mxu0 0.0
        %1972 = vmatpush1.msra.mxu0 0.0
        %1973 = vmatprep.subr.mxu0 0.0
        %1974 = vmatpush1.msra.mxu0 0.0
        %1975 = vmatprep.subr.mxu0 0.0
        %1976 = vmatpush1.msra.mxu0 0.0
        %1977 = vmatprep.mubr.f32.mxu0 0.0
        %1978 = vmatmul.mubr.f32.gmra.mrb[0].mxu0 %v1621
        %v1979 = vpop.f32.mrb[0].mxu0
        %v1980 = vadd.f32 0.0, %v1979
        %v1981 = vpop.f32.mrb[0].mxu0
        %1982 = vmatprep.mubr.f32.mxu0 0.0
        %1983 = vmatmul.mubr.f32.gmra.mrb[0].mxu0 %v1624
        %v1984 = vpop.f32.mrb[0].mxu0
        %v1985 = vadd.f32 0.0, %v1984
        %v1986 = vpop.f32.mrb[0].mxu0
        %1987 = vmatprep.mubr.f32.mxu0 0.0
        %1988 = vmatmul.mubr.f32.gmra.mrb[0].mxu0 %v1627
        %v1989 = vpop.f32.mrb[0].mxu0
        %v1990 = vadd.f32 0.0, %v1989
        %v1991 = vpop.f32.mrb[0].mxu0
        %1992 = vmatprep.mubr.f32.mxu0 0.0
        %1993 = vmatmul.mubr.f32.gmra.mrb[0].mxu0 %v1630
        %v1994 = vpop.f32.mrb[0].mxu0
        %v1995 = vadd.f32 0.0, %v1994
        %v1996 = vpop.f32.mrb[0].mxu0
        %1997 = vdwg.mxu0
        %v1998 = vmul.f32 %v1980, %v1415
        %v1999 = vmul.f32 %v1985, %v1416
        %v2000 = vmul.f32 %v1990, %v1417
        %v2001 = vmul.f32 %v1995, %v1418
        %v2002 = vsel %vm1619, %v1998, 0.0
        %2003 = vadd.xlane.f32.xlu0 %v2002
        %v2004 = vpop.xlane.xlu0 %2003
        %v2005 = vsel %vm1619, %v1999, 0.0
        %2006 = vadd.xlane.f32.xlu0 %v2005
        %v2007 = vpop.xlane.xlu0 %2006
        %v2008 = vsel %vm1619, %v2000, 0.0
        %2009 = vadd.xlane.f32.xlu0 %v2008
        %v2010 = vpop.xlane.xlu0 %2009
        %v2011 = vsel %vm1619, %v2001, 0.0
        %2012 = vadd.xlane.f32.xlu0 %v2011
        %v2013 = vpop.xlane.xlu0 %2012
        %v2014 = vmul.f32 %v2004, 0.0009765625
        %v2015 = vmul.f32 %v2007, 0.0009765625
        %v2016 = vmul.f32 %v2010, 0.0009765625
        %v2017 = vmul.f32 %v2013, 0.0009765625
        %v2018 = vmul.f32 %v1699, %v1699
        %v2019 = vmul.f32 %v1704, %v1704
        %v2020 = vmul.f32 %v1709, %v1709
        %v2021 = vmul.f32 %v1714, %v1714
        %v2022 = vsub.f32 %v2014, %v2018
        %v2023 = vsub.f32 %v2015, %v2019
        %v2024 = vsub.f32 %v2016, %v2020
        %v2025 = vsub.f32 %v2017, %v2021
        %v2026 = vmax.f32 %v2022, 0.0
        %v2027 = vmax.f32 %v2023, 0.0
        %v2028 = vmax.f32 %v2024, 0.0
        %v2029 = vmax.f32 %v2025, 0.0
        %v2030 = vld [vmem:[%s5] sm:$0xff]
        %v2031 = vld [vmem:[%s5 + $0x8] sm:$0xff]
        %v2032 = vld [vmem:[%s5 + $0x10] sm:$0xff]
        %v2033 = vld [vmem:[%s5 + $0x18] sm:$0xff]
        %v2034 = vadd.f32 %v2026, 1e-05
        %v2035 = vadd.f32 %v2027, 1e-05
        %v2036 = vadd.f32 %v2028, 1e-05
        %v2037 = vadd.f32 %v2029, 1e-05
        %v2038 = vrsqrt.pop %v2034
        %v2039 = vrsqrt.pop %v2035
        %v2040 = vrsqrt.pop %v2036
        %v2041 = vrsqrt.pop %v2037
        %v2042 = vmul.f32 %v2030, %v2038
        %v2043 = vmul.f32 %v2031, %v2039
        %v2044 = vmul.f32 %v2032, %v2040
        %v2045 = vmul.f32 %v2033, %v2041
        %v2046 = vld [vmem:[%s6] sm:$0xff]
        %v2047 = vld [vmem:[%s6 + $0x8] sm:$0xff]
        %v2048 = vld [vmem:[%s6 + $0x10] sm:$0xff]
        %v2049 = vld [vmem:[%s6 + $0x18] sm:$0xff]
        %v2050 = vmul.f32 %v1699, %v2042
        %v2051 = vmul.f32 %v1704, %v2043
        %v2052 = vmul.f32 %v1709, %v2044
        %v2053 = vmul.f32 %v1714, %v2045
        %v2054 = vsub.f32 %v2046, %v2050
        %v2055 = vsub.f32 %v2047, %v2051
        %v2056 = vsub.f32 %v2048, %v2052
        %v2057 = vsub.f32 %v2049, %v2053
        %v2062 = vunpack.c.l.b16 %v1411
        %v2063 = vunpack.c.l.b16 %v1412
        %v2064 = vunpack.c.l.b16 %v1413
        %v2065 = vunpack.c.l.b16 %v1414
        %v2066 = vpack.c.b16 %v2063, %v2062
        %v2067 = vpack.c.b16 %v2065, %v2064
        %v2069 = vsel %vm1619, %v2066, 0
        %v2072 = vsel %vm1619, %v2067, 0
        %2074 = vmatprep.subr.bf16.mxu0 %v1396
        %2075 = vmatpush1.bf16.msra.mxu0 %v1395
        %2076 = vmatprep.subr.bf16.mxu0 %v1404
        %2077 = vmatpush1.bf16.msra.mxu0 %v1403
        %2078 = vmatprep.subr.bf16.mxu0 0
        %2079 = vmatpush1.bf16.msra.mxu0 0
        %2080 = vmatprep.subr.bf16.mxu0 0
        %2081 = vmatpush1.bf16.msra.mxu0 0
        %2082 = vmatprep.subr.bf16.mxu0 0
        %2083 = vmatpush1.bf16.msra.mxu0 0
        %2084 = vmatprep.subr.bf16.mxu0 0
        %2085 = vmatpush1.bf16.msra.mxu0 0
        %2086 = vmatprep.subr.bf16.mxu0 0
        %2087 = vmatpush1.bf16.msra.mxu0 0
        %2088 = vmatprep.subr.bf16.mxu0 0
        %2089 = vmatpush1.bf16.msra.mxu0 0
        %2090 = vmatprep.subr.bf16.mxu0 0
        %2091 = vmatpush1.bf16.msra.mxu0 0
        %2092 = vmatprep.subr.bf16.mxu0 0
        %2093 = vmatpush1.bf16.msra.mxu0 0
        %2094 = vmatprep.subr.bf16.mxu0 0
        %2095 = vmatpush1.bf16.msra.mxu0 0
        %2096 = vmatprep.subr.bf16.mxu0 0
        %2097 = vmatpush1.bf16.msra.mxu0 0
        %2098 = vmatprep.subr.bf16.mxu0 0
        %2099 = vmatpush1.bf16.msra.mxu0 0
        %2100 = vmatprep.subr.bf16.mxu0 0
        %2101 = vmatpush1.bf16.msra.mxu0 0
        %2102 = vmatprep.subr.bf16.mxu0 0
        %2103 = vmatpush1.bf16.msra.mxu0 0
        %2104 = vmatprep.subr.bf16.mxu0 0
        %2105 = vmatpush1.bf16.msra.mxu0 0
        %2106 = vmatprep.mubr.bf16.mxu0 0
        %2107 = vmatmul.mubr.bf16.gmra.mrb[0].mxu0 %v2069
        %v2108 = vpop.f32.mrb[0].mxu0
        %v2109 = vadd.f32 0.0, %v2108
        %v2110 = vpop.f32.mrb[0].mxu0
        %v2111 = vadd.f32 0.0, %v2110
        %v2112 = vpop.f32.mrb[0].mxu0
        %v2113 = vadd.f32 0.0, %v2112
        %v2114 = vpop.f32.mrb[0].mxu0
        %v2115 = vadd.f32 0.0, %v2114
        %2116 = vmatprep.mubr.bf16.mxu0 0
        %2117 = vmatmul.mubr.bf16.gmra.mrb[0].mxu0 %v2072
        %v2118 = vpop.f32.mrb[0].mxu0
        %v2119 = vadd.f32 0.0, %v2118
        %v2120 = vpop.f32.mrb[0].mxu0
        %v2121 = vadd.f32 0.0, %v2120
        %v2122 = vpop.f32.mrb[0].mxu0
        %v2123 = vadd.f32 0.0, %v2122
        %v2124 = vpop.f32.mrb[0].mxu0
        %v2125 = vadd.f32 0.0, %v2124
        %2126 = vdwg.mxu0
        %2127 = vmatprep.subr.bf16.mxu0 %v1398
        %2128 = vmatpush1.bf16.msra.mxu0 %v1397
        %2129 = vmatprep.subr.bf16.mxu0 %v1406
        %2130 = vmatpush1.bf16.msra.mxu0 %v1405
        %2131 = vmatprep.subr.bf16.mxu0 0
        %2132 = vmatpush1.bf16.msra.mxu0 0
        %2133 = vmatprep.subr.bf16.mxu0 0
        %2134 = vmatpush1.bf16.msra.mxu0 0
        %2135 = vmatprep.subr.bf16.mxu0 0
        %2136 = vmatpush1.bf16.msra.mxu0 0
        %2137 = vmatprep.subr.bf16.mxu0 0
        %2138 = vmatpush1.bf16.msra.mxu0 0
        %2139 = vmatprep.subr.bf16.mxu0 0
        %2140 = vmatpush1.bf16.msra.mxu0 0
        %2141 = vmatprep.subr.bf16.mxu0 0
        %2142 = vmatpush1.bf16.msra.mxu0 0
        %2143 = vmatprep.subr.bf16.mxu0 0
        %2144 = vmatpush1.bf16.msra.mxu0 0
        %2145 = vmatprep.subr.bf16.mxu0 0
        %2146 = vmatpush1.bf16.msra.mxu0 0
        %2147 = vmatprep.subr.bf16.mxu0 0
        %2148 = vmatpush1.bf16.msra.mxu0 0
        %2149 = vmatprep.subr.bf16.mxu0 0
        %2150 = vmatpush1.bf16.msra.mxu0 0
        %2151 = vmatprep.subr.bf16.mxu0 0
        %2152 = vmatpush1.bf16.msra.mxu0 0
        %2153 = vmatprep.subr.bf16.mxu0 0
        %2154 = vmatpush1.bf16.msra.mxu0 0
        %2155 = vmatprep.subr.bf16.mxu0 0
        %2156 = vmatpush1.bf16.msra.mxu0 0
        %2157 = vmatprep.subr.bf16.mxu0 0
        %2158 = vmatpush1.bf16.msra.mxu0 0
        %2159 = vmatprep.mubr.bf16.mxu0 0
        %2160 = vmatmul.mubr.bf16.gmra.mrb[0].mxu0 %v2069
        %v2161 = vpop.f32.mrb[0].mxu0
        %v2162 = vadd.f32 0.0, %v2161
        %v2163 = vpop.f32.mrb[0].mxu0
        %v2164 = vadd.f32 0.0, %v2163
        %v2165 = vpop.f32.mrb[0].mxu0
        %v2166 = vadd.f32 0.0, %v2165
        %v2167 = vpop.f32.mrb[0].mxu0
        %v2168 = vadd.f32 0.0, %v2167
        %2169 = vmatprep.mubr.bf16.mxu0 0
        %2170 = vmatmul.mubr.bf16.gmra.mrb[0].mxu0 %v2072
        %v2171 = vpop.f32.mrb[0].mxu0
        %v2172 = vadd.f32 0.0, %v2171
        %v2173 = vpop.f32.mrb[0].mxu0
        %v2174 = vadd.f32 0.0, %v2173
        %v2175 = vpop.f32.mrb[0].mxu0
        %v2176 = vadd.f32 0.0, %v2175
        %v2177 = vpop.f32.mrb[0].mxu0
        %v2178 = vadd.f32 0.0, %v2177
        %2179 = vdwg.mxu0
        %2180 = vmatprep.subr.bf16.mxu0 %v1400
        %2181 = vmatpush1.bf16.msra.mxu0 %v1399
        %2182 = vmatprep.subr.bf16.mxu0 %v1408
        %2183 = vmatpush1.bf16.msra.mxu0 %v1407
        %2184 = vmatprep.subr.bf16.mxu0 0
        %2185 = vmatpush1.bf16.msra.mxu0 0
        %2186 = vmatprep.subr.bf16.mxu0 0
        %2187 = vmatpush1.bf16.msra.mxu0 0
        %2188 = vmatprep.subr.bf16.mxu0 0
        %2189 = vmatpush1.bf16.msra.mxu0 0
        %2190 = vmatprep.subr.bf16.mxu0 0
        %2191 = vmatpush1.bf16.msra.mxu0 0
        %2192 = vmatprep.subr.bf16.mxu0 0
        %2193 = vmatpush1.bf16.msra.mxu0 0
        %2194 = vmatprep.subr.bf16.mxu0 0
        %2195 = vmatpush1.bf16.msra.mxu0 0
        %2196 = vmatprep.subr.bf16.mxu0 0
        %2197 = vmatpush1.bf16.msra.mxu0 0
        %2198 = vmatprep.subr.bf16.mxu0 0
        %2199 = vmatpush1.bf16.msra.mxu0 0
        %2200 = vmatprep.subr.bf16.mxu0 0
        %2201 = vmatpush1.bf16.msra.mxu0 0
        %2202 = vmatprep.subr.bf16.mxu0 0
        %2203 = vmatpush1.bf16.msra.mxu0 0
        %2204 = vmatprep.subr.bf16.mxu0 0
        %2205 = vmatpush1.bf16.msra.mxu0 0
        %2206 = vmatprep.subr.bf16.mxu0 0
        %2207 = vmatpush1.bf16.msra.mxu0 0
        %2208 = vmatprep.subr.bf16.mxu0 0
        %2209 = vmatpush1.bf16.msra.mxu0 0
        %2210 = vmatprep.subr.bf16.mxu0 0
        %2211 = vmatpush1.bf16.msra.mxu0 0
        %2212 = vmatprep.mubr.bf16.mxu0 0
        %2213 = vmatmul.mubr.bf16.gmra.mrb[0].mxu0 %v2069
        %v2214 = vpop.f32.mrb[0].mxu0
        %v2215 = vadd.f32 0.0, %v2214
        %v2216 = vpop.f32.mrb[0].mxu0
        %v2217 = vadd.f32 0.0, %v2216
        %v2218 = vpop.f32.mrb[0].mxu0
        %v2219 = vadd.f32 0.0, %v2218
        %v2220 = vpop.f32.mrb[0].mxu0
        %v2221 = vadd.f32 0.0, %v2220
        %2222 = vmatprep.mubr.bf16.mxu0 0
        %2223 = vmatmul.mubr.bf16.gmra.mrb[0].mxu0 %v2072
        %v2224 = vpop.f32.mrb[0].mxu0
        %v2225 = vadd.f32 0.0, %v2224
        %v2226 = vpop.f32.mrb[0].mxu0
        %v2227 = vadd.f32 0.0, %v2226
        %v2228 = vpop.f32.mrb[0].mxu0
        %v2229 = vadd.f32 0.0, %v2228
        %v2230 = vpop.f32.mrb[0].mxu0
        %v2231 = vadd.f32 0.0, %v2230
        %2232 = vdwg.mxu0
        %2233 = vmatprep.subr.bf16.mxu0 %v1402
        %2234 = vmatpush1.bf16.msra.mxu0 %v1401
        %2235 = vmatprep.subr.bf16.mxu0 %v1410
        %2236 = vmatpush1.bf16.msra.mxu0 %v1409
        %2237 = vmatprep.subr.bf16.mxu0 0
        %2238 = vmatpush1.bf16.msra.mxu0 0
        %2239 = vmatprep.subr.bf16.mxu0 0
        %2240 = vmatpush1.bf16.msra.mxu0 0
        %2241 = vmatprep.subr.bf16.mxu0 0
        %2242 = vmatpush1.bf16.msra.mxu0 0
        %2243 = vmatprep.subr.bf16.mxu0 0
        %2244 = vmatpush1.bf16.msra.mxu0 0
        %2245 = vmatprep.subr.bf16.mxu0 0
        %2246 = vmatpush1.bf16.msra.mxu0 0
        %2247 = vmatprep.subr.bf16.mxu0 0
        %2248 = vmatpush1.bf16.msra.mxu0 0
        %2249 = vmatprep.subr.bf16.mxu0 0
        %2250 = vmatpush1.bf16.msra.mxu0 0
        %2251 = vmatprep.subr.bf16.mxu0 0
        %2252 = vmatpush1.bf16.msra.mxu0 0
        %2253 = vmatprep.subr.bf16.mxu0 0
        %2254 = vmatpush1.bf16.msra.mxu0 0
        %2255 = vmatprep.subr.bf16.mxu0 0
        %2256 = vmatpush1.bf16.msra.mxu0 0
        %2257 = vmatprep.subr.bf16.mxu0 0
        %2258 = vmatpush1.bf16.msra.mxu0 0
        %2259 = vmatprep.subr.bf16.mxu0 0
        %2260 = vmatpush1.bf16.msra.mxu0 0
        %2261 = vmatprep.subr.bf16.mxu0 0
        %2262 = vmatpush1.bf16.msra.mxu0 0
        %2263 = vmatprep.subr.bf16.mxu0 0
        %2264 = vmatpush1.bf16.msra.mxu0 0
        %2265 = vmatprep.mubr.bf16.mxu0 0
        %2266 = vmatmul.mubr.bf16.gmra.mrb[0].mxu0 %v2069
        %v2267 = vpop.f32.mrb[0].mxu0
        %v2268 = vadd.f32 0.0, %v2267
        %v2269 = vpop.f32.mrb[0].mxu0
        %v2270 = vadd.f32 0.0, %v2269
        %v2271 = vpop.f32.mrb[0].mxu0
        %v2272 = vadd.f32 0.0, %v2271
        %v2273 = vpop.f32.mrb[0].mxu0
        %v2274 = vadd.f32 0.0, %v2273
        %2275 = vmatprep.mubr.bf16.mxu0 0
        %2276 = vmatmul.mubr.bf16.gmra.mrb[0].mxu0 %v2072
        %v2277 = vpop.f32.mrb[0].mxu0
        %v2278 = vadd.f32 0.0, %v2277
        %v2279 = vpop.f32.mrb[0].mxu0
        %v2280 = vadd.f32 0.0, %v2279
        %v2281 = vpop.f32.mrb[0].mxu0
        %v2282 = vadd.f32 0.0, %v2281
        %v2283 = vpop.f32.mrb[0].mxu0
        %v2284 = vadd.f32 0.0, %v2283
        %2285 = vdwg.mxu0
        %2287 = vset.pattern.permute.xlu0 0
        %2288 = vperm.xlu0 %2287, %v2042
        %v2289 = vpop.permute.xlu0 %2288
        %2292 = vset.pattern.permute.xlu0 0
        %2293 = vperm.xlu0 %2292, %v2043
        %v2294 = vpop.permute.xlu0 %2293
        %2297 = vset.pattern.permute.xlu0 0
        %2298 = vperm.xlu0 %2297, %v2044
        %v2299 = vpop.permute.xlu0 %2298
        %2302 = vset.pattern.permute.xlu0 0
        %2303 = vperm.xlu0 %2302, %v2045
        %v2304 = vpop.permute.xlu0 %2303
        %v2306 = vmul.f32 %v2109, %v2289
        %v2307 = vmul.f32 %v2111, %v2289
        %v2308 = vmul.f32 %v2162, %v2289
        %v2309 = vmul.f32 %v2164, %v2289
        %v2310 = vmul.f32 %v2215, %v2289
        %v2311 = vmul.f32 %v2217, %v2289
        %v2312 = vmul.f32 %v2268, %v2289
        %v2313 = vmul.f32 %v2270, %v2289
        %v2314 = vmul.f32 %v2113, %v2294
        %v2315 = vmul.f32 %v2115, %v2294
        %v2316 = vmul.f32 %v2166, %v2294
        %v2317 = vmul.f32 %v2168, %v2294
        %v2318 = vmul.f32 %v2219, %v2294
        %v2319 = vmul.f32 %v2221, %v2294
        %v2320 = vmul.f32 %v2272, %v2294
        %v2321 = vmul.f32 %v2274, %v2294
        %v2322 = vmul.f32 %v2119, %v2299
        %v2323 = vmul.f32 %v2121, %v2299
        %v2324 = vmul.f32 %v2172, %v2299
        %v2325 = vmul.f32 %v2174, %v2299
        %v2326 = vmul.f32 %v2225, %v2299
        %v2327 = vmul.f32 %v2227, %v2299
        %v2328 = vmul.f32 %v2278, %v2299
        %v2329 = vmul.f32 %v2280, %v2299
        %v2330 = vmul.f32 %v2123, %v2304
        %v2331 = vmul.f32 %v2125, %v2304
        %v2332 = vmul.f32 %v2176, %v2304
        %v2333 = vmul.f32 %v2178, %v2304
        %v2334 = vmul.f32 %v2229, %v2304
        %v2335 = vmul.f32 %v2231, %v2304
        %v2336 = vmul.f32 %v2282, %v2304
        %v2337 = vmul.f32 %v2284, %v2304
        %2339 = vset.pattern.permute.xlu0 0
        %2340 = vperm.xlu0 %2339, %v2054
        %v2341 = vpop.permute.xlu0 %2340
        %2344 = vset.pattern.permute.xlu0 0
        %2345 = vperm.xlu0 %2344, %v2055
        %v2346 = vpop.permute.xlu0 %2345
        %2349 = vset.pattern.permute.xlu0 0
        %2350 = vperm.xlu0 %2349, %v2056
        %v2351 = vpop.permute.xlu0 %2350
        %2354 = vset.pattern.permute.xlu0 0
        %2355 = vperm.xlu0 %2354, %v2057
        %v2356 = vpop.permute.xlu0 %2355
        %v2358 = vadd.f32 %v2306, %v2341
        %v2359 = vadd.f32 %v2307, %v2341
        %v2360 = vadd.f32 %v2308, %v2341
        %v2361 = vadd.f32 %v2309, %v2341
        %v2362 = vadd.f32 %v2310, %v2341
        %v2363 = vadd.f32 %v2311, %v2341
        %v2364 = vadd.f32 %v2312, %v2341
        %v2365 = vadd.f32 %v2313, %v2341
        %v2366 = vadd.f32 %v2314, %v2346
        %v2367 = vadd.f32 %v2315, %v2346
        %v2368 = vadd.f32 %v2316, %v2346
        %v2369 = vadd.f32 %v2317, %v2346
        %v2370 = vadd.f32 %v2318, %v2346
        %v2371 = vadd.f32 %v2319, %v2346
        %v2372 = vadd.f32 %v2320, %v2346
        %v2373 = vadd.f32 %v2321, %v2346
        %v2374 = vadd.f32 %v2322, %v2351
        %v2375 = vadd.f32 %v2323, %v2351
        %v2376 = vadd.f32 %v2324, %v2351
        %v2377 = vadd.f32 %v2325, %v2351
        %v2378 = vadd.f32 %v2326, %v2351
        %v2379 = vadd.f32 %v2327, %v2351
        %v2380 = vadd.f32 %v2328, %v2351
        %v2381 = vadd.f32 %v2329, %v2351
        %v2382 = vadd.f32 %v2330, %v2356
        %v2383 = vadd.f32 %v2331, %v2356
        %v2384 = vadd.f32 %v2332, %v2356
        %v2385 = vadd.f32 %v2333, %v2356
        %v2386 = vadd.f32 %v2334, %v2356
        %v2387 = vadd.f32 %v2335, %v2356
        %v2388 = vadd.f32 %v2336, %v2356
        %v2389 = vadd.f32 %v2337, %v2356
        %v2390 = vmul.f32 %v2358, 0.1
        %v2391 = vmul.f32 %v2359, 0.1
        %v2392 = vmul.f32 %v2360, 0.1
        %v2393 = vmul.f32 %v2361, 0.1
        %v2394 = vmul.f32 %v2362, 0.1
        %v2395 = vmul.f32 %v2363, 0.1
        %v2396 = vmul.f32 %v2364, 0.1
        %v2397 = vmul.f32 %v2365, 0.1
        %v2398 = vmul.f32 %v2366, 0.1
        %v2399 = vmul.f32 %v2367, 0.1
        %v2400 = vmul.f32 %v2368, 0.1
        %v2401 = vmul.f32 %v2369, 0.1
        %v2402 = vmul.f32 %v2370, 0.1
        %v2403 = vmul.f32 %v2371, 0.1
        %v2404 = vmul.f32 %v2372, 0.1
        %v2405 = vmul.f32 %v2373, 0.1
        %v2406 = vmul.f32 %v2374, 0.1
        %v2407 = vmul.f32 %v2375, 0.1
        %v2408 = vmul.f32 %v2376, 0.1
        %v2409 = vmul.f32 %v2377, 0.1
        %v2410 = vmul.f32 %v2378, 0.1
        %v2411 = vmul.f32 %v2379, 0.1
        %v2412 = vmul.f32 %v2380, 0.1
        %v2413 = vmul.f32 %v2381, 0.1
        %v2414 = vmul.f32 %v2382, 0.1
        %v2415 = vmul.f32 %v2383, 0.1
        %v2416 = vmul.f32 %v2384, 0.1
        %v2417 = vmul.f32 %v2385, 0.1
        %v2418 = vmul.f32 %v2386, 0.1
        %v2419 = vmul.f32 %v2387, 0.1
        %v2420 = vmul.f32 %v2388, 0.1
        %v2421 = vmul.f32 %v2389, 0.1
        %v2422 = vmax.f32 %v2358, %v2390
        %v2423 = vmax.f32 %v2359, %v2391
        %v2424 = vmax.f32 %v2360, %v2392
        %v2425 = vmax.f32 %v2361, %v2393
        %v2426 = vmax.f32 %v2362, %v2394
        %v2427 = vmax.f32 %v2363, %v2395
        %v2428 = vmax.f32 %v2364, %v2396
        %v2429 = vmax.f32 %v2365, %v2397
        %v2430 = vmax.f32 %v2366, %v2398
        %v2431 = vmax.f32 %v2367, %v2399
        %v2432 = vmax.f32 %v2368, %v2400
        %v2433 = vmax.f32 %v2369, %v2401
        %v2434 = vmax.f32 %v2370, %v2402
        %v2435 = vmax.f32 %v2371, %v2403
        %v2436 = vmax.f32 %v2372, %v2404
        %v2437 = vmax.f32 %v2373, %v2405
        %v2438 = vmax.f32 %v2374, %v2406
        %v2439 = vmax.f32 %v2375, %v2407
        %v2440 = vmax.f32 %v2376, %v2408
        %v2441 = vmax.f32 %v2377, %v2409
        %v2442 = vmax.f32 %v2378, %v2410
        %v2443 = vmax.f32 %v2379, %v2411
        %v2444 = vmax.f32 %v2380, %v2412
        %v2445 = vmax.f32 %v2381, %v2413
        %v2446 = vmax.f32 %v2382, %v2414
        %v2447 = vmax.f32 %v2383, %v2415
        %v2448 = vmax.f32 %v2384, %v2416
        %v2449 = vmax.f32 %v2385, %v2417
        %v2450 = vmax.f32 %v2386, %v2418
        %v2451 = vmax.f32 %v2387, %v2419
        %v2452 = vmax.f32 %v2388, %v2420
        %v2453 = vmax.f32 %v2389, %v2421
        %v2454 = vpack.c.bf16 %v2430, %v2422
        %v2455 = vpack.c.bf16 %v2431, %v2423
        %v2456 = vpack.c.bf16 %v2432, %v2424
        %v2457 = vpack.c.bf16 %v2433, %v2425
        %v2458 = vpack.c.bf16 %v2434, %v2426
        %v2459 = vpack.c.bf16 %v2435, %v2427
        %v2460 = vpack.c.bf16 %v2436, %v2428
        %v2461 = vpack.c.bf16 %v2437, %v2429
        %v2462 = vpack.c.bf16 %v2446, %v2438
        %v2463 = vpack.c.bf16 %v2447, %v2439
        %v2464 = vpack.c.bf16 %v2448, %v2440
        %v2465 = vpack.c.bf16 %v2449, %v2441
        %v2466 = vpack.c.bf16 %v2450, %v2442
        %v2467 = vpack.c.bf16 %v2451, %v2443
        %v2468 = vpack.c.bf16 %v2452, %v2444
        %v2469 = vpack.c.bf16 %v2453, %v2445
        %v2470 = vld [vmem:[%s7] sm:$0xf]
        %v2471 = vld [vmem:[%s7 + $0x4] sm:$0xf]
        %v2472 = vld [vmem:[%s7 + $0x8] sm:$0xf]
        %v2473 = vld [vmem:[%s7 + $0xc] sm:$0xf]
        %v2474 = vunpack.c.l.bf16 %v2470
        %v2475 = vunpack.c.l.bf16 %v2471
        %v2476 = vunpack.c.l.bf16 %v2472
        %v2477 = vunpack.c.l.bf16 %v2473
        %2478 = vmatprep.subr.bf16.mxu0 0
        %2479 = vmatpush1.bf16.msra.mxu0 1065369472
        %2480 = vmatprep.subr.bf16.mxu0 0
        %2481 = vmatpush1.bf16.msra.mxu0 1065369472
        %2482 = vmatprep.subr.bf16.mxu0 0
        %2483 = vmatpush1.bf16.msra.mxu0 1065369472
        %2484 = vmatprep.subr.bf16.mxu0 0
        %2485 = vmatpush1.bf16.msra.mxu0 1065369472
        %2486 = vmatprep.subr.bf16.mxu0 0
        %2487 = vmatpush1.bf16.msra.mxu0 1065369472
        %2488 = vmatprep.subr.bf16.mxu0 0
        %2489 = vmatpush1.bf16.msra.mxu0 1065369472
        %2490 = vmatprep.subr.bf16.mxu0 0
        %2491 = vmatpush1.bf16.msra.mxu0 1065369472
        %2492 = vmatprep.subr.bf16.mxu0 0
        %2493 = vmatpush1.bf16.msra.mxu0 1065369472
        %2494 = vmatprep.subr.bf16.mxu0 0
        %2495 = vmatpush1.bf16.msra.mxu0 1065369472
        %2496 = vmatprep.subr.bf16.mxu0 0
        %2497 = vmatpush1.bf16.msra.mxu0 1065369472
        %2498 = vmatprep.subr.bf16.mxu0 0
        %2499 = vmatpush1.bf16.msra.mxu0 1065369472
        %2500 = vmatprep.subr.bf16.mxu0 0
        %2501 = vmatpush1.bf16.msra.mxu0 1065369472
        %2502 = vmatprep.subr.bf16.mxu0 0
        %2503 = vmatpush1.bf16.msra.mxu0 1065369472
        %2504 = vmatprep.subr.bf16.mxu0 0
        %2505 = vmatpush1.bf16.msra.mxu0 1065369472
        %2506 = vmatprep.subr.bf16.mxu0 0
        %2507 = vmatpush1.bf16.msra.mxu0 1065369472
        %2508 = vmatprep.subr.bf16.mxu0 0
        %2509 = vmatpush1.bf16.msra.mxu0 1065369472
        %2510 = vmatprep.mubr.bf16.mxu0 %v2455
        %2511 = vmatmul.mubr.bf16.gmra.mrb[0].mxu0 %v2454
        %v2512 = vpop.f32.mrb[0].mxu0
        %v2513 = vadd.f32 0.0, %v2512
        %v2514 = vpop.f32.mrb[0].mxu0
        %v2515 = vpop.f32.mrb[0].mxu0
        %v2516 = vadd.f32 0.0, %v2515
        %v2517 = vpop.f32.mrb[0].mxu0
        %2518 = vmatprep.mubr.bf16.mxu0 %v2463
        %2519 = vmatmul.mubr.bf16.gmra.mrb[0].mxu0 %v2462
        %v2520 = vpop.f32.mrb[0].mxu0
        %v2521 = vadd.f32 0.0, %v2520
        %v2522 = vpop.f32.mrb[0].mxu0
        %v2523 = vpop.f32.mrb[0].mxu0
        %v2524 = vadd.f32 0.0, %v2523
        %v2525 = vpop.f32.mrb[0].mxu0
        %2526 = vdwg.mxu0
        %2527 = vmatprep.subr.bf16.mxu0 0
        %2528 = vmatpush1.bf16.msra.mxu0 1065369472
        %2529 = vmatprep.subr.bf16.mxu0 0
        %2530 = vmatpush1.bf16.msra.mxu0 1065369472
        %2531 = vmatprep.subr.bf16.mxu0 0
        %2532 = vmatpush1.bf16.msra.mxu0 1065369472
        %2533 = vmatprep.subr.bf16.mxu0 0
        %2534 = vmatpush1.bf16.msra.mxu0 1065369472
        %2535 = vmatprep.subr.bf16.mxu0 0
        %2536 = vmatpush1.bf16.msra.mxu0 1065369472
        %2537 = vmatprep.subr.bf16.mxu0 0
        %2538 = vmatpush1.bf16.msra.mxu0 1065369472
        %2539 = vmatprep.subr.bf16.mxu0 0
        %2540 = vmatpush1.bf16.msra.mxu0 1065369472
        %2541 = vmatprep.subr.bf16.mxu0 0
        %2542 = vmatpush1.bf16.msra.mxu0 1065369472
        %2543 = vmatprep.subr.bf16.mxu0 0
        %2544 = vmatpush1.bf16.msra.mxu0 1065369472
        %2545 = vmatprep.subr.bf16.mxu0 0
        %2546 = vmatpush1.bf16.msra.mxu0 1065369472
        %2547 = vmatprep.subr.bf16.mxu0 0
        %2548 = vmatpush1.bf16.msra.mxu0 1065369472
        %2549 = vmatprep.subr.bf16.mxu0 0
        %2550 = vmatpush1.bf16.msra.mxu0 1065369472
        %2551 = vmatprep.subr.bf16.mxu0 0
        %2552 = vmatpush1.bf16.msra.mxu0 1065369472
        %2553 = vmatprep.subr.bf16.mxu0 0
        %2554 = vmatpush1.bf16.msra.mxu0 1065369472
        %2555 = vmatprep.subr.bf16.mxu0 0
        %2556 = vmatpush1.bf16.msra.mxu0 1065369472
        %2557 = vmatprep.subr.bf16.mxu0 0
        %2558 = vmatpush1.bf16.msra.mxu0 1065369472
        %2559 = vmatprep.mubr.bf16.mxu0 %v2457
        %2560 = vmatmul.mubr.bf16.gmra.mrb[0].mxu0 %v2456
        %v2561 = vpop.f32.mrb[0].mxu0
        %v2562 = vadd.f32 %v2513, %v2561
        %v2563 = vpop.f32.mrb[0].mxu0
        %v2564 = vpop.f32.mrb[0].mxu0
        %v2565 = vadd.f32 %v2516, %v2564
        %v2566 = vpop.f32.mrb[0].mxu0
        %2567 = vmatprep.mubr.bf16.mxu0 %v2465
        %2568 = vmatmul.mubr.bf16.gmra.mrb[0].mxu0 %v2464
        %v2569 = vpop.f32.mrb[0].mxu0
        %v2570 = vadd.f32 %v2521, %v2569
        %v2571 = vpop.f32.mrb[0].mxu0
        %v2572 = vpop.f32.mrb[0].mxu0
        %v2573 = vadd.f32 %v2524, %v2572
        %v2574 = vpop.f32.mrb[0].mxu0
        %2575 = vdwg.mxu0
        %2576 = vmatprep.subr.bf16.mxu0 0
        %2577 = vmatpush1.bf16.msra.mxu0 1065369472
        %2578 = vmatprep.subr.bf16.mxu0 0
        %2579 = vmatpush1.bf16.msra.mxu0 1065369472
        %2580 = vmatprep.subr.bf16.mxu0 0
        %2581 = vmatpush1.bf16.msra.mxu0 1065369472
        %2582 = vmatprep.subr.bf16.mxu0 0
        %2583 = vmatpush1.bf16.msra.mxu0 1065369472
        %2584 = vmatprep.subr.bf16.mxu0 0
        %2585 = vmatpush1.bf16.msra.mxu0 1065369472
        %2586 = vmatprep.subr.bf16.mxu0 0
        %2587 = vmatpush1.bf16.msra.mxu0 1065369472
        %2588 = vmatprep.subr.bf16.mxu0 0
        %2589 = vmatpush1.bf16.msra.mxu0 1065369472
        %2590 = vmatprep.subr.bf16.mxu0 0
        %2591 = vmatpush1.bf16.msra.mxu0 1065369472
        %2592 = vmatprep.subr.bf16.mxu0 0
        %2593 = vmatpush1.bf16.msra.mxu0 1065369472
        %2594 = vmatprep.subr.bf16.mxu0 0
        %2595 = vmatpush1.bf16.msra.mxu0 1065369472
        %2596 = vmatprep.subr.bf16.mxu0 0
        %2597 = vmatpush1.bf16.msra.mxu0 1065369472
        %2598 = vmatprep.subr.bf16.mxu0 0
        %2599 = vmatpush1.bf16.msra.mxu0 1065369472
        %2600 = vmatprep.subr.bf16.mxu0 0
        %2601 = vmatpush1.bf16.msra.mxu0 1065369472
        %2602 = vmatprep.subr.bf16.mxu0 0
        %2603 = vmatpush1.bf16.msra.mxu0 1065369472
        %2604 = vmatprep.subr.bf16.mxu0 0
        %2605 = vmatpush1.bf16.msra.mxu0 1065369472
        %2606 = vmatprep.subr.bf16.mxu0 0
        %2607 = vmatpush1.bf16.msra.mxu0 1065369472
        %2608 = vmatprep.mubr.bf16.mxu0 %v2459
        %2609 = vmatmul.mubr.bf16.gmra.mrb[0].mxu0 %v2458
        %v2610 = vpop.f32.mrb[0].mxu0
        %v2611 = vadd.f32 %v2562, %v2610
        %v2612 = vpop.f32.mrb[0].mxu0
        %v2613 = vpop.f32.mrb[0].mxu0
        %v2614 = vadd.f32 %v2565, %v2613
        %v2615 = vpop.f32.mrb[0].mxu0
        %2616 = vmatprep.mubr.bf16.mxu0 %v2467
        %2617 = vmatmul.mubr.bf16.gmra.mrb[0].mxu0 %v2466
        %v2618 = vpop.f32.mrb[0].mxu0
        %v2619 = vadd.f32 %v2570, %v2618
        %v2620 = vpop.f32.mrb[0].mxu0
        %v2621 = vpop.f32.mrb[0].mxu0
        %v2622 = vadd.f32 %v2573, %v2621
        %v2623 = vpop.f32.mrb[0].mxu0
        %2624 = vdwg.mxu0
        %2625 = vmatprep.subr.bf16.mxu0 0
        %2626 = vmatpush1.bf16.msra.mxu0 1065369472
        %2627 = vmatprep.subr.bf16.mxu0 0
        %2628 = vmatpush1.bf16.msra.mxu0 1065369472
        %2629 = vmatprep.subr.bf16.mxu0 0
        %2630 = vmatpush1.bf16.msra.mxu0 1065369472
        %2631 = vmatprep.subr.bf16.mxu0 0
        %2632 = vmatpush1.bf16.msra.mxu0 1065369472
        %2633 = vmatprep.subr.bf16.mxu0 0
        %2634 = vmatpush1.bf16.msra.mxu0 1065369472
        %2635 = vmatprep.subr.bf16.mxu0 0
        %2636 = vmatpush1.bf16.msra.mxu0 1065369472
        %2637 = vmatprep.subr.bf16.mxu0 0
        %2638 = vmatpush1.bf16.msra.mxu0 1065369472
        %2639 = vmatprep.subr.bf16.mxu0 0
        %2640 = vmatpush1.bf16.msra.mxu0 1065369472
        %2641 = vmatprep.subr.bf16.mxu0 0
        %2642 = vmatpush1.bf16.msra.mxu0 1065369472
        %2643 = vmatprep.subr.bf16.mxu0 0
        %2644 = vmatpush1.bf16.msra.mxu0 1065369472
        %2645 = vmatprep.subr.bf16.mxu0 0
        %2646 = vmatpush1.bf16.msra.mxu0 1065369472
        %2647 = vmatprep.subr.bf16.mxu0 0
        %2648 = vmatpush1.bf16.msra.mxu0 1065369472
        %2649 = vmatprep.subr.bf16.mxu0 0
        %2650 = vmatpush1.bf16.msra.mxu0 1065369472
        %2651 = vmatprep.subr.bf16.mxu0 0
        %2652 = vmatpush1.bf16.msra.mxu0 1065369472
        %2653 = vmatprep.subr.bf16.mxu0 0
        %2654 = vmatpush1.bf16.msra.mxu0 1065369472
        %2655 = vmatprep.subr.bf16.mxu0 0
        %2656 = vmatpush1.bf16.msra.mxu0 1065369472
        %2657 = vmatprep.mubr.bf16.mxu0 %v2461
        %2658 = vmatmul.mubr.bf16.gmra.mrb[0].mxu0 %v2460
        %v2659 = vpop.f32.mrb[0].mxu0
        %v2660 = vadd.f32 %v2611, %v2659
        %v2661 = vpop.f32.mrb[0].mxu0
        %v2662 = vpop.f32.mrb[0].mxu0
        %v2663 = vadd.f32 %v2614, %v2662
        %v2664 = vpop.f32.mrb[0].mxu0
        %2665 = vmatprep.mubr.bf16.mxu0 %v2469
        %2666 = vmatmul.mubr.bf16.gmra.mrb[0].mxu0 %v2468
        %v2667 = vpop.f32.mrb[0].mxu0
        %v2668 = vadd.f32 %v2619, %v2667
        %v2669 = vpop.f32.mrb[0].mxu0
        %v2670 = vpop.f32.mrb[0].mxu0
        %v2671 = vadd.f32 %v2622, %v2670
        %v2672 = vpop.f32.mrb[0].mxu0
        %2673 = vdwg.mxu0
        %v2674 = vmul.f32 %v2660, 0.0009765625
        %v2675 = vmul.f32 %v2663, 0.0009765625
        %v2676 = vmul.f32 %v2668, 0.0009765625
        %v2677 = vmul.f32 %v2671, 0.0009765625
        %v2679 = vsel %vm1619, %v2474, 0
        %v2682 = vsel %vm1619, %v2475, 0
        %v2685 = vsel %vm1619, %v2476, 0
        %v2688 = vsel %vm1619, %v2477, 0
        %2690 = vmatprep.subr.mxu0 0.0
        %2691 = vmatpush1.msra.mxu0 %v2674
        %2692 = vmatprep.subr.mxu0 0.0
        %2693 = vmatpush1.msra.mxu0 %v2675
        %2694 = vmatprep.subr.mxu0 0.0
        %2695 = vmatpush1.msra.mxu0 %v2676
        %2696 = vmatprep.subr.mxu0 0.0
        %2697 = vmatpush1.msra.mxu0 %v2677
        %2698 = vmatprep.subr.mxu0 0.0
        %2699 = vmatpush1.msra.mxu0 0.0
        %2700 = vmatprep.subr.mxu0 0.0
        %2701 = vmatpush1.msra.mxu0 0.0
        %2702 = vmatprep.subr.mxu0 0.0
        %2703 = vmatpush1.msra.mxu0 0.0
        %2704 = vmatprep.subr.mxu0 0.0
        %2705 = vmatpush1.msra.mxu0 0.0
        %2706 = vmatprep.subr.mxu0 0.0
        %2707 = vmatpush1.msra.mxu0 0.0
        %2708 = vmatprep.subr.mxu0 0.0
        %2709 = vmatpush1.msra.mxu0 0.0
        %2710 = vmatprep.subr.mxu0 0.0
        %2711 = vmatpush1.msra.mxu0 0.0
        %2712 = vmatprep.subr.mxu0 0.0
        %2713 = vmatpush1.msra.mxu0 0.0
        %2714 = vmatprep.subr.mxu0 0.0
        %2715 = vmatpush1.msra.mxu0 0.0
        %2716 = vmatprep.subr.mxu0 0.0
        %2717 = vmatpush1.msra.mxu0 0.0
        %2718 = vmatprep.subr.mxu0 0.0
        %2719 = vmatpush1.msra.mxu0 0.0
        %2720 = vmatprep.subr.mxu0 0.0
        %2721 = vmatpush1.msra.mxu0 0.0
        %2722 = vmatprep.subr.mxu0 0.0
        %2723 = vmatpush1.msra.mxu0 0.0
        %2724 = vmatprep.subr.mxu0 0.0
        %2725 = vmatpush1.msra.mxu0 0.0
        %2726 = vmatprep.subr.mxu0 0.0
        %2727 = vmatpush1.msra.mxu0 0.0
        %2728 = vmatprep.subr.mxu0 0.0
        %2729 = vmatpush1.msra.mxu0 0.0
        %2730 = vmatprep.subr.mxu0 0.0
        %2731 = vmatpush1.msra.mxu0 0.0
        %2732 = vmatprep.subr.mxu0 0.0
        %2733 = vmatpush1.msra.mxu0 0.0
        %2734 = vmatprep.subr.mxu0 0.0
        %2735 = vmatpush1.msra.mxu0 0.0
        %2736 = vmatprep.subr.mxu0 0.0
        %2737 = vmatpush1.msra.mxu0 0.0
        %2738 = vmatprep.subr.mxu0 0.0
        %2739 = vmatpush1.msra.mxu0 0.0
        %2740 = vmatprep.subr.mxu0 0.0
        %2741 = vmatpush1.msra.mxu0 0.0
        %2742 = vmatprep.subr.mxu0 0.0
        %2743 = vmatpush1.msra.mxu0 0.0
        %2744 = vmatprep.subr.mxu0 0.0
        %2745 = vmatpush1.msra.mxu0 0.0
        %2746 = vmatprep.subr.mxu0 0.0
        %2747 = vmatpush1.msra.mxu0 0.0
        %2748 = vmatprep.subr.mxu0 0.0
        %2749 = vmatpush1.msra.mxu0 0.0
        %2750 = vmatprep.subr.mxu0 0.0
        %2751 = vmatpush1.msra.mxu0 0.0
        %2752 = vmatprep.subr.mxu0 0.0
        %2753 = vmatpush1.msra.mxu0 0.0
        %2754 = vmatprep.mubr.f32.mxu0 0.0
        %2755 = vmatmul.mubr.f32.gmra.mrb[0].mxu0 %v2679
        %v2756 = vpop.f32.mrb[0].mxu0
        %v2757 = vadd.f32 0.0, %v2756
        %v2758 = vpop.f32.mrb[0].mxu0
        %2759 = vmatprep.mubr.f32.mxu0 0.0
        %2760 = vmatmul.mubr.f32.gmra.mrb[0].mxu0 %v2682
        %v2761 = vpop.f32.mrb[0].mxu0
        %v2762 = vadd.f32 0.0, %v2761
        %v2763 = vpop.f32.mrb[0].mxu0
        %2764 = vmatprep.mubr.f32.mxu0 0.0
        %2765 = vmatmul.mubr.f32.gmra.mrb[0].mxu0 %v2685
        %v2766 = vpop.f32.mrb[0].mxu0
        %v2767 = vadd.f32 0.0, %v2766
        %v2768 = vpop.f32.mrb[0].mxu0
        %2769 = vmatprep.mubr.f32.mxu0 0.0
        %2770 = vmatmul.mubr.f32.gmra.mrb[0].mxu0 %v2688
        %v2771 = vpop.f32.mrb[0].mxu0
        %v2772 = vadd.f32 0.0, %v2771
        %v2773 = vpop.f32.mrb[0].mxu0
        %2774 = vdwg.mxu0
        %2775 = vmatprep.subr.bf16.mxu0 %v2455
        %2776 = vmatpush1.bf16.xpose.msra.mxu0 %v2454
        %2777 = vmatprep.subr.bf16.mxu0 %v2463
        %2778 = vmatpush1.bf16.xpose.msra.mxu0 %v2462
        %2779 = vmatprep.subr.bf16.mxu0 0
        %2780 = vmatpush1.bf16.xpose.msra.mxu0 0
        %2781 = vmatprep.subr.bf16.mxu0 0
        %2782 = vmatpush1.bf16.xpose.msra.mxu0 0
        %2783 = vmatprep.subr.bf16.mxu0 0
        %2784 = vmatpush1.bf16.xpose.msra.mxu0 0
        %2785 = vmatprep.subr.bf16.mxu0 0
        %2786 = vmatpush1.bf16.xpose.msra.mxu0 0
        %2787 = vmatprep.subr.bf16.mxu0 0
        %2788 = vmatpush1.bf16.xpose.msra.mxu0 0
        %2789 = vmatprep.subr.bf16.mxu0 0
        %2790 = vmatpush1.bf16.xpose.msra.mxu0 0
        %2791 = vmatprep.subr.bf16.mxu0 0
        %2792 = vmatpush1.bf16.xpose.msra.mxu0 0
        %2793 = vmatprep.subr.bf16.mxu0 0
        %2794 = vmatpush1.bf16.xpose.msra.mxu0 0
        %2795 = vmatprep.subr.bf16.mxu0 0
        %2796 = vmatpush1.bf16.xpose.msra.mxu0 0
        %2797 = vmatprep.subr.bf16.mxu0 0
        %2798 = vmatpush1.bf16.xpose.msra.mxu0 0
        %2799 = vmatprep.subr.bf16.mxu0 0
        %2800 = vmatpush1.bf16.xpose.msra.mxu0 0
        %2801 = vmatprep.subr.bf16.mxu0 0
        %2802 = vmatpush1.bf16.xpose.msra.mxu0 0
        %2803 = vmatprep.subr.bf16.mxu0 0
        %2804 = vmatpush1.bf16.xpose.msra.mxu0 0
        %2805 = vmatprep.subr.bf16.mxu0 0
        %2806 = vmatpush1.bf16.xpose.msra.mxu0 0
        %2807 = vmatprep.mubr.bf16.mxu0 %v2455
        %2808 = vmatmul.mubr.bf16.gmra.mrb[0].mxu0 %v2454
        %v2809 = vpop.f32.mrb[0].mxu0
        %v2810 = vadd.f32 0.0, %v2809
        %v2811 = vpop.f32.mrb[0].mxu0
        %v2812 = vpop.f32.mrb[0].mxu0
        %v2813 = vadd.f32 0.0, %v2812
        %v2814 = vpop.f32.mrb[0].mxu0
        %2815 = vmatprep.mubr.bf16.mxu0 %v2463
        %2816 = vmatmul.mubr.bf16.gmra.mrb[0].mxu0 %v2462
        %v2817 = vpop.f32.mrb[0].mxu0
        %v2818 = vadd.f32 0.0, %v2817
        %v2819 = vpop.f32.mrb[0].mxu0
        %v2820 = vpop.f32.mrb[0].mxu0
        %v2821 = vadd.f32 0.0, %v2820
        %v2822 = vpop.f32.mrb[0].mxu0
        %2823 = vdwg.mxu0
        %2824 = vmatprep.subr.bf16.mxu0 %v2457
        %2825 = vmatpush1.bf16.xpose.msra.mxu0 %v2456
        %2826 = vmatprep.subr.bf16.mxu0 %v2465
        %2827 = vmatpush1.bf16.xpose.msra.mxu0 %v2464
        %2828 = vmatprep.subr.bf16.mxu0 0
        %2829 = vmatpush1.bf16.xpose.msra.mxu0 0
        %2830 = vmatprep.subr.bf16.mxu0 0
        %2831 = vmatpush1.bf16.xpose.msra.mxu0 0
        %2832 = vmatprep.subr.bf16.mxu0 0
        %2833 = vmatpush1.bf16.xpose.msra.mxu0 0
        %2834 = vmatprep.subr.bf16.mxu0 0
        %2835 = vmatpush1.bf16.xpose.msra.mxu0 0
        %2836 = vmatprep.subr.bf16.mxu0 0
        %2837 = vmatpush1.bf16.xpose.msra.mxu0 0
        %2838 = vmatprep.subr.bf16.mxu0 0
        %2839 = vmatpush1.bf16.xpose.msra.mxu0 0
        %2840 = vmatprep.subr.bf16.mxu0 0
        %2841 = vmatpush1.bf16.xpose.msra.mxu0 0
        %2842 = vmatprep.subr.bf16.mxu0 0
        %2843 = vmatpush1.bf16.xpose.msra.mxu0 0
        %2844 = vmatprep.subr.bf16.mxu0 0
        %2845 = vmatpush1.bf16.xpose.msra.mxu0 0
        %2846 = vmatprep.subr.bf16.mxu0 0
        %2847 = vmatpush1.bf16.xpose.msra.mxu0 0
        %2848 = vmatprep.subr.bf16.mxu0 0
        %2849 = vmatpush1.bf16.xpose.msra.mxu0 0
        %2850 = vmatprep.subr.bf16.mxu0 0
        %2851 = vmatpush1.bf16.xpose.msra.mxu0 0
        %2852 = vmatprep.subr.bf16.mxu0 0
        %2853 = vmatpush1.bf16.xpose.msra.mxu0 0
        %2854 = vmatprep.subr.bf16.mxu0 0
        %2855 = vmatpush1.bf16.xpose.msra.mxu0 0
        %2856 = vmatprep.mubr.bf16.mxu0 %v2457
        %2857 = vmatmul.mubr.bf16.gmra.mrb[0].mxu0 %v2456
        %v2858 = vpop.f32.mrb[0].mxu0
        %v2859 = vadd.f32 %v2810, %v2858
        %v2860 = vpop.f32.mrb[0].mxu0
        %v2861 = vpop.f32.mrb[0].mxu0
        %v2862 = vadd.f32 %v2813, %v2861
        %v2863 = vpop.f32.mrb[0].mxu0
        %2864 = vmatprep.mubr.bf16.mxu0 %v2465
        %2865 = vmatmul.mubr.bf16.gmra.mrb[0].mxu0 %v2464
        %v2866 = vpop.f32.mrb[0].mxu0
        %v2867 = vadd.f32 %v2818, %v2866
        %v2868 = vpop.f32.mrb[0].mxu0
        %v2869 = vpop.f32.mrb[0].mxu0
        %v2870 = vadd.f32 %v2821, %v2869
        %v2871 = vpop.f32.mrb[0].mxu0
        %2872 = vdwg.mxu0
        %2873 = vmatprep.subr.bf16.mxu0 %v2459
        %2874 = vmatpush1.bf16.xpose.msra.mxu0 %v2458
        %2875 = vmatprep.subr.bf16.mxu0 %v2467
        %2876 = vmatpush1.bf16.xpose.msra.mxu0 %v2466
        %2877 = vmatprep.subr.bf16.mxu0 0
        %2878 = vmatpush1.bf16.xpose.msra.mxu0 0
        %2879 = vmatprep.subr.bf16.mxu0 0
        %2880 = vmatpush1.bf16.xpose.msra.mxu0 0
        %2881 = vmatprep.subr.bf16.mxu0 0
        %2882 = vmatpush1.bf16.xpose.msra.mxu0 0
        %2883 = vmatprep.subr.bf16.mxu0 0
        %2884 = vmatpush1.bf16.xpose.msra.mxu0 0
        %2885 = vmatprep.subr.bf16.mxu0 0
        %2886 = vmatpush1.bf16.xpose.msra.mxu0 0
        %2887 = vmatprep.subr.bf16.mxu0 0
        %2888 = vmatpush1.bf16.xpose.msra.mxu0 0
        %2889 = vmatprep.subr.bf16.mxu0 0
        %2890 = vmatpush1.bf16.xpose.msra.mxu0 0
        %2891 = vmatprep.subr.bf16.mxu0 0
        %2892 = vmatpush1.bf16.xpose.msra.mxu0 0
        %2893 = vmatprep.subr.bf16.mxu0 0
        %2894 = vmatpush1.bf16.xpose.msra.mxu0 0
        %2895 = vmatprep.subr.bf16.mxu0 0
        %2896 = vmatpush1.bf16.xpose.msra.mxu0 0
        %2897 = vmatprep.subr.bf16.mxu0 0
        %2898 = vmatpush1.bf16.xpose.msra.mxu0 0
        %2899 = vmatprep.subr.bf16.mxu0 0
        %2900 = vmatpush1.bf16.xpose.msra.mxu0 0
        %2901 = vmatprep.subr.bf16.mxu0 0
        %2902 = vmatpush1.bf16.xpose.msra.mxu0 0
        %2903 = vmatprep.subr.bf16.mxu0 0
        %2904 = vmatpush1.bf16.xpose.msra.mxu0 0
        %2905 = vmatprep.mubr.bf16.mxu0 %v2459
        %2906 = vmatmul.mubr.bf16.gmra.mrb[0].mxu0 %v2458
        %v2907 = vpop.f32.mrb[0].mxu0
        %v2908 = vadd.f32 %v2859, %v2907
        %v2909 = vpop.f32.mrb[0].mxu0
        %v2910 = vpop.f32.mrb[0].mxu0
        %v2911 = vadd.f32 %v2862, %v2910
        %v2912 = vpop.f32.mrb[0].mxu0
        %2913 = vmatprep.mubr.bf16.mxu0 %v2467
        %2914 = vmatmul.mubr.bf16.gmra.mrb[0].mxu0 %v2466
        %v2915 = vpop.f32.mrb[0].mxu0
        %v2916 = vadd.f32 %v2867, %v2915
        %v2917 = vpop.f32.mrb[0].mxu0
        %v2918 = vpop.f32.mrb[0].mxu0
        %v2919 = vadd.f32 %v2870, %v2918
        %v2920 = vpop.f32.mrb[0].mxu0
        %2921 = vdwg.mxu0
        %2922 = vmatprep.subr.bf16.mxu0 %v2461
        %2923 = vmatpush1.bf16.xpose.msra.mxu0 %v2460
        %2924 = vmatprep.subr.bf16.mxu0 %v2469
        %2925 = vmatpush1.bf16.xpose.msra.mxu0 %v2468
        %2926 = vmatprep.subr.bf16.mxu0 0
        %2927 = vmatpush1.bf16.xpose.msra.mxu0 0
        %2928 = vmatprep.subr.bf16.mxu0 0
        %2929 = vmatpush1.bf16.xpose.msra.mxu0 0
        %2930 = vmatprep.subr.bf16.mxu0 0
        %2931 = vmatpush1.bf16.xpose.msra.mxu0 0
        %2932 = vmatprep.subr.bf16.mxu0 0
        %2933 = vmatpush1.bf16.xpose.msra.mxu0 0
        %2934 = vmatprep.subr.bf16.mxu0 0
        %2935 = vmatpush1.bf16.xpose.msra.mxu0 0
        %2936 = vmatprep.subr.bf16.mxu0 0
        %2937 = vmatpush1.bf16.xpose.msra.mxu0 0
        %2938 = vmatprep.subr.bf16.mxu0 0
        %2939 = vmatpush1.bf16.xpose.msra.mxu0 0
        %2940 = vmatprep.subr.bf16.mxu0 0
        %2941 = vmatpush1.bf16.xpose.msra.mxu0 0
        %2942 = vmatprep.subr.bf16.mxu0 0
        %2943 = vmatpush1.bf16.xpose.msra.mxu0 0
        %2944 = vmatprep.subr.bf16.mxu0 0
        %2945 = vmatpush1.bf16.xpose.msra.mxu0 0
        %2946 = vmatprep.subr.bf16.mxu0 0
        %2947 = vmatpush1.bf16.xpose.msra.mxu0 0
        %2948 = vmatprep.subr.bf16.mxu0 0
        %2949 = vmatpush1.bf16.xpose.msra.mxu0 0
        %2950 = vmatprep.subr.bf16.mxu0 0
        %2951 = vmatpush1.bf16.xpose.msra.mxu0 0
        %2952 = vmatprep.subr.bf16.mxu0 0
        %2953 = vmatpush1.bf16.xpose.msra.mxu0 0
        %2954 = vmatprep.mubr.bf16.mxu0 %v2461
        %2955 = vmatmul.mubr.bf16.gmra.mrb[0].mxu0 %v2460
        %v2956 = vpop.f32.mrb[0].mxu0
        %v2957 = vadd.f32 %v2908, %v2956
        %v2958 = vpop.f32.mrb[0].mxu0
        %v2959 = vpop.f32.mrb[0].mxu0
        %v2960 = vadd.f32 %v2911, %v2959
        %v2961 = vpop.f32.mrb[0].mxu0
        %2962 = vmatprep.mubr.bf16.mxu0 %v2469
        %2963 = vmatmul.mubr.bf16.gmra.mrb[0].mxu0 %v2468
        %v2964 = vpop.f32.mrb[0].mxu0
        %v2965 = vadd.f32 %v2916, %v2964
        %v2966 = vpop.f32.mrb[0].mxu0
        %v2967 = vpop.f32.mrb[0].mxu0
        %v2968 = vadd.f32 %v2919, %v2967
        %v2969 = vpop.f32.mrb[0].mxu0
        %2970 = vdwg.mxu0
        %2971 = vmatprep.subr.mxu0 0.0
        %2972 = vmatpush1.msra.mxu0 %v2957
        %2973 = vmatprep.subr.mxu0 0.0
        %2974 = vmatpush1.msra.mxu0 %v2960
        %2975 = vmatprep.subr.mxu0 0.0
        %2976 = vmatpush1.msra.mxu0 %v2965
        %2977 = vmatprep.subr.mxu0 0.0
        %2978 = vmatpush1.msra.mxu0 %v2968
        %2979 = vmatprep.subr.mxu0 0.0
        %2980 = vmatpush1.msra.mxu0 0.0
        %2981 = vmatprep.subr.mxu0 0.0
        %2982 = vmatpush1.msra.mxu0 0.0
        %2983 = vmatprep.subr.mxu0 0.0
        %2984 = vmatpush1.msra.mxu0 0.0
        %2985 = vmatprep.subr.mxu0 0.0
        %2986 = vmatpush1.msra.mxu0 0.0
        %2987 = vmatprep.subr.mxu0 0.0
        %2988 = vmatpush1.msra.mxu0 0.0
        %2989 = vmatprep.subr.mxu0 0.0
        %2990 = vmatpush1.msra.mxu0 0.0
        %2991 = vmatprep.subr.mxu0 0.0
        %2992 = vmatpush1.msra.mxu0 0.0
        %2993 = vmatprep.subr.mxu0 0.0
        %2994 = vmatpush1.msra.mxu0 0.0
        %2995 = vmatprep.subr.mxu0 0.0
        %2996 = vmatpush1.msra.mxu0 0.0
        %2997 = vmatprep.subr.mxu0 0.0
        %2998 = vmatpush1.msra.mxu0 0.0
        %2999 = vmatprep.subr.mxu0 0.0
        %3000 = vmatpush1.msra.mxu0 0.0
        %3001 = vmatprep.subr.mxu0 0.0
        %3002 = vmatpush1.msra.mxu0 0.0
        %3003 = vmatprep.subr.mxu0 0.0
        %3004 = vmatpush1.msra.mxu0 0.0
        %3005 = vmatprep.subr.mxu0 0.0
        %3006 = vmatpush1.msra.mxu0 0.0
        %3007 = vmatprep.subr.mxu0 0.0
        %3008 = vmatpush1.msra.mxu0 0.0
        %3009 = vmatprep.subr.mxu0 0.0
        %3010 = vmatpush1.msra.mxu0 0.0
        %3011 = vmatprep.subr.mxu0 0.0
        %3012 = vmatpush1.msra.mxu0 0.0
        %3013 = vmatprep.subr.mxu0 0.0
        %3014 = vmatpush1.msra.mxu0 0.0
        %3015 = vmatprep.subr.mxu0 0.0
        %3016 = vmatpush1.msra.mxu0 0.0
        %3017 = vmatprep.subr.mxu0 0.0
        %3018 = vmatpush1.msra.mxu0 0.0
        %3019 = vmatprep.subr.mxu0 0.0
        %3020 = vmatpush1.msra.mxu0 0.0
        %3021 = vmatprep.subr.mxu0 0.0
        %3022 = vmatpush1.msra.mxu0 0.0
        %3023 = vmatprep.subr.mxu0 0.0
        %3024 = vmatpush1.msra.mxu0 0.0
        %3025 = vmatprep.subr.mxu0 0.0
        %3026 = vmatpush1.msra.mxu0 0.0
        %3027 = vmatprep.subr.mxu0 0.0
        %3028 = vmatpush1.msra.mxu0 0.0
        %3029 = vmatprep.subr.mxu0 0.0
        %3030 = vmatpush1.msra.mxu0 0.0
        %3031 = vmatprep.subr.mxu0 0.0
        %3032 = vmatpush1.msra.mxu0 0.0
        %3033 = vmatprep.subr.mxu0 0.0
        %3034 = vmatpush1.msra.mxu0 0.0
        %3035 = vmatprep.mubr.f32.mxu0 0.0
        %3036 = vmatmul.mubr.f32.gmra.mrb[0].mxu0 %v2679
        %v3037 = vpop.f32.mrb[0].mxu0
        %v3038 = vadd.f32 0.0, %v3037
        %v3039 = vpop.f32.mrb[0].mxu0
        %3040 = vmatprep.mubr.f32.mxu0 0.0
        %3041 = vmatmul.mubr.f32.gmra.mrb[0].mxu0 %v2682
        %v3042 = vpop.f32.mrb[0].mxu0
        %v3043 = vadd.f32 0.0, %v3042
        %v3044 = vpop.f32.mrb[0].mxu0
        %3045 = vmatprep.mubr.f32.mxu0 0.0
        %3046 = vmatmul.mubr.f32.gmra.mrb[0].mxu0 %v2685
        %v3047 = vpop.f32.mrb[0].mxu0
        %v3048 = vadd.f32 0.0, %v3047
        %v3049 = vpop.f32.mrb[0].mxu0
        %3050 = vmatprep.mubr.f32.mxu0 0.0
        %3051 = vmatmul.mubr.f32.gmra.mrb[0].mxu0 %v2688
        %v3052 = vpop.f32.mrb[0].mxu0
        %v3053 = vadd.f32 0.0, %v3052
        %v3054 = vpop.f32.mrb[0].mxu0
        %3055 = vdwg.mxu0
        %v3056 = vmul.f32 %v3038, %v2474
        %v3057 = vmul.f32 %v3043, %v2475
        %v3058 = vmul.f32 %v3048, %v2476
        %v3059 = vmul.f32 %v3053, %v2477
        %v3060 = vsel %vm1619, %v3056, 0.0
        %3061 = vadd.xlane.f32.xlu0 %v3060
        %v3062 = vpop.xlane.xlu0 %3061
        %v3063 = vsel %vm1619, %v3057, 0.0
        %3064 = vadd.xlane.f32.xlu0 %v3063
        %v3065 = vpop.xlane.xlu0 %3064
        %v3066 = vsel %vm1619, %v3058, 0.0
        %3067 = vadd.xlane.f32.xlu0 %v3066
        %v3068 = vpop.xlane.xlu0 %3067
        %v3069 = vsel %vm1619, %v3059, 0.0
        %3070 = vadd.xlane.f32.xlu0 %v3069
        %v3071 = vpop.xlane.xlu0 %3070
        %v3072 = vmul.f32 %v3062, 0.0009765625
        %v3073 = vmul.f32 %v3065, 0.0009765625
        %v3074 = vmul.f32 %v3068, 0.0009765625
        %v3075 = vmul.f32 %v3071, 0.0009765625
        %v3076 = vmul.f32 %v2757, %v2757
        %v3077 = vmul.f32 %v2762, %v2762
        %v3078 = vmul.f32 %v2767, %v2767
        %v3079 = vmul.f32 %v2772, %v2772
        %v3080 = vsub.f32 %v3072, %v3076
        %v3081 = vsub.f32 %v3073, %v3077
        %v3082 = vsub.f32 %v3074, %v3078
        %v3083 = vsub.f32 %v3075, %v3079
        %v3084 = vmax.f32 %v3080, 0.0
        %v3085 = vmax.f32 %v3081, 0.0
        %v3086 = vmax.f32 %v3082, 0.0
        %v3087 = vmax.f32 %v3083, 0.0
        %v3088 = vld [vmem:[%s8] sm:$0xff]
        %v3089 = vld [vmem:[%s8 + $0x8] sm:$0xff]
        %v3090 = vld [vmem:[%s8 + $0x10] sm:$0xff]
        %v3091 = vld [vmem:[%s8 + $0x18] sm:$0xff]
        %v3092 = vadd.f32 %v3084, 1e-05
        %v3093 = vadd.f32 %v3085, 1e-05
        %v3094 = vadd.f32 %v3086, 1e-05
        %v3095 = vadd.f32 %v3087, 1e-05
        %v3096 = vrsqrt.pop %v3092
        %v3097 = vrsqrt.pop %v3093
        %v3098 = vrsqrt.pop %v3094
        %v3099 = vrsqrt.pop %v3095
        %v3100 = vmul.f32 %v3088, %v3096
        %v3101 = vmul.f32 %v3089, %v3097
        %v3102 = vmul.f32 %v3090, %v3098
        %v3103 = vmul.f32 %v3091, %v3099
        %v3104 = vld [vmem:[%s9] sm:$0xff]
        %v3105 = vld [vmem:[%s9 + $0x8] sm:$0xff]
        %v3106 = vld [vmem:[%s9 + $0x10] sm:$0xff]
        %v3107 = vld [vmem:[%s9 + $0x18] sm:$0xff]
        %v3108 = vmul.f32 %v2757, %v3100
        %v3109 = vmul.f32 %v2762, %v3101
        %v3110 = vmul.f32 %v2767, %v3102
        %v3111 = vmul.f32 %v2772, %v3103
        %v3112 = vsub.f32 %v3104, %v3108
        %v3113 = vsub.f32 %v3105, %v3109
        %v3114 = vsub.f32 %v3106, %v3110
        %v3115 = vsub.f32 %v3107, %v3111
        %v3120 = vunpack.c.l.b16 %v2470
        %v3121 = vunpack.c.l.b16 %v2471
        %v3122 = vunpack.c.l.b16 %v2472
        %v3123 = vunpack.c.l.b16 %v2473
        %v3124 = vpack.c.b16 %v3121, %v3120
        %v3125 = vpack.c.b16 %v3123, %v3122
        %v3127 = vsel %vm1619, %v3124, 0
        %v3130 = vsel %vm1619, %v3125, 0
        %3132 = vmatprep.subr.bf16.mxu0 %v2455
        %3133 = vmatpush1.bf16.msra.mxu0 %v2454
        %3134 = vmatprep.subr.bf16.mxu0 %v2463
        %3135 = vmatpush1.bf16.msra.mxu0 %v2462
        %3136 = vmatprep.subr.bf16.mxu0 0
        %3137 = vmatpush1.bf16.msra.mxu0 0
        %3138 = vmatprep.subr.bf16.mxu0 0
        %3139 = vmatpush1.bf16.msra.mxu0 0
        %3140 = vmatprep.subr.bf16.mxu0 0
        %3141 = vmatpush1.bf16.msra.mxu0 0
        %3142 = vmatprep.subr.bf16.mxu0 0
        %3143 = vmatpush1.bf16.msra.mxu0 0
        %3144 = vmatprep.subr.bf16.mxu0 0
        %3145 = vmatpush1.bf16.msra.mxu0 0
        %3146 = vmatprep.subr.bf16.mxu0 0
        %3147 = vmatpush1.bf16.msra.mxu0 0
        %3148 = vmatprep.subr.bf16.mxu0 0
        %3149 = vmatpush1.bf16.msra.mxu0 0
        %3150 = vmatprep.subr.bf16.mxu0 0
        %3151 = vmatpush1.bf16.msra.mxu0 0
        %3152 = vmatprep.subr.bf16.mxu0 0
        %3153 = vmatpush1.bf16.msra.mxu0 0
        %3154 = vmatprep.subr.bf16.mxu0 0
        %3155 = vmatpush1.bf16.msra.mxu0 0
        %3156 = vmatprep.subr.bf16.mxu0 0
        %3157 = vmatpush1.bf16.msra.mxu0 0
        %3158 = vmatprep.subr.bf16.mxu0 0
        %3159 = vmatpush1.bf16.msra.mxu0 0
        %3160 = vmatprep.subr.bf16.mxu0 0
        %3161 = vmatpush1.bf16.msra.mxu0 0
        %3162 = vmatprep.subr.bf16.mxu0 0
        %3163 = vmatpush1.bf16.msra.mxu0 0
        %3164 = vmatprep.mubr.bf16.mxu0 0
        %3165 = vmatmul.mubr.bf16.gmra.mrb[0].mxu0 %v3127
        %v3166 = vpop.f32.mrb[0].mxu0
        %v3167 = vadd.f32 0.0, %v3166
        %v3168 = vpop.f32.mrb[0].mxu0
        %v3169 = vadd.f32 0.0, %v3168
        %v3170 = vpop.f32.mrb[0].mxu0
        %v3171 = vadd.f32 0.0, %v3170
        %v3172 = vpop.f32.mrb[0].mxu0
        %v3173 = vadd.f32 0.0, %v3172
        %3174 = vmatprep.mubr.bf16.mxu0 0
        %3175 = vmatmul.mubr.bf16.gmra.mrb[0].mxu0 %v3130
        %v3176 = vpop.f32.mrb[0].mxu0
        %v3177 = vadd.f32 0.0, %v3176
        %v3178 = vpop.f32.mrb[0].mxu0
        %v3179 = vadd.f32 0.0, %v3178
        %v3180 = vpop.f32.mrb[0].mxu0
        %v3181 = vadd.f32 0.0, %v3180
        %v3182 = vpop.f32.mrb[0].mxu0
        %v3183 = vadd.f32 0.0, %v3182
        %3184 = vdwg.mxu0
        %3185 = vmatprep.subr.bf16.mxu0 %v2457
        %3186 = vmatpush1.bf16.msra.mxu0 %v2456
        %3187 = vmatprep.subr.bf16.mxu0 %v2465
        %3188 = vmatpush1.bf16.msra.mxu0 %v2464
        %3189 = vmatprep.subr.bf16.mxu0 0
        %3190 = vmatpush1.bf16.msra.mxu0 0
        %3191 = vmatprep.subr.bf16.mxu0 0
        %3192 = vmatpush1.bf16.msra.mxu0 0
        %3193 = vmatprep.subr.bf16.mxu0 0
        %3194 = vmatpush1.bf16.msra.mxu0 0
        %3195 = vmatprep.subr.bf16.mxu0 0
        %3196 = vmatpush1.bf16.msra.mxu0 0
        %3197 = vmatprep.subr.bf16.mxu0 0
        %3198 = vmatpush1.bf16.msra.mxu0 0
        %3199 = vmatprep.subr.bf16.mxu0 0
        %3200 = vmatpush1.bf16.msra.mxu0 0
        %3201 = vmatprep.subr.bf16.mxu0 0
        %3202 = vmatpush1.bf16.msra.mxu0 0
        %3203 = vmatprep.subr.bf16.mxu0 0
        %3204 = vmatpush1.bf16.msra.mxu0 0
        %3205 = vmatprep.subr.bf16.mxu0 0
        %3206 = vmatpush1.bf16.msra.mxu0 0
        %3207 = vmatprep.subr.bf16.mxu0 0
        %3208 = vmatpush1.bf16.msra.mxu0 0
        %3209 = vmatprep.subr.bf16.mxu0 0
        %3210 = vmatpush1.bf16.msra.mxu0 0
        %3211 = vmatprep.subr.bf16.mxu0 0
        %3212 = vmatpush1.bf16.msra.mxu0 0
        %3213 = vmatprep.subr.bf16.mxu0 0
        %3214 = vmatpush1.bf16.msra.mxu0 0
        %3215 = vmatprep.subr.bf16.mxu0 0
        %3216 = vmatpush1.bf16.msra.mxu0 0
        %3217 = vmatprep.mubr.bf16.mxu0 0
        %3218 = vmatmul.mubr.bf16.gmra.mrb[0].mxu0 %v3127
        %v3219 = vpop.f32.mrb[0].mxu0
        %v3220 = vadd.f32 0.0, %v3219
        %v3221 = vpop.f32.mrb[0].mxu0
        %v3222 = vadd.f32 0.0, %v3221
        %v3223 = vpop.f32.mrb[0].mxu0
        %v3224 = vadd.f32 0.0, %v3223
        %v3225 = vpop.f32.mrb[0].mxu0
        %v3226 = vadd.f32 0.0, %v3225
        %3227 = vmatprep.mubr.bf16.mxu0 0
        %3228 = vmatmul.mubr.bf16.gmra.mrb[0].mxu0 %v3130
        %v3229 = vpop.f32.mrb[0].mxu0
        %v3230 = vadd.f32 0.0, %v3229
        %v3231 = vpop.f32.mrb[0].mxu0
        %v3232 = vadd.f32 0.0, %v3231
        %v3233 = vpop.f32.mrb[0].mxu0
        %v3234 = vadd.f32 0.0, %v3233
        %v3235 = vpop.f32.mrb[0].mxu0
        %v3236 = vadd.f32 0.0, %v3235
        %3237 = vdwg.mxu0
        %3238 = vmatprep.subr.bf16.mxu0 %v2459
        %3239 = vmatpush1.bf16.msra.mxu0 %v2458
        %3240 = vmatprep.subr.bf16.mxu0 %v2467
        %3241 = vmatpush1.bf16.msra.mxu0 %v2466
        %3242 = vmatprep.subr.bf16.mxu0 0
        %3243 = vmatpush1.bf16.msra.mxu0 0
        %3244 = vmatprep.subr.bf16.mxu0 0
        %3245 = vmatpush1.bf16.msra.mxu0 0
        %3246 = vmatprep.subr.bf16.mxu0 0
        %3247 = vmatpush1.bf16.msra.mxu0 0
        %3248 = vmatprep.subr.bf16.mxu0 0
        %3249 = vmatpush1.bf16.msra.mxu0 0
        %3250 = vmatprep.subr.bf16.mxu0 0
        %3251 = vmatpush1.bf16.msra.mxu0 0
        %3252 = vmatprep.subr.bf16.mxu0 0
        %3253 = vmatpush1.bf16.msra.mxu0 0
        %3254 = vmatprep.subr.bf16.mxu0 0
        %3255 = vmatpush1.bf16.msra.mxu0 0
        %3256 = vmatprep.subr.bf16.mxu0 0
        %3257 = vmatpush1.bf16.msra.mxu0 0
        %3258 = vmatprep.subr.bf16.mxu0 0
        %3259 = vmatpush1.bf16.msra.mxu0 0
        %3260 = vmatprep.subr.bf16.mxu0 0
        %3261 = vmatpush1.bf16.msra.mxu0 0
        %3262 = vmatprep.subr.bf16.mxu0 0
        %3263 = vmatpush1.bf16.msra.mxu0 0
        %3264 = vmatprep.subr.bf16.mxu0 0
        %3265 = vmatpush1.bf16.msra.mxu0 0
        %3266 = vmatprep.subr.bf16.mxu0 0
        %3267 = vmatpush1.bf16.msra.mxu0 0
        %3268 = vmatprep.subr.bf16.mxu0 0
        %3269 = vmatpush1.bf16.msra.mxu0 0
        %3270 = vmatprep.mubr.bf16.mxu0 0
        %3271 = vmatmul.mubr.bf16.gmra.mrb[0].mxu0 %v3127
        %v3272 = vpop.f32.mrb[0].mxu0
        %v3273 = vadd.f32 0.0, %v3272
        %v3274 = vpop.f32.mrb[0].mxu0
        %v3275 = vadd.f32 0.0, %v3274
        %v3276 = vpop.f32.mrb[0].mxu0
        %v3277 = vadd.f32 0.0, %v3276
        %v3278 = vpop.f32.mrb[0].mxu0
        %v3279 = vadd.f32 0.0, %v3278
        %3280 = vmatprep.mubr.bf16.mxu0 0
        %3281 = vmatmul.mubr.bf16.gmra.mrb[0].mxu0 %v3130
        %v3282 = vpop.f32.mrb[0].mxu0
        %v3283 = vadd.f32 0.0, %v3282
        %v3284 = vpop.f32.mrb[0].mxu0
        %v3285 = vadd.f32 0.0, %v3284
        %v3286 = vpop.f32.mrb[0].mxu0
        %v3287 = vadd.f32 0.0, %v3286
        %v3288 = vpop.f32.mrb[0].mxu0
        %v3289 = vadd.f32 0.0, %v3288
        %3290 = vdwg.mxu0
        %3291 = vmatprep.subr.bf16.mxu0 %v2461
        %3292 = vmatpush1.bf16.msra.mxu0 %v2460
        %3293 = vmatprep.subr.bf16.mxu0 %v2469
        %3294 = vmatpush1.bf16.msra.mxu0 %v2468
        %3295 = vmatprep.subr.bf16.mxu0 0
        %3296 = vmatpush1.bf16.msra.mxu0 0
        %3297 = vmatprep.subr.bf16.mxu0 0
        %3298 = vmatpush1.bf16.msra.mxu0 0
        %3299 = vmatprep.subr.bf16.mxu0 0
        %3300 = vmatpush1.bf16.msra.mxu0 0
        %3301 = vmatprep.subr.bf16.mxu0 0
        %3302 = vmatpush1.bf16.msra.mxu0 0
        %3303 = vmatprep.subr.bf16.mxu0 0
        %3304 = vmatpush1.bf16.msra.mxu0 0
        %3305 = vmatprep.subr.bf16.mxu0 0
        %3306 = vmatpush1.bf16.msra.mxu0 0
        %3307 = vmatprep.subr.bf16.mxu0 0
        %3308 = vmatpush1.bf16.msra.mxu0 0
        %3309 = vmatprep.subr.bf16.mxu0 0
        %3310 = vmatpush1.bf16.msra.mxu0 0
        %3311 = vmatprep.subr.bf16.mxu0 0
        %3312 = vmatpush1.bf16.msra.mxu0 0
        %3313 = vmatprep.subr.bf16.mxu0 0
        %3314 = vmatpush1.bf16.msra.mxu0 0
        %3315 = vmatprep.subr.bf16.mxu0 0
        %3316 = vmatpush1.bf16.msra.mxu0 0
        %3317 = vmatprep.subr.bf16.mxu0 0
        %3318 = vmatpush1.bf16.msra.mxu0 0
        %3319 = vmatprep.subr.bf16.mxu0 0
        %3320 = vmatpush1.bf16.msra.mxu0 0
        %3321 = vmatprep.subr.bf16.mxu0 0
        %3322 = vmatpush1.bf16.msra.mxu0 0
        %3323 = vmatprep.mubr.bf16.mxu0 0
        %3324 = vmatmul.mubr.bf16.gmra.mrb[0].mxu0 %v3127
        %v3325 = vpop.f32.mrb[0].mxu0
        %v3326 = vadd.f32 0.0, %v3325
        %v3327 = vpop.f32.mrb[0].mxu0
        %v3328 = vadd.f32 0.0, %v3327
        %v3329 = vpop.f32.mrb[0].mxu0
        %v3330 = vadd.f32 0.0, %v3329
        %v3331 = vpop.f32.mrb[0].mxu0
        %v3332 = vadd.f32 0.0, %v3331
        %3333 = vmatprep.mubr.bf16.mxu0 0
        %3334 = vmatmul.mubr.bf16.gmra.mrb[0].mxu0 %v3130
        %v3335 = vpop.f32.mrb[0].mxu0
        %v3336 = vadd.f32 0.0, %v3335
        %v3337 = vpop.f32.mrb[0].mxu0
        %v3338 = vadd.f32 0.0, %v3337
        %v3339 = vpop.f32.mrb[0].mxu0
        %v3340 = vadd.f32 0.0, %v3339
        %v3341 = vpop.f32.mrb[0].mxu0
        %v3342 = vadd.f32 0.0, %v3341
        %3343 = vdwg.mxu0
        %3345 = vset.pattern.permute.xlu0 0
        %3346 = vperm.xlu0 %3345, %v3100
        %v3347 = vpop.permute.xlu0 %3346
        %3350 = vset.pattern.permute.xlu0 0
        %3351 = vperm.xlu0 %3350, %v3101
        %v3352 = vpop.permute.xlu0 %3351
        %3355 = vset.pattern.permute.xlu0 0
        %3356 = vperm.xlu0 %3355, %v3102
        %v3357 = vpop.permute.xlu0 %3356
        %3360 = vset.pattern.permute.xlu0 0
        %3361 = vperm.xlu0 %3360, %v3103
        %v3362 = vpop.permute.xlu0 %3361
        %v3364 = vmul.f32 %v3167, %v3347
        %v3365 = vmul.f32 %v3169, %v3347
        %v3366 = vmul.f32 %v3220, %v3347
        %v3367 = vmul.f32 %v3222, %v3347
        %v3368 = vmul.f32 %v3273, %v3347
        %v3369 = vmul.f32 %v3275, %v3347
        %v3370 = vmul.f32 %v3326, %v3347
        %v3371 = vmul.f32 %v3328, %v3347
        %v3372 = vmul.f32 %v3171, %v3352
        %v3373 = vmul.f32 %v3173, %v3352
        %v3374 = vmul.f32 %v3224, %v3352
        %v3375 = vmul.f32 %v3226, %v3352
        %v3376 = vmul.f32 %v3277, %v3352
        %v3377 = vmul.f32 %v3279, %v3352
        %v3378 = vmul.f32 %v3330, %v3352
        %v3379 = vmul.f32 %v3332, %v3352
        %v3380 = vmul.f32 %v3177, %v3357
        %v3381 = vmul.f32 %v3179, %v3357
        %v3382 = vmul.f32 %v3230, %v3357
        %v3383 = vmul.f32 %v3232, %v3357
        %v3384 = vmul.f32 %v3283, %v3357
        %v3385 = vmul.f32 %v3285, %v3357
        %v3386 = vmul.f32 %v3336, %v3357
        %v3387 = vmul.f32 %v3338, %v3357
        %v3388 = vmul.f32 %v3181, %v3362
        %v3389 = vmul.f32 %v3183, %v3362
        %v3390 = vmul.f32 %v3234, %v3362
        %v3391 = vmul.f32 %v3236, %v3362
        %v3392 = vmul.f32 %v3287, %v3362
        %v3393 = vmul.f32 %v3289, %v3362
        %v3394 = vmul.f32 %v3340, %v3362
        %v3395 = vmul.f32 %v3342, %v3362
        %3397 = vset.pattern.permute.xlu0 0
        %3398 = vperm.xlu0 %3397, %v3112
        %v3399 = vpop.permute.xlu0 %3398
        %3402 = vset.pattern.permute.xlu0 0
        %3403 = vperm.xlu0 %3402, %v3113
        %v3404 = vpop.permute.xlu0 %3403
        %3407 = vset.pattern.permute.xlu0 0
        %3408 = vperm.xlu0 %3407, %v3114
        %v3409 = vpop.permute.xlu0 %3408
        %3412 = vset.pattern.permute.xlu0 0
        %3413 = vperm.xlu0 %3412, %v3115
        %v3414 = vpop.permute.xlu0 %3413
        %v3416 = vadd.f32 %v3364, %v3399
        %v3417 = vadd.f32 %v3365, %v3399
        %v3418 = vadd.f32 %v3366, %v3399
        %v3419 = vadd.f32 %v3367, %v3399
        %v3420 = vadd.f32 %v3368, %v3399
        %v3421 = vadd.f32 %v3369, %v3399
        %v3422 = vadd.f32 %v3370, %v3399
        %v3423 = vadd.f32 %v3371, %v3399
        %v3424 = vadd.f32 %v3372, %v3404
        %v3425 = vadd.f32 %v3373, %v3404
        %v3426 = vadd.f32 %v3374, %v3404
        %v3427 = vadd.f32 %v3375, %v3404
        %v3428 = vadd.f32 %v3376, %v3404
        %v3429 = vadd.f32 %v3377, %v3404
        %v3430 = vadd.f32 %v3378, %v3404
        %v3431 = vadd.f32 %v3379, %v3404
        %v3432 = vadd.f32 %v3380, %v3409
        %v3433 = vadd.f32 %v3381, %v3409
        %v3434 = vadd.f32 %v3382, %v3409
        %v3435 = vadd.f32 %v3383, %v3409
        %v3436 = vadd.f32 %v3384, %v3409
        %v3437 = vadd.f32 %v3385, %v3409
        %v3438 = vadd.f32 %v3386, %v3409
        %v3439 = vadd.f32 %v3387, %v3409
        %v3440 = vadd.f32 %v3388, %v3414
        %v3441 = vadd.f32 %v3389, %v3414
        %v3442 = vadd.f32 %v3390, %v3414
        %v3443 = vadd.f32 %v3391, %v3414
        %v3444 = vadd.f32 %v3392, %v3414
        %v3445 = vadd.f32 %v3393, %v3414
        %v3446 = vadd.f32 %v3394, %v3414
        %v3447 = vadd.f32 %v3395, %v3414
        %v3448 = vmul.f32 %v3416, 0.1
        %v3449 = vmul.f32 %v3417, 0.1
        %v3450 = vmul.f32 %v3418, 0.1
        %v3451 = vmul.f32 %v3419, 0.1
        %v3452 = vmul.f32 %v3420, 0.1
        %v3453 = vmul.f32 %v3421, 0.1
        %v3454 = vmul.f32 %v3422, 0.1
        %v3455 = vmul.f32 %v3423, 0.1
        %v3456 = vmul.f32 %v3424, 0.1
        %v3457 = vmul.f32 %v3425, 0.1
        %v3458 = vmul.f32 %v3426, 0.1
        %v3459 = vmul.f32 %v3427, 0.1
        %v3460 = vmul.f32 %v3428, 0.1
        %v3461 = vmul.f32 %v3429, 0.1
        %v3462 = vmul.f32 %v3430, 0.1
        %v3463 = vmul.f32 %v3431, 0.1
        %v3464 = vmul.f32 %v3432, 0.1
        %v3465 = vmul.f32 %v3433, 0.1
        %v3466 = vmul.f32 %v3434, 0.1
        %v3467 = vmul.f32 %v3435, 0.1
        %v3468 = vmul.f32 %v3436, 0.1
        %v3469 = vmul.f32 %v3437, 0.1
        %v3470 = vmul.f32 %v3438, 0.1
        %v3471 = vmul.f32 %v3439, 0.1
        %v3472 = vmul.f32 %v3440, 0.1
        %v3473 = vmul.f32 %v3441, 0.1
        %v3474 = vmul.f32 %v3442, 0.1
        %v3475 = vmul.f32 %v3443, 0.1
        %v3476 = vmul.f32 %v3444, 0.1
        %v3477 = vmul.f32 %v3445, 0.1
        %v3478 = vmul.f32 %v3446, 0.1
        %v3479 = vmul.f32 %v3447, 0.1
        %v3480 = vmax.f32 %v3416, %v3448
        %v3481 = vmax.f32 %v3417, %v3449
        %v3482 = vmax.f32 %v3418, %v3450
        %v3483 = vmax.f32 %v3419, %v3451
        %v3484 = vmax.f32 %v3420, %v3452
        %v3485 = vmax.f32 %v3421, %v3453
        %v3486 = vmax.f32 %v3422, %v3454
        %v3487 = vmax.f32 %v3423, %v3455
        %v3488 = vmax.f32 %v3424, %v3456
        %v3489 = vmax.f32 %v3425, %v3457
        %v3490 = vmax.f32 %v3426, %v3458
        %v3491 = vmax.f32 %v3427, %v3459
        %v3492 = vmax.f32 %v3428, %v3460
        %v3493 = vmax.f32 %v3429, %v3461
        %v3494 = vmax.f32 %v3430, %v3462
        %v3495 = vmax.f32 %v3431, %v3463
        %v3496 = vmax.f32 %v3432, %v3464
        %v3497 = vmax.f32 %v3433, %v3465
        %v3498 = vmax.f32 %v3434, %v3466
        %v3499 = vmax.f32 %v3435, %v3467
        %v3500 = vmax.f32 %v3436, %v3468
        %v3501 = vmax.f32 %v3437, %v3469
        %v3502 = vmax.f32 %v3438, %v3470
        %v3503 = vmax.f32 %v3439, %v3471
        %v3504 = vmax.f32 %v3440, %v3472
        %v3505 = vmax.f32 %v3441, %v3473
        %v3506 = vmax.f32 %v3442, %v3474
        %v3507 = vmax.f32 %v3443, %v3475
        %v3508 = vmax.f32 %v3444, %v3476
        %v3509 = vmax.f32 %v3445, %v3477
        %v3510 = vmax.f32 %v3446, %v3478
        %v3511 = vmax.f32 %v3447, %v3479
        %v3512 = vmax.f32 %v3480, %v3481
        %v3513 = vmax.f32 %v3488, %v3489
        %v3514 = vmax.f32 %v3496, %v3497
        %v3515 = vmax.f32 %v3504, %v3505
        %v3516 = vmax.f32 %v3512, %v3482
        %v3517 = vmax.f32 %v3513, %v3490
        %v3518 = vmax.f32 %v3514, %v3498
        %v3519 = vmax.f32 %v3515, %v3506
        %v3520 = vmax.f32 %v3516, %v3483
        %v3521 = vmax.f32 %v3517, %v3491
        %v3522 = vmax.f32 %v3518, %v3499
        %v3523 = vmax.f32 %v3519, %v3507
        %v3524 = vmax.f32 %v3520, %v3484
        %v3525 = vmax.f32 %v3521, %v3492
        %v3526 = vmax.f32 %v3522, %v3500
        %v3527 = vmax.f32 %v3523, %v3508
        %v3528 = vmax.f32 %v3524, %v3485
        %v3529 = vmax.f32 %v3525, %v3493
        %v3530 = vmax.f32 %v3526, %v3501
        %v3531 = vmax.f32 %v3527, %v3509
        %v3532 = vmax.f32 %v3528, %v3486
        %v3533 = vmax.f32 %v3529, %v3494
        %v3534 = vmax.f32 %v3530, %v3502
        %v3535 = vmax.f32 %v3531, %v3510
        %v3536 = vmax.f32 %v3532, %v3487
        %v3537 = vmax.f32 %v3533, %v3495
        %v3538 = vmax.f32 %v3534, %v3503
        %v3539 = vmax.f32 %v3535, %v3511
        %3540 = vst [vmem:[%s352] sm:$0xff] %v3536
        %3541 = vst [vmem:[%s352 + $0x8] sm:$0xff] %v3537
        %3542 = vst [vmem:[%s352 + $0x10] sm:$0xff] %v3538
        %3543 = vst [vmem:[%s352 + $0x18] sm:$0xff] %v3539
        %s3544 = sand.u32 %s247, 1
        %s3545 = scalar_lea.sflag [#allocation3], %s3544
        %s3546 = sand.u32 %s247, 1
        %s3547 = smul.addr %s3546, 32
        %s3548 = scalar_lea.vmem [#allocation2], %s3547
        // Predicated region
        $region61: #{tpu_custom_call.1} parent=59 // pred_check
          %p3549 = pneg %p257
        $region62: #{tpu_custom_call.1} parent=59 // pred_check_branch
          %3551 = sbr.rel (%p3549) target = $region64
        $region63: #{tpu_custom_call.1} parent=59 // pred_region
          %s3553 = ssub.s32 512, 512
          %3554 = vsyncadd %s3545, %s3553
          %s3555 = smul.addr %s24, 4
          %s3556 = smul.addr %s3555, 128
          %s3557 = scalar_lea.hbm %s10, %s3556
          %s3558 = sshll.u32 %s3548, 4
          %s3559 = int_to_ptr.vmem [resolvable:$true] %s3558
          %3564 = dma.vmem_to_hbm [thread:$0]  %s3559, 512, %s3557, %s3545, 128, 128, 8
        $region64: #{tpu_custom_call.1} parent=59 // pred_fallthru
          _
      $region60: #{tpu_custom_call.1} parent=5 // pred_fallthru
        _
      %p3565 = scmp.le.s32.totalorder 2, %s19
      // Predicated region
      $region65: #{tpu_custom_call.1} parent=5 // pred_check
        %p3566 = pneg %p3565
      $region66: #{tpu_custom_call.1} parent=5 // pred_check_branch
        %3568 = sbr.rel (%p3566) target = $region68
      $region67: #{tpu_custom_call.1} parent=5 // pred_region
        %s3569 = ssub.s32 %s19, 2
        // Predicated region
        $region69: #{tpu_custom_call.1} parent=67 // pred_check
          %p3570 = pneg %p263
        $region70: #{tpu_custom_call.1} parent=67 // pred_check_branch
          %3572 = sbr.rel (%p3570) target = $region72
        $region71: #{tpu_custom_call.1} parent=67 // pred_region
          %s3573 = sand.u32 %s248, 1
          %s3574 = scalar_lea.sflag [#allocation3], %s3573
          %s3575 = sand.u32 %s248, 1
          %s3576 = smul.addr %s3575, 32
          %s3577 = scalar_lea.vmem [#allocation2], %s3576
          %3578 = dma.done %s3574, 512
        $region72: #{tpu_custom_call.1} parent=67 // pred_fallthru
          _
      $region68: #{tpu_custom_call.1} parent=5 // pred_fallthru
        _
    $region6: #{tpu_custom_call.1} parent=1 // loop_footer
      %s23 = sadd.s32 1, %s19
    $region7: #{tpu_custom_call.1} parent=1 // loop_footer_branch
      %18 = sbr.rel target = $region3
    $region8: #{tpu_custom_call.1} parent=1 // loop_exit
      _
    %3579 = vsyncpa [#allocation3], 1
    %s3580 = scalar_lea.sflag [#allocation3], 1
    %3581 = vsyncpa %s3580, 1

</llo_original>
